<compile_context>
chip_gen: v6e
topology: v6e:2x2x1
jax: 0.10.0
libtpu: 0.0.40
codegen_flags: <defaults>
</compile_context>

<pallas_src>
import functools

import jax
import jax.numpy as jnp
import numpy as np
from jax.experimental import pallas as pl
from jax.experimental.pallas import tpu as pltpu


# ----------------------------------------------------------------------------
# Kernel
# ----------------------------------------------------------------------------
def attention_rnn_kernel(
    x_ref,      # (TB, BB, Din)   time-major input frames for this time block
    mem_ref,    # (BB, S, E)      encoder memory
    mproj_ref,  # (BB, S, A)      memory @ W_c  (precomputed, time-invariant)
    mask_ref,   # (BB, S)         additive attention mask (0 / -1e30)
    h0_ref,     # (BB, Hp)        initial hidden state (lane-padded)
    wih_ref,    # (Din, 3*Hp)     gate-packed GRU input weights  [r | z | n]
    whh_ref,    # (Hp, 3*Hp)      gate-packed GRU hidden weights [r | z | n]
    bi_ref,     # (1, 3*Hp)       [b_ir+b_hr | b_iz+b_hz | b_in]
    bhn_ref,    # (1, Hp)         b_hn
    wq_ref,     # (Hp, A)         attention W_q (rows lane-padded)
    v_ref,      # (1, A)          attention v
    slab_ref,   # (TB, BB, SLAB)  time-major output slab [ctx | h | attn | 0]
    state_ref,  # (BB, Hp)        final hidden state
    h_carry,    # VMEM (BB, Hp)       hidden state carried across time blocks
    hseq_ref,   # VMEM (TB, BB, Hp)   per-block hidden states (time-major)
    *, hidden_size, frame_len,
):
    t_blk = pl.program_id(1)
    TB, BB, Din = x_ref.shape
    _, S, E = mem_ref.shape
    A = wq_ref.shape[-1]
    Hp = h_carry.shape[-1]
    H = hidden_size
    SLAB = slab_ref.shape[-1]
    f32 = jnp.float32

    @pl.when(t_blk == 0)
    def _init():
        h_carry[...] = h0_ref[...]

    # ---- hoisted, time-parallel GRU input projections (one MXU op) ----------
    xf = x_ref[...].reshape(TB * BB, Din)
    gi = (jnp.dot(xf, wih_ref[...], preferred_element_type=f32)
          + bi_ref[...]).reshape(TB, BB, 3 * Hp)

    whh = whh_ref[...]
    bhn = jnp.broadcast_to(bhn_ref[...], (BB, Hp))   # hoisted out of the loop

    # ---- sequential GRU recurrence: ONE gate-packed matmul per timestep -----
    # TB is small: static unroll.  For large TB, convert to lax.fori_loop with
    # a small unroll, carrying h and writing into hseq_ref.
    h = h_carry[...]
    for t in range(TB):
        gh = jnp.dot(h, whh, preferred_element_type=f32)          # (BB, 3*Hp)
        gi_t = gi[t]                                              # free slice
        r = jax.nn.sigmoid(gi_t[:, 0:Hp] + gh[:, 0:Hp])
        z = jax.nn.sigmoid(gi_t[:, Hp:2 * Hp] + gh[:, Hp:2 * Hp])
        n = jnp.tanh(gi_t[:, 2 * Hp:3 * Hp] + r * (gh[:, 2 * Hp:3 * Hp] + bhn))
        h_new = (1.0 - z) * n + z * h
        if frame_len % TB != 0:               # ragged last time block only
            h_new = jnp.where(t_blk * TB + t < frame_len, h_new, h)
        hseq_ref[t] = h_new
        h = h_new
    h_carry[...] = h

    # ---- Bahdanau attention: fully vectorized over the time block -----------
    h_tm = hseq_ref[...]                                          # (TB, BB, Hp)
    q = jnp.dot(h_tm.reshape(TB * BB, Hp), wq_ref[...],
                preferred_element_type=f32).reshape(TB, BB, A)
    info = jnp.tanh(q[:, :, None, :] + mproj_ref[...][None, :, :, :])  # (TB,BB,S,A)
    energy = jnp.sum(info * v_ref[...].reshape(1, 1, 1, A), axis=-1)   # (TB,BB,S)
    energy = energy + mask_ref[...][None, :, :]

    e_max = jnp.max(energy, axis=-1, keepdims=True)
    p = jnp.exp(energy - e_max)
    denom = jnp.sum(p, axis=-1, keepdims=True)
    # approx=True would move the divide onto the EUP; exact here so the result
    # verifies tightly against the f32 reference.
    a_blk = p * pl.reciprocal(denom, approx=False)                 # (TB, BB, S)

    # context: one batched MXU dot_general over the batch dimension.
    a_bt = jnp.transpose(a_blk, (1, 0, 2))                         # (BB, TB, S)
    ctx_bt = jax.lax.dot_general(a_bt, mem_ref[...],
                                 (((2,), (1,)), ((0,), (0,))),
                                 preferred_element_type=f32)       # (BB, TB, E)
    ctx = jnp.transpose(ctx_bt, (1, 0, 2))                         # (TB, BB, E)

    # ---- lane-dense 128-wide output slab, stored at static lane offsets -----
    slab_ref[:, :, 0:E] = ctx
    slab_ref[:, :, E:E + H] = h_tm[:, :, 0:H]
    slab_ref[:, :, E + H:E + H + S] = a_blk
    if SLAB > E + H + S:
        slab_ref[:, :, E + H + S:] = jnp.zeros((TB, BB, SLAB - (E + H + S)), f32)

    @pl.when(t_blk == pl.num_programs(1) - 1)
    def _fin():
        state_ref[...] = h


# ----------------------------------------------------------------------------
# Wrapper
# ----------------------------------------------------------------------------
def _round_up(n, m):
    return ((n + m - 1) // m) * m


@functools.partial(jax.jit, static_argnames=("time_block",))
def attention_rnn_forward(x, memory, text_length, params, h0=None, *, time_block=4):
    """x: (B, T, Din); memory: (B, S, E); text_length: (B,) int32.

    Returns (out (B, T, E+H), a (B, T, S), state (1, B, H)) matching
    AttentionRNN.forward.
    """
    x = x.astype(jnp.float32)
    memory = memory.astype(jnp.float32)
    B, T, Din = x.shape
    _, S, E = memory.shape
    H = params["whh"].shape[-1]
    A = params["wq"].shape[-1]
    P = jax.lax.Precision.HIGHEST

    Hp = _round_up(H, 128)                 # lane-pad the hidden size
    Bp = _round_up(B, 8)                   # sublane-pad the batch
    BB = 8                                 # batch block (>= sublane minimum)
    NB = Bp // BB
    TB = min(time_block, T)                # frames per grid step
    NT = pl.cdiv(T, TB)
    Tp = NT * TB
    SLAB = _round_up(E + H + S, 128)       # lane-dense fused output width

    # ---- time-major, padded inputs ------------------------------------------
    xt = jnp.transpose(x, (1, 0, 2))                                   # (T,B,Din)
    xt = jnp.pad(xt, ((0, Tp - T), (0, Bp - B), (0, 0)))
    memp = jnp.pad(memory, ((0, Bp - B), (0, 0), (0, 0)))

    # time-invariant memory projection + additive mask (computed once, XLA)
    mproj = jnp.einsum("bse,ea->bsa", memp, params["wc"], precision=P)
    tlen = jnp.asarray(text_length, jnp.int32).reshape(B, 1)
    pos = jnp.arange(S, dtype=jnp.int32)[None, :]
    mask = jnp.where(pos >= tlen, jnp.float32(-1e30), jnp.float32(0.0))
    mask = jnp.pad(mask, ((0, Bp - B), (0, 0)))      # padded rows: unmasked

    if h0 is None:
        h0p = jnp.zeros((Bp, Hp), jnp.float32)
    else:
        h0p = jnp.zeros((Bp, Hp), jnp.float32).at[:B, :H].set(
            h0.reshape(B, H).astype(jnp.float32))

    # ---- gate-packed ([r | z | n], lane-padded) GRU weights / biases --------
    wih, whh, bih, bhh = params["wih"], params["whh"], params["bih"], params["bhh"]
    wih_p = jnp.zeros((Din, 3 * Hp), jnp.float32)
    whh_p = jnp.zeros((Hp, 3 * Hp), jnp.float32)
    for g in range(3):
        wih_p = wih_p.at[:, g * Hp:g * Hp + H].set(wih[g])
        whh_p = whh_p.at[:H, g * Hp:g * Hp + H].set(whh[g])
    bi_p = jnp.zeros((1, 3 * Hp), jnp.float32)
    bi_p = bi_p.at[:, 0 * Hp:0 * Hp + H].set(bih[0] + bhh[0])   # merged r bias
    bi_p = bi_p.at[:, 1 * Hp:1 * Hp + H].set(bih[1] + bhh[1])   # merged z bias
    bi_p = bi_p.at[:, 2 * Hp:2 * Hp + H].set(bih[2])            # b_in only
    bhn_p = jnp.zeros((1, Hp), jnp.float32).at[:, :H].set(bhh[2])
    wq_p = jnp.zeros((Hp, A), jnp.float32).at[:H, :].set(params["wq"])

    kernel = functools.partial(attention_rnn_kernel, hidden_size=H, frame_len=T)

    grid_spec = pltpu.PrefetchScalarGridSpec(
        num_scalar_prefetch=0,
        grid=(NB, NT),
        in_specs=[
            pl.BlockSpec((TB, BB, Din), lambda b, i: (i, b, 0)),   # x (time-major)
            pl.BlockSpec((BB, S, E), lambda b, i: (b, 0, 0)),      # memory
            pl.BlockSpec((BB, S, A), lambda b, i: (b, 0, 0)),      # memory @ W_c
            pl.BlockSpec((BB, S), lambda b, i: (b, 0)),            # attention mask
            pl.BlockSpec((BB, Hp), lambda b, i: (b, 0)),           # h0
            pl.BlockSpec((Din, 3 * Hp), lambda b, i: (0, 0)),      # W_ih packed
            pl.BlockSpec((Hp, 3 * Hp), lambda b, i: (0, 0)),       # W_hh packed
            pl.BlockSpec((1, 3 * Hp), lambda b, i: (0, 0)),        # merged gi bias
            pl.BlockSpec((1, Hp), lambda b, i: (0, 0)),            # b_hn
            pl.BlockSpec((Hp, A), lambda b, i: (0, 0)),            # W_q
            pl.BlockSpec((1, A), lambda b, i: (0, 0)),             # v
        ],
        out_specs=[
            pl.BlockSpec((TB, BB, SLAB), lambda b, i: (i, b, 0)),  # fused slab
            pl.BlockSpec((BB, Hp), lambda b, i: (b, 0)),           # final state
        ],
        scratch_shapes=[
            pltpu.VMEM((BB, Hp), jnp.float32),                     # h carry
            pltpu.VMEM((TB, BB, Hp), jnp.float32),                 # h per block
        ],
    )

    slab, state = pl.pallas_call(
        kernel,
        out_shape=(
            jax.ShapeDtypeStruct((Tp, Bp, SLAB), jnp.float32),
            jax.ShapeDtypeStruct((Bp, Hp), jnp.float32),
        ),
        grid_spec=grid_spec,
        compiler_params=pltpu.CompilerParams(
            dimension_semantics=("parallel", "arbitrary")),
    )(xt, memp, mproj, mask, h0p,
      wih_p, whh_p, bi_p, bhn_p, wq_p, params["v"])

    out = jnp.transpose(slab[:T, :B, :E + H], (1, 0, 2))             # (B,T,E+H)
    a = jnp.transpose(slab[:T, :B, E + H:E + H + S], (1, 0, 2))      # (B,T,S)
    return out, a, state[:B, :H][None]                               # (1,B,H)


# ----------------------------------------------------------------------------
# Pure-JAX reference (for verification)
# ----------------------------------------------------------------------------
def attention_rnn_reference(x, memory, text_length, params, h0=None):
    x = x.astype(jnp.float32)
    memory = memory.astype(jnp.float32)
    B, T, Din = x.shape
    S, E = memory.shape[1], memory.shape[2]
    wih, whh, bih, bhh = params["wih"], params["whh"], params["bih"], params["bhh"]
    H = whh.shape[-1]
    A = params["wq"].shape[-1]
    P = jax.lax.Precision.HIGHEST

    h_init = jnp.zeros((B, H), jnp.float32) if h0 is None else h0.reshape(B, H)

    def step(h, x_t):
        r = jax.nn.sigmoid(jnp.dot(x_t, wih[0], precision=P) + bih[0]
                           + jnp.dot(h, whh[0], precision=P) + bhh[0])
        z = jax.nn.sigmoid(jnp.dot(x_t, wih[1], precision=P) + bih[1]
                           + jnp.dot(h, whh[1], precision=P) + bhh[1])
        n = jnp.tanh(jnp.dot(x_t, wih[2], precision=P) + bih[2]
                     + r * (jnp.dot(h, whh[2], precision=P) + bhh[2]))
        h_new = (1.0 - z) * n + z * h
        return h_new, h_new

    h_fin, hs = jax.lax.scan(step, h_init, jnp.transpose(x, (1, 0, 2)))
    h_seq = jnp.transpose(hs, (1, 0, 2))                       # (B, T, H)

    q = jnp.dot(h_seq.reshape(B * T, H), params["wq"], precision=P).reshape(B, T, A)
    mp = jnp.dot(memory.reshape(B * S, E), params["wc"], precision=P).reshape(B, S, A)
    info = jnp.tanh(q[:, :, None, :] + mp[:, None, :, :])      # (B, T, S, A)
    energy = jnp.sum(info * params["v"].reshape(1, 1, 1, A), axis=-1)
    mask = jnp.arange(S)[None, None, :] >= jnp.asarray(text_length).reshape(B, 1, 1)
    energy = jnp.where(mask, -jnp.inf, energy)
    a = jax.nn.softmax(energy, axis=-1)
    context = jnp.einsum("bts,bse->bte", a, memory, precision=P)
    out = jnp.concatenate([context, h_seq], axis=-1)
    return out, a, h_fin[None]


# ----------------------------------------------------------------------------
# Main
# ----------------------------------------------------------------------------
if __name__ == "__main__":
    B, T = 2, 8          # batch, frame_length // r
    DIN = 32             # GRU input_size
    H = 32               # GRU hidden_size (attention query size)
    E = 32               # text_embed_size (context size)
    S = 16               # encoder sequence length
    A = E                # attention hidden size (module default: context_size)

    key = jax.random.PRNGKey(0)
    ks = jax.random.split(key, 10)
    bound = 1.0 / np.sqrt(H)
    u = lambda k, shp: jax.random.uniform(k, shp, jnp.float32, -bound, bound)

    # GRU weights stored gate-major [r | z | n], pre-transposed to (in, out).
    params = {
        "wih": u(ks[0], (3, DIN, H)),
        "whh": u(ks[1], (3, H, H)),
        "bih": u(ks[2], (3, 1, H)),
        "bhh": u(ks[3], (3, 1, H)),
        "wq": u(ks[4], (H, A)),
        "wc": u(ks[5], (E, A)),
        "v": jax.random.normal(ks[6], (1, A), jnp.float32),
    }

    x = jax.random.normal(ks[7], (B, T, DIN), jnp.float32)
    memory = jax.random.normal(ks[8], (B, S, E), jnp.float32)
    text_length = jnp.array([S, 11], dtype=jnp.int32)

    out, a, state = attention_rnn_forward(x, memory, text_length, params)
    jax.block_until_ready((out, a, state))

    ref_out, ref_a, ref_state = attention_rnn_reference(x, memory, text_length, params)
    np.testing.assert_allclose(np.asarray(out), np.asarray(ref_out), atol=1e-4, rtol=1e-4)
    np.testing.assert_allclose(np.asarray(a), np.asarray(ref_a), atol=1e-4, rtol=1e-4)
    np.testing.assert_allclose(np.asarray(state), np.asarray(ref_state), atol=1e-4, rtol=1e-4)

    assert out.shape == (B, T, E + H)
    assert a.shape == (B, T, S)
    assert state.shape == (1, B, H)
    # masked positions (beyond text_length) must get (near-)zero attention
    assert float(np.abs(np.asarray(a)[1, :, 11:]).max()) < 1e-6

    print("KERNEL_OK")
</pallas_src>

<mosaic_0001>
module attributes {stable_mosaic.version = 11 : i64} {
  func.func @attention_rnn_kernel(%arg0: i32, %arg1: i32, %arg2: memref<4x8x32xf32, #tpu.memory_space<vmem>>, %arg3: memref<8x16x32xf32, #tpu.memory_space<vmem>>, %arg4: memref<8x16x32xf32, #tpu.memory_space<vmem>>, %arg5: memref<8x16xf32, #tpu.memory_space<vmem>>, %arg6: memref<8x128xf32, #tpu.memory_space<vmem>>, %arg7: memref<32x384xf32, #tpu.memory_space<vmem>>, %arg8: memref<128x384xf32, #tpu.memory_space<vmem>>, %arg9: memref<1x384xf32, #tpu.memory_space<vmem>>, %arg10: memref<1x128xf32, #tpu.memory_space<vmem>>, %arg11: memref<128x32xf32, #tpu.memory_space<vmem>>, %arg12: memref<1x32xf32, #tpu.memory_space<vmem>>, %arg13: memref<4x8x128xf32, #tpu.memory_space<vmem>>, %arg14: memref<8x128xf32, #tpu.memory_space<vmem>>, %arg15: memref<8x128xf32, #tpu.memory_space<vmem>>, %arg16: memref<4x8x128xf32, #tpu.memory_space<vmem>>) attributes {dimension_semantics = [#tpu.dimension_semantics<parallel>, #tpu.dimension_semantics<arbitrary>], iteration_bounds = array<i64: 1, 2>, scalar_prefetch = 0 : i64, scratch_operands = 2 : i64, tpu.core_type = #tpu.core_type<tc>, window_params = [{transform_indices = @transform_0, window_bounds = array<i64: 4, 8, 32>}, {transform_indices = @transform_1, window_bounds = array<i64: 8, 16, 32>}, {transform_indices = @transform_2, window_bounds = array<i64: 8, 16, 32>}, {transform_indices = @transform_3, window_bounds = array<i64: 8, 16>}, {transform_indices = @transform_4, window_bounds = array<i64: 8, 128>}, {pipeline_mode = #tpu.pipeline_mode<synchronous>, transform_indices = @transform_5, window_bounds = array<i64: 32, 384>}, {pipeline_mode = #tpu.pipeline_mode<synchronous>, transform_indices = @transform_6, window_bounds = array<i64: 128, 384>}, {pipeline_mode = #tpu.pipeline_mode<synchronous>, transform_indices = @transform_7, window_bounds = array<i64: 1, 384>}, {pipeline_mode = #tpu.pipeline_mode<synchronous>, transform_indices = @transform_8, window_bounds = array<i64: 1, 128>}, {pipeline_mode = #tpu.pipeline_mode<synchronous>, transform_indices = @transform_9, window_bounds = array<i64: 128, 32>}, {pipeline_mode = #tpu.pipeline_mode<synchronous>, transform_indices = @transform_10, window_bounds = array<i64: 1, 32>}, {transform_indices = @transform_11, window_bounds = array<i64: 4, 8, 128>}, {transform_indices = @transform_12, window_bounds = array<i64: 8, 128>}]} {
    %c0_i32 = arith.constant 0 : i32
    %0 = arith.cmpi eq, %arg1, %c0_i32 : i32
    %1 = arith.extui %0 : i1 to i32
    %c0_i32_0 = arith.constant 0 : i32
    %2 = arith.cmpi ne, %1, %c0_i32_0 : i32
    scf.if %2 {
      %c0_71 = arith.constant 0 : index
      %c0_72 = arith.constant 0 : index
      %193 = vector.load %arg6[%c0_71, %c0_72] : memref<8x128xf32, #tpu.memory_space<vmem>>, vector<8x128xf32>
      %c0_73 = arith.constant 0 : index
      %c0_74 = arith.constant 0 : index
      %194 = vector.load %arg15[%c0_73, %c0_74] : memref<8x128xf32, #tpu.memory_space<vmem>>, vector<8x128xf32>
      tpu.vector_store %arg15[%c0_73, %c0_74], %193 {strides = array<i32>} : memref<8x128xf32, #tpu.memory_space<vmem>>, vector<8x128xf32>,
    } else {
    }
    %c0 = arith.constant 0 : index
    %c0_1 = arith.constant 0 : index
    %c0_2 = arith.constant 0 : index
    %3 = vector.load %arg2[%c0, %c0_1, %c0_2] : memref<4x8x32xf32, #tpu.memory_space<vmem>>, vector<4x8x32xf32>
    %4 = vector.shape_cast %3 : vector<4x8x32xf32> to vector<32x32xf32>
    %c0_3 = arith.constant 0 : index
    %c0_4 = arith.constant 0 : index
    %5 = vector.load %arg7[%c0_3, %c0_4] : memref<32x384xf32, #tpu.memory_space<vmem>>, vector<32x384xf32>
    %cst = arith.constant dense<0.000000e+00> : vector<32x384xf32>
    %6 = tpu.matmul %4, %5, %cst {dimension_numbers = #tpu.dot_dimension_numbers<[1], [0], [0], [1], [0, 0, 1, 1], [], []>} : vector<32x32xf32>, vector<32x384xf32>, vector<32x384xf32> -> vector<32x384xf32>
    %c0_5 = arith.constant 0 : index
    %c0_6 = arith.constant 0 : index
    %7 = vector.load %arg9[%c0_5, %c0_6] : memref<1x384xf32, #tpu.memory_space<vmem>>, vector<1x384xf32>
    %8 = vector.broadcast %7 : vector<1x384xf32> to vector<32x384xf32>
    %9 = arith.addf %6, %8 : vector<32x384xf32>
    %10 = vector.shape_cast %9 : vector<32x384xf32> to vector<4x8x384xf32>
    %c0_7 = arith.constant 0 : index
    %c0_8 = arith.constant 0 : index
    %11 = vector.load %arg8[%c0_7, %c0_8] : memref<128x384xf32, #tpu.memory_space<vmem>>, vector<128x384xf32>
    %c0_9 = arith.constant 0 : index
    %c0_10 = arith.constant 0 : index
    %12 = vector.load %arg10[%c0_9, %c0_10] : memref<1x128xf32, #tpu.memory_space<vmem>>, vector<1x128xf32>
    %13 = vector.shape_cast %12 : vector<1x128xf32> to vector<1x128xf32>
    %14 = vector.broadcast %13 : vector<1x128xf32> to vector<8x128xf32>
    %c0_11 = arith.constant 0 : index
    %c0_12 = arith.constant 0 : index
    %15 = vector.load %arg15[%c0_11, %c0_12] : memref<8x128xf32, #tpu.memory_space<vmem>>, vector<8x128xf32>
    %cst_13 = arith.constant dense<0.000000e+00> : vector<8x384xf32>
    %16 = tpu.matmul %15, %11, %cst_13 {dimension_numbers = #tpu.dot_dimension_numbers<[1], [0], [0], [1], [0, 0, 1, 1], [], []>} : vector<8x128xf32>, vector<128x384xf32>, vector<8x384xf32> -> vector<8x384xf32>
    %17 = vector.extract_strided_slice %10 {offsets = [0, 0, 0], sizes = [1, 8, 384], strides = [1, 1, 1]} : vector<4x8x384xf32> to vector<1x8x384xf32>
    %18 = vector.shape_cast %17 : vector<1x8x384xf32> to vector<8x384xf32>
    %19 = vector.extract_strided_slice %18 {offsets = [0, 0], sizes = [8, 128], strides = [1, 1]} : vector<8x384xf32> to vector<8x128xf32>
    %20 = vector.extract_strided_slice %16 {offsets = [0, 0], sizes = [8, 128], strides = [1, 1]} : vector<8x384xf32> to vector<8x128xf32>
    %21 = arith.addf %19, %20 : vector<8x128xf32>
    %22 = arith.negf %21 : vector<8x128xf32>
    %23 = math.exp %22 : vector<8x128xf32>
    %cst_14 = arith.constant 1.000000e+00 : f32
    %24 = vector.broadcast %cst_14 : f32 to vector<8x128xf32>
    %25 = arith.addf %24, %23 : vector<8x128xf32>
    %26 = arith.divf %24, %25 : vector<8x128xf32>
    %27 = vector.extract_strided_slice %18 {offsets = [0, 128], sizes = [8, 128], strides = [1, 1]} : vector<8x384xf32> to vector<8x128xf32>
    %28 = vector.extract_strided_slice %16 {offsets = [0, 128], sizes = [8, 128], strides = [1, 1]} : vector<8x384xf32> to vector<8x128xf32>
    %29 = arith.addf %27, %28 : vector<8x128xf32>
    %30 = arith.negf %29 : vector<8x128xf32>
    %31 = math.exp %30 : vector<8x128xf32>
    %cst_15 = arith.constant 1.000000e+00 : f32
    %32 = vector.broadcast %cst_15 : f32 to vector<8x128xf32>
    %33 = arith.addf %32, %31 : vector<8x128xf32>
    %34 = arith.divf %32, %33 : vector<8x128xf32>
    %35 = vector.extract_strided_slice %18 {offsets = [0, 256], sizes = [8, 128], strides = [1, 1]} : vector<8x384xf32> to vector<8x128xf32>
    %36 = vector.extract_strided_slice %16 {offsets = [0, 256], sizes = [8, 128], strides = [1, 1]} : vector<8x384xf32> to vector<8x128xf32>
    %37 = arith.addf %36, %14 : vector<8x128xf32>
    %38 = arith.mulf %26, %37 : vector<8x128xf32>
    %39 = arith.addf %35, %38 : vector<8x128xf32>
    %40 = math.tanh %39 : vector<8x128xf32>
    %cst_16 = arith.constant 1.000000e+00 : f32
    %41 = vector.broadcast %cst_16 : f32 to vector<8x128xf32>
    %42 = arith.subf %41, %34 : vector<8x128xf32>
    %43 = arith.mulf %42, %40 : vector<8x128xf32>
    %44 = arith.mulf %34, %15 : vector<8x128xf32>
    %45 = arith.addf %43, %44 : vector<8x128xf32>
    %c0_17 = arith.constant 0 : index
    %c0_18 = arith.constant 0 : index
    %c0_19 = arith.constant 0 : index
    %46 = vector.load %arg16[%c0_17, %c0_18, %c0_19] : memref<4x8x128xf32, #tpu.memory_space<vmem>>, vector<1x8x128xf32>
    %47 = vector.shape_cast %46 : vector<1x8x128xf32> to vector<8x128xf32>
    %48 = vector.shape_cast %45 : vector<8x128xf32> to vector<1x8x128xf32>
    tpu.vector_store %arg16[%c0_17, %c0_18, %c0_19], %48 {strides = array<i32>} : memref<4x8x128xf32, #tpu.memory_space<vmem>>, vector<1x8x128xf32>,
    %cst_20 = arith.constant dense<0.000000e+00> : vector<8x384xf32>
    %49 = tpu.matmul %45, %11, %cst_20 {dimension_numbers = #tpu.dot_dimension_numbers<[1], [0], [0], [1], [0, 0, 1, 1], [], []>} : vector<8x128xf32>, vector<128x384xf32>, vector<8x384xf32> -> vector<8x384xf32>
    %50 = vector.extract_strided_slice %10 {offsets = [1, 0, 0], sizes = [1, 8, 384], strides = [1, 1, 1]} : vector<4x8x384xf32> to vector<1x8x384xf32>
    %51 = vector.shape_cast %50 : vector<1x8x384xf32> to vector<8x384xf32>
    %52 = vector.extract_strided_slice %51 {offsets = [0, 0], sizes = [8, 128], strides = [1, 1]} : vector<8x384xf32> to vector<8x128xf32>
    %53 = vector.extract_strided_slice %49 {offsets = [0, 0], sizes = [8, 128], strides = [1, 1]} : vector<8x384xf32> to vector<8x128xf32>
    %54 = arith.addf %52, %53 : vector<8x128xf32>
    %55 = arith.negf %54 : vector<8x128xf32>
    %56 = math.exp %55 : vector<8x128xf32>
    %cst_21 = arith.constant 1.000000e+00 : f32
    %57 = vector.broadcast %cst_21 : f32 to vector<8x128xf32>
    %58 = arith.addf %57, %56 : vector<8x128xf32>
    %59 = arith.divf %57, %58 : vector<8x128xf32>
    %60 = vector.extract_strided_slice %51 {offsets = [0, 128], sizes = [8, 128], strides = [1, 1]} : vector<8x384xf32> to vector<8x128xf32>
    %61 = vector.extract_strided_slice %49 {offsets = [0, 128], sizes = [8, 128], strides = [1, 1]} : vector<8x384xf32> to vector<8x128xf32>
    %62 = arith.addf %60, %61 : vector<8x128xf32>
    %63 = arith.negf %62 : vector<8x128xf32>
    %64 = math.exp %63 : vector<8x128xf32>
    %cst_22 = arith.constant 1.000000e+00 : f32
    %65 = vector.broadcast %cst_22 : f32 to vector<8x128xf32>
    %66 = arith.addf %65, %64 : vector<8x128xf32>
    %67 = arith.divf %65, %66 : vector<8x128xf32>
    %68 = vector.extract_strided_slice %51 {offsets = [0, 256], sizes = [8, 128], strides = [1, 1]} : vector<8x384xf32> to vector<8x128xf32>
    %69 = vector.extract_strided_slice %49 {offsets = [0, 256], sizes = [8, 128], strides = [1, 1]} : vector<8x384xf32> to vector<8x128xf32>
    %70 = arith.addf %69, %14 : vector<8x128xf32>
    %71 = arith.mulf %59, %70 : vector<8x128xf32>
    %72 = arith.addf %68, %71 : vector<8x128xf32>
    %73 = math.tanh %72 : vector<8x128xf32>
    %cst_23 = arith.constant 1.000000e+00 : f32
    %74 = vector.broadcast %cst_23 : f32 to vector<8x128xf32>
    %75 = arith.subf %74, %67 : vector<8x128xf32>
    %76 = arith.mulf %75, %73 : vector<8x128xf32>
    %77 = arith.mulf %67, %45 : vector<8x128xf32>
    %78 = arith.addf %76, %77 : vector<8x128xf32>
    %c1 = arith.constant 1 : index
    %c0_24 = arith.constant 0 : index
    %c0_25 = arith.constant 0 : index
    %79 = vector.load %arg16[%c1, %c0_24, %c0_25] : memref<4x8x128xf32, #tpu.memory_space<vmem>>, vector<1x8x128xf32>
    %80 = vector.shape_cast %79 : vector<1x8x128xf32> to vector<8x128xf32>
    %81 = vector.shape_cast %78 : vector<8x128xf32> to vector<1x8x128xf32>
    tpu.vector_store %arg16[%c1, %c0_24, %c0_25], %81 {strides = array<i32>} : memref<4x8x128xf32, #tpu.memory_space<vmem>>, vector<1x8x128xf32>,
    %cst_26 = arith.constant dense<0.000000e+00> : vector<8x384xf32>
    %82 = tpu.matmul %78, %11, %cst_26 {dimension_numbers = #tpu.dot_dimension_numbers<[1], [0], [0], [1], [0, 0, 1, 1], [], []>} : vector<8x128xf32>, vector<128x384xf32>, vector<8x384xf32> -> vector<8x384xf32>
    %83 = vector.extract_strided_slice %10 {offsets = [2, 0, 0], sizes = [1, 8, 384], strides = [1, 1, 1]} : vector<4x8x384xf32> to vector<1x8x384xf32>
    %84 = vector.shape_cast %83 : vector<1x8x384xf32> to vector<8x384xf32>
    %85 = vector.extract_strided_slice %84 {offsets = [0, 0], sizes = [8, 128], strides = [1, 1]} : vector<8x384xf32> to vector<8x128xf32>
    %86 = vector.extract_strided_slice %82 {offsets = [0, 0], sizes = [8, 128], strides = [1, 1]} : vector<8x384xf32> to vector<8x128xf32>
    %87 = arith.addf %85, %86 : vector<8x128xf32>
    %88 = arith.negf %87 : vector<8x128xf32>
    %89 = math.exp %88 : vector<8x128xf32>
    %cst_27 = arith.constant 1.000000e+00 : f32
    %90 = vector.broadcast %cst_27 : f32 to vector<8x128xf32>
    %91 = arith.addf %90, %89 : vector<8x128xf32>
    %92 = arith.divf %90, %91 : vector<8x128xf32>
    %93 = vector.extract_strided_slice %84 {offsets = [0, 128], sizes = [8, 128], strides = [1, 1]} : vector<8x384xf32> to vector<8x128xf32>
    %94 = vector.extract_strided_slice %82 {offsets = [0, 128], sizes = [8, 128], strides = [1, 1]} : vector<8x384xf32> to vector<8x128xf32>
    %95 = arith.addf %93, %94 : vector<8x128xf32>
    %96 = arith.negf %95 : vector<8x128xf32>
    %97 = math.exp %96 : vector<8x128xf32>
    %cst_28 = arith.constant 1.000000e+00 : f32
    %98 = vector.broadcast %cst_28 : f32 to vector<8x128xf32>
    %99 = arith.addf %98, %97 : vector<8x128xf32>
    %100 = arith.divf %98, %99 : vector<8x128xf32>
    %101 = vector.extract_strided_slice %84 {offsets = [0, 256], sizes = [8, 128], strides = [1, 1]} : vector<8x384xf32> to vector<8x128xf32>
    %102 = vector.extract_strided_slice %82 {offsets = [0, 256], sizes = [8, 128], strides = [1, 1]} : vector<8x384xf32> to vector<8x128xf32>
    %103 = arith.addf %102, %14 : vector<8x128xf32>
    %104 = arith.mulf %92, %103 : vector<8x128xf32>
    %105 = arith.addf %101, %104 : vector<8x128xf32>
    %106 = math.tanh %105 : vector<8x128xf32>
    %cst_29 = arith.constant 1.000000e+00 : f32
    %107 = vector.broadcast %cst_29 : f32 to vector<8x128xf32>
    %108 = arith.subf %107, %100 : vector<8x128xf32>
    %109 = arith.mulf %108, %106 : vector<8x128xf32>
    %110 = arith.mulf %100, %78 : vector<8x128xf32>
    %111 = arith.addf %109, %110 : vector<8x128xf32>
    %c2 = arith.constant 2 : index
    %c0_30 = arith.constant 0 : index
    %c0_31 = arith.constant 0 : index
    %112 = vector.load %arg16[%c2, %c0_30, %c0_31] : memref<4x8x128xf32, #tpu.memory_space<vmem>>, vector<1x8x128xf32>
    %113 = vector.shape_cast %112 : vector<1x8x128xf32> to vector<8x128xf32>
    %114 = vector.shape_cast %111 : vector<8x128xf32> to vector<1x8x128xf32>
    tpu.vector_store %arg16[%c2, %c0_30, %c0_31], %114 {strides = array<i32>} : memref<4x8x128xf32, #tpu.memory_space<vmem>>, vector<1x8x128xf32>,
    %cst_32 = arith.constant dense<0.000000e+00> : vector<8x384xf32>
    %115 = tpu.matmul %111, %11, %cst_32 {dimension_numbers = #tpu.dot_dimension_numbers<[1], [0], [0], [1], [0, 0, 1, 1], [], []>} : vector<8x128xf32>, vector<128x384xf32>, vector<8x384xf32> -> vector<8x384xf32>
    %116 = vector.extract_strided_slice %10 {offsets = [3, 0, 0], sizes = [1, 8, 384], strides = [1, 1, 1]} : vector<4x8x384xf32> to vector<1x8x384xf32>
    %117 = vector.shape_cast %116 : vector<1x8x384xf32> to vector<8x384xf32>
    %118 = vector.extract_strided_slice %117 {offsets = [0, 0], sizes = [8, 128], strides = [1, 1]} : vector<8x384xf32> to vector<8x128xf32>
    %119 = vector.extract_strided_slice %115 {offsets = [0, 0], sizes = [8, 128], strides = [1, 1]} : vector<8x384xf32> to vector<8x128xf32>
    %120 = arith.addf %118, %119 : vector<8x128xf32>
    %121 = arith.negf %120 : vector<8x128xf32>
    %122 = math.exp %121 : vector<8x128xf32>
    %cst_33 = arith.constant 1.000000e+00 : f32
    %123 = vector.broadcast %cst_33 : f32 to vector<8x128xf32>
    %124 = arith.addf %123, %122 : vector<8x128xf32>
    %125 = arith.divf %123, %124 : vector<8x128xf32>
    %126 = vector.extract_strided_slice %117 {offsets = [0, 128], sizes = [8, 128], strides = [1, 1]} : vector<8x384xf32> to vector<8x128xf32>
    %127 = vector.extract_strided_slice %115 {offsets = [0, 128], sizes = [8, 128], strides = [1, 1]} : vector<8x384xf32> to vector<8x128xf32>
    %128 = arith.addf %126, %127 : vector<8x128xf32>
    %129 = arith.negf %128 : vector<8x128xf32>
    %130 = math.exp %129 : vector<8x128xf32>
    %cst_34 = arith.constant 1.000000e+00 : f32
    %131 = vector.broadcast %cst_34 : f32 to vector<8x128xf32>
    %132 = arith.addf %131, %130 : vector<8x128xf32>
    %133 = arith.divf %131, %132 : vector<8x128xf32>
    %134 = vector.extract_strided_slice %117 {offsets = [0, 256], sizes = [8, 128], strides = [1, 1]} : vector<8x384xf32> to vector<8x128xf32>
    %135 = vector.extract_strided_slice %115 {offsets = [0, 256], sizes = [8, 128], strides = [1, 1]} : vector<8x384xf32> to vector<8x128xf32>
    %136 = arith.addf %135, %14 : vector<8x128xf32>
    %137 = arith.mulf %125, %136 : vector<8x128xf32>
    %138 = arith.addf %134, %137 : vector<8x128xf32>
    %139 = math.tanh %138 : vector<8x128xf32>
    %cst_35 = arith.constant 1.000000e+00 : f32
    %140 = vector.broadcast %cst_35 : f32 to vector<8x128xf32>
    %141 = arith.subf %140, %133 : vector<8x128xf32>
    %142 = arith.mulf %141, %139 : vector<8x128xf32>
    %143 = arith.mulf %133, %111 : vector<8x128xf32>
    %144 = arith.addf %142, %143 : vector<8x128xf32>
    %c3 = arith.constant 3 : index
    %c0_36 = arith.constant 0 : index
    %c0_37 = arith.constant 0 : index
    %145 = vector.load %arg16[%c3, %c0_36, %c0_37] : memref<4x8x128xf32, #tpu.memory_space<vmem>>, vector<1x8x128xf32>
    %146 = vector.shape_cast %145 : vector<1x8x128xf32> to vector<8x128xf32>
    %147 = vector.shape_cast %144 : vector<8x128xf32> to vector<1x8x128xf32>
    tpu.vector_store %arg16[%c3, %c0_36, %c0_37], %147 {strides = array<i32>} : memref<4x8x128xf32, #tpu.memory_space<vmem>>, vector<1x8x128xf32>,
    %c0_38 = arith.constant 0 : index
    %c0_39 = arith.constant 0 : index
    %148 = vector.load %arg15[%c0_38, %c0_39] : memref<8x128xf32, #tpu.memory_space<vmem>>, vector<8x128xf32>
    tpu.vector_store %arg15[%c0_38, %c0_39], %144 {strides = array<i32>} : memref<8x128xf32, #tpu.memory_space<vmem>>, vector<8x128xf32>,
    %c0_40 = arith.constant 0 : index
    %c0_41 = arith.constant 0 : index
    %c0_42 = arith.constant 0 : index
    %149 = vector.load %arg16[%c0_40, %c0_41, %c0_42] : memref<4x8x128xf32, #tpu.memory_space<vmem>>, vector<4x8x128xf32>
    %150 = vector.shape_cast %149 : vector<4x8x128xf32> to vector<32x128xf32>
    %c0_43 = arith.constant 0 : index
    %c0_44 = arith.constant 0 : index
    %151 = vector.load %arg11[%c0_43, %c0_44] : memref<128x32xf32, #tpu.memory_space<vmem>>, vector<128x32xf32>
    %cst_45 = arith.constant dense<0.000000e+00> : vector<32x32xf32>
    %152 = tpu.matmul %150, %151, %cst_45 {dimension_numbers = #tpu.dot_dimension_numbers<[1], [0], [0], [1], [0, 0, 1, 1], [], []>} : vector<32x128xf32>, vector<128x32xf32>, vector<32x32xf32> -> vector<32x32xf32>
    %153 = vector.shape_cast %152 : vector<32x32xf32> to vector<4x8x32xf32>
    %154 = vector.shape_cast %153 : vector<4x8x32xf32> to vector<4x8x1x32xf32>
    %c0_46 = arith.constant 0 : index
    %c0_47 = arith.constant 0 : index
    %c0_48 = arith.constant 0 : index
    %155 = vector.load %arg4[%c0_46, %c0_47, %c0_48] : memref<8x16x32xf32, #tpu.memory_space<vmem>>, vector<8x16x32xf32>
    %156 = vector.shape_cast %155 : vector<8x16x32xf32> to vector<1x8x16x32xf32>
    %157 = vector.broadcast %154 : vector<4x8x1x32xf32> to vector<4x8x16x32xf32>
    %158 = vector.broadcast %156 : vector<1x8x16x32xf32> to vector<4x8x16x32xf32>
    %159 = arith.addf %157, %158 : vector<4x8x16x32xf32>
    %160 = math.tanh %159 : vector<4x8x16x32xf32>
    %c0_49 = arith.constant 0 : index
    %c0_50 = arith.constant 0 : index
    %161 = vector.load %arg12[%c0_49, %c0_50] : memref<1x32xf32, #tpu.memory_space<vmem>>, vector<1x32xf32>
    %162 = vector.shape_cast %161 : vector<1x32xf32> to vector<1x1x1x32xf32>
    %163 = vector.broadcast %162 : vector<1x1x1x32xf32> to vector<4x8x16x32xf32>
    %164 = arith.mulf %160, %163 : vector<4x8x16x32xf32>
    %cst_51 = arith.constant dense<0.000000e+00> : vector<4x8x16xf32>
    %165 = vector.multi_reduction <add>, %164, %cst_51 [3] : vector<4x8x16x32xf32> to vector<4x8x16xf32>
    %c0_52 = arith.constant 0 : index
    %c0_53 = arith.constant 0 : index
    %166 = vector.load %arg5[%c0_52, %c0_53] : memref<8x16xf32, #tpu.memory_space<vmem>>, vector<8x16xf32>
    %167 = vector.shape_cast %166 : vector<8x16xf32> to vector<1x8x16xf32>
    %168 = vector.broadcast %167 : vector<1x8x16xf32> to vector<4x8x16xf32>
    %169 = arith.addf %165, %168 : vector<4x8x16xf32>
    %cst_54 = arith.constant dense<0xFF800000> : vector<4x8xf32>
    %170 = vector.multi_reduction <maximumf>, %169, %cst_54 [2] : vector<4x8x16xf32> to vector<4x8xf32>
    %171 = vector.shape_cast %170 : vector<4x8xf32> to vector<4x8x1xf32>
    %172 = vector.broadcast %171 : vector<4x8x1xf32> to vector<4x8x16xf32>
    %173 = arith.subf %169, %172 : vector<4x8x16xf32>
    %174 = math.exp %173 : vector<4x8x16xf32>
    %cst_55 = arith.constant dense<0.000000e+00> : vector<4x8xf32>
    %175 = vector.multi_reduction <add>, %174, %cst_55 [2] : vector<4x8x16xf32> to vector<4x8xf32>
    %176 = vector.shape_cast %175 : vector<4x8xf32> to vector<4x8x1xf32>
    %177 = tpu.reciprocal %176 : vector<4x8x1xf32> -> vector<4x8x1xf32>
    %178 = vector.broadcast %177 : vector<4x8x1xf32> to vector<4x8x16xf32>
    %179 = arith.mulf %174, %178 : vector<4x8x16xf32>
    %180 = tpu.transpose %179, [1, 0, 2] : vector<4x8x16xf32> -> vector<8x4x16xf32>
    %c0_56 = arith.constant 0 : index
    %c0_57 = arith.constant 0 : index
    %c0_58 = arith.constant 0 : index
    %181 = vector.load %arg3[%c0_56, %c0_57, %c0_58] : memref<8x16x32xf32, #tpu.memory_space<vmem>>, vector<8x16x32xf32>
    %cst_59 = arith.constant dense<0.000000e+00> : vector<8x4x32xf32>
    %182 = tpu.matmul %180, %181, %cst_59 {dimension_numbers = #tpu.dot_dimension_numbers<[2], [1], [1], [2], [0, 0, 0, 1, 1, 2], [0], [0]>} : vector<8x4x16xf32>, vector<8x16x32xf32>, vector<8x4x32xf32> -> vector<8x4x32xf32>
    %183 = tpu.transpose %182, [1, 0, 2] : vector<8x4x32xf32> -> vector<4x8x32xf32>
    %c0_60 = arith.constant 0 : index
    %c0_61 = arith.constant 0 : index
    %c0_62 = arith.constant 0 : index
    %184 = vector.load %arg13[%c0_60, %c0_61, %c0_62] : memref<4x8x128xf32, #tpu.memory_space<vmem>>, vector<4x8x32xf32>
    tpu.vector_store %arg13[%c0_60, %c0_61, %c0_62], %183 {strides = array<i32>} : memref<4x8x128xf32, #tpu.memory_space<vmem>>, vector<4x8x32xf32>,
    %185 = vector.extract_strided_slice %149 {offsets = [0, 0, 0], sizes = [4, 8, 32], strides = [1, 1, 1]} : vector<4x8x128xf32> to vector<4x8x32xf32>
    %c0_63 = arith.constant 0 : index
    %c0_64 = arith.constant 0 : index
    %c32 = arith.constant 32 : index
    %186 = vector.load %arg13[%c0_63, %c0_64, %c32] : memref<4x8x128xf32, #tpu.memory_space<vmem>>, vector<4x8x32xf32>
    tpu.vector_store %arg13[%c0_63, %c0_64, %c32], %185 {strides = array<i32>} : memref<4x8x128xf32, #tpu.memory_space<vmem>>, vector<4x8x32xf32>,
    %c0_65 = arith.constant 0 : index
    %c0_66 = arith.constant 0 : index
    %c64 = arith.constant 64 : index
    %187 = vector.load %arg13[%c0_65, %c0_66, %c64] : memref<4x8x128xf32, #tpu.memory_space<vmem>>, vector<4x8x16xf32>
    tpu.vector_store %arg13[%c0_65, %c0_66, %c64], %179 {strides = array<i32>} : memref<4x8x128xf32, #tpu.memory_space<vmem>>, vector<4x8x16xf32>,
    %cst_67 = arith.constant 0.000000e+00 : f32
    %188 = vector.broadcast %cst_67 : f32 to vector<4x8x48xf32>
    %c0_68 = arith.constant 0 : index
    %c0_69 = arith.constant 0 : index
    %c80 = arith.constant 80 : index
    %189 = vector.load %arg13[%c0_68, %c0_69, %c80] : memref<4x8x128xf32, #tpu.memory_space<vmem>>, vector<4x8x48xf32>
    tpu.vector_store %arg13[%c0_68, %c0_69, %c80], %188 {strides = array<i32>} : memref<4x8x128xf32, #tpu.memory_space<vmem>>, vector<4x8x48xf32>,
    %c1_i32 = arith.constant 1 : i32
    %190 = arith.cmpi eq, %arg1, %c1_i32 : i32
    %191 = arith.extui %190 : i1 to i32
    %c0_i32_70 = arith.constant 0 : i32
    %192 = arith.cmpi ne, %191, %c0_i32_70 : i32
    scf.if %192 {
      %c0_71 = arith.constant 0 : index
      %c0_72 = arith.constant 0 : index
      %193 = vector.load %arg14[%c0_71, %c0_72] : memref<8x128xf32, #tpu.memory_space<vmem>>, vector<8x128xf32>
      tpu.vector_store %arg14[%c0_71, %c0_72], %144 {strides = array<i32>} : memref<8x128xf32, #tpu.memory_space<vmem>>, vector<8x128xf32>,
    } else {
    }
    return
  }
  func.func @transform_0(%arg0: i32, %arg1: i32) -> (i32, i32, i32) {
    %c0_i32 = arith.constant 0 : i32
    %c0_i32_0 = arith.constant 0 : i32
    return %arg1, %arg0, %c0_i32 : i32, i32, i32
  }
  func.func @transform_1(%arg0: i32, %arg1: i32) -> (i32, i32, i32) {
    %c0_i32 = arith.constant 0 : i32
    %c0_i32_0 = arith.constant 0 : i32
    %c0_i32_1 = arith.constant 0 : i32
    return %arg0, %c0_i32, %c0_i32_0 : i32, i32, i32
  }
  func.func @transform_2(%arg0: i32, %arg1: i32) -> (i32, i32, i32) {
    %c0_i32 = arith.constant 0 : i32
    %c0_i32_0 = arith.constant 0 : i32
    %c0_i32_1 = arith.constant 0 : i32
    return %arg0, %c0_i32, %c0_i32_0 : i32, i32, i32
  }
  func.func @transform_3(%arg0: i32, %arg1: i32) -> (i32, i32) {
    %c0_i32 = arith.constant 0 : i32
    %c0_i32_0 = arith.constant 0 : i32
    return %arg0, %c0_i32 : i32, i32
  }
  func.func @transform_4(%arg0: i32, %arg1: i32) -> (i32, i32) {
    %c0_i32 = arith.constant 0 : i32
    %c0_i32_0 = arith.constant 0 : i32
    return %arg0, %c0_i32 : i32, i32
  }
  func.func @transform_5(%arg0: i32, %arg1: i32) -> (i32, i32) {
    %c0_i32 = arith.constant 0 : i32
    %c0_i32_0 = arith.constant 0 : i32
    %c0_i32_1 = arith.constant 0 : i32
    return %c0_i32, %c0_i32_0 : i32, i32
  }
  func.func @transform_6(%arg0: i32, %arg1: i32) -> (i32, i32) {
    %c0_i32 = arith.constant 0 : i32
    %c0_i32_0 = arith.constant 0 : i32
    %c0_i32_1 = arith.constant 0 : i32
    return %c0_i32, %c0_i32_0 : i32, i32
  }
  func.func @transform_7(%arg0: i32, %arg1: i32) -> (i32, i32) {
    %c0_i32 = arith.constant 0 : i32
    %c0_i32_0 = arith.constant 0 : i32
    %c0_i32_1 = arith.constant 0 : i32
    return %c0_i32, %c0_i32_0 : i32, i32
  }
  func.func @transform_8(%arg0: i32, %arg1: i32) -> (i32, i32) {
    %c0_i32 = arith.constant 0 : i32
    %c0_i32_0 = arith.constant 0 : i32
    %c0_i32_1 = arith.constant 0 : i32
    return %c0_i32, %c0_i32_0 : i32, i32
  }
  func.func @transform_9(%arg0: i32, %arg1: i32) -> (i32, i32) {
    %c0_i32 = arith.constant 0 : i32
    %c0_i32_0 = arith.constant 0 : i32
    %c0_i32_1 = arith.constant 0 : i32
    return %c0_i32, %c0_i32_0 : i32, i32
  }
  func.func @transform_10(%arg0: i32, %arg1: i32) -> (i32, i32) {
    %c0_i32 = arith.constant 0 : i32
    %c0_i32_0 = arith.constant 0 : i32
    %c0_i32_1 = arith.constant 0 : i32
    return %c0_i32, %c0_i32_0 : i32, i32
  }
  func.func @transform_11(%arg0: i32, %arg1: i32) -> (i32, i32, i32) {
    %c0_i32 = arith.constant 0 : i32
    %c0_i32_0 = arith.constant 0 : i32
    return %arg1, %arg0, %c0_i32 : i32, i32, i32
  }
  func.func @transform_12(%arg0: i32, %arg1: i32) -> (i32, i32) {
    %c0_i32 = arith.constant 0 : i32
    %c0_i32_0 = arith.constant 0 : i32
    return %arg0, %c0_i32 : i32, i32
  }
}

</mosaic_0001>

<llo_original>
// kernel: attention_rnn_forward.1
$region0: #{attention_rnn_forward.1}
  #allocation0 [shape = 'u32[]', space=smem, size = 0x4, offset = 0x4, fixed_abs, tag = 'smem constant byte address 0x4 - core index']
  #allocation1 [shape = 'u32[144,128]{1,0:T(1,128)}', space=vmem, size = 0x12000, scoped, tag = 'internal scratch']
  #allocation2 [shape = 'f32[8,128]{1,0:T(8,128)}', space=vmem, size = 0x1000, scoped, tag = 'scratch operand']
  #allocation3 [shape = 'f32[4,8,128]{2,1,0:T(8,128)}', space=vmem, size = 0x4000, scoped, tag = 'scratch operand']
  %s0 = inlined_call_operand.vmem [shape: f32[8,8,32], index: 0, kind: input, shape index: {}]
  %s1 = inlined_call_operand.vmem [shape: f32[8,16,32], index: 1, kind: input, shape index: {}]
  %s2 = inlined_call_operand.vmem [shape: f32[8,16,32], index: 2, kind: input, shape index: {}]
  %s3 = inlined_call_operand.vmem [shape: f32[8,16], index: 3, kind: input, shape index: {}]
  %s4 = inlined_call_operand.vmem [shape: f32[8,128], index: 4, kind: input, shape index: {}]
  %s5 = inlined_call_operand.vmem [shape: f32[32,384], index: 5, kind: input, shape index: {}]
  %s6 = inlined_call_operand.vmem [shape: f32[128,384], index: 6, kind: input, shape index: {}]
  %s7 = inlined_call_operand.vmem [shape: f32[1,384], index: 7, kind: input, shape index: {}]
  %s8 = inlined_call_operand.vmem [shape: f32[1,128], index: 8, kind: input, shape index: {}]
  %s9 = inlined_call_operand.vmem [shape: f32[128,32], index: 9, kind: input, shape index: {}]
  %s10 = inlined_call_operand.vmem [shape: f32[1,32], index: 10, kind: input, shape index: {}]
  %s11 = inlined_call_operand.vmem [shape: f32[8,8,128], index: 11, kind: output, shape index: {0}]
  %s12 = inlined_call_operand.vmem [shape: f32[8,128], index: 12, kind: output, shape index: {1}]
  %13 = xla_tuple %s11, %s12
  %s14 = sld [smem:[#allocation0]]
  $region93: #{attention_rnn_forward.1} parent=0
    _
  %s16 = ssub.s32 1, %s14
  %s17 = scalar_select 0, %s16, %s14
  loop: start=0, step=1, limit=4
  $region2: #{attention_rnn_forward.1} parent=0 // loop_pre_header
    _
  $region3: #{attention_rnn_forward.1} parent=0 // loop_header
    %s19 = sphi 0, %s23
    %p20 = scmp.ge.s32.totalorder %s19, 4
    %s26 = sphi 0, %s38
    %s27 = sphi 0, %s34
    %s28 = sphi 0, %s26
    %s29 = sphi 0, %s27
    %s30 = sphi 0, %s28
    %s31 = sphi 0, %s29
    %s43 = sphi 0, %s45
    %s46 = sphi 0, %s43
    %s47 = sphi 0, %s46
    %s63 = sphi 0, %s47
    %s69 = sphi 0, %s71
    %s72 = sphi 0, %s69
    %s73 = sphi 0, %s72
    %s89 = sphi 0, %s73
    %s95 = sphi 0, %s97
    %s98 = sphi 0, %s95
    %s99 = sphi 0, %s98
    %s115 = sphi 0, %s99
    %s121 = sphi 0, %s123
    %s124 = sphi 0, %s121
    %s125 = sphi 0, %s124
    %s141 = sphi 0, %s125
    %s147 = sphi 0, %s149
    %s150 = sphi 0, %s147
    %s151 = sphi 0, %s150
    %s167 = sphi 0, %s151
    %s171 = sphi 0, %s171
    %s173 = sphi 0, %s171
    %s174 = sphi 0, %s173
    %s188 = sphi 0, %s174
    %s192 = sphi 0, %s192
    %s194 = sphi 0, %s192
    %s195 = sphi 0, %s194
    %s209 = sphi 0, %s195
    %s213 = sphi 0, %s213
    %s215 = sphi 0, %s213
    %s216 = sphi 0, %s215
    %s230 = sphi 0, %s216
    %s234 = sphi 0, %s234
    %s236 = sphi 0, %s234
    %s237 = sphi 0, %s236
    %s251 = sphi 0, %s237
    %s255 = sphi 0, %s255
    %s257 = sphi 0, %s255
    %s258 = sphi 0, %s257
    %s272 = sphi 0, %s258
    %s276 = sphi 0, %s276
    %s278 = sphi 0, %s276
    %s279 = sphi 0, %s278
    %s293 = sphi 0, %s279
    %s301 = sphi 0, %s303
    %s304 = sphi 0, %s301
    %s305 = sphi 0, %s304
    %s321 = sphi 0, %s305
    %s327 = sphi 0, %s329
    %s330 = sphi 0, %s327
    %s331 = sphi 0, %s330
    %s347 = sphi 0, %s331
  $region4: #{attention_rnn_forward.1} parent=0 // loop_header_branch
    %22 = sbr.rel (%p20) target = $region8
  $region5: #{attention_rnn_forward.1} parent=0 // loop_body
    %s24 = ssub.s32 %s19, 1
    %s25 = ssub.s32 %s19, 2
    %s32 = sadd.s32 1, %s27
    %p33 = scmp.ge.s32.totalorder %s32, 2
    %s34 = scalar_select %p33, 0, %s32
    %s35 = sadd.s32 1, %s26
    %s36 = scalar_select %p33, %s35, %s26
    %p37 = scmp.ge.s32.totalorder %s36, 1
    %s38 = scalar_select %p37, 0, %s36
    %s39 = ssub.s32 %s27, %s34
    %s40 = ssub.s32 %s26, %s38
    %s41 = sor.u32 %s39, %s40
    %p42 = scmp.eq.s32.totalorder %s41, 0
    %s44 = sadd.s32 %s43, 1
    %s45 = scalar_select %p42, %s43, %s44
    %p48 = pneg %p42
    %p49 = scmp.eq.s32.totalorder %s19, 1
    %p50 = por %p48, %p49
    %p51 = scmp.ne.s32.totalorder %s43, %s46
    %p52 = scmp.eq.s32.totalorder %s19, 0
    %p53 = por %p51, %p52
    %p54 = scmp.ne.s32.totalorder %s43, %s46
    %p55 = scmp.eq.s32.totalorder %s24, 1
    %p56 = por %p54, %p55
    %p57 = scmp.ne.s32.totalorder %s46, %s47
    %p58 = scmp.eq.s32.totalorder %s24, 0
    %p59 = por %p57, %p58
    %p60 = scmp.ne.s32.totalorder %s46, %s47
    %p61 = scmp.eq.s32.totalorder %s25, 1
    %p62 = por %p60, %p61
    %p64 = scmp.ne.s32.totalorder %s47, %s63
    %p65 = scmp.eq.s32.totalorder %s25, 0
    %p66 = por %p64, %p65
    %s67 = ssub.s32 %s26, %s38
    %p68 = scmp.eq.s32.totalorder %s67, 0
    %s70 = sadd.s32 %s69, 1
    %s71 = scalar_select %p68, %s69, %s70
    %p74 = pneg %p68
    %p75 = scmp.eq.s32.totalorder %s19, 1
    %p76 = por %p74, %p75
    %p77 = scmp.ne.s32.totalorder %s69, %s72
    %p78 = scmp.eq.s32.totalorder %s19, 0
    %p79 = por %p77, %p78
    %p80 = scmp.ne.s32.totalorder %s69, %s72
    %p81 = scmp.eq.s32.totalorder %s24, 1
    %p82 = por %p80, %p81
    %p83 = scmp.ne.s32.totalorder %s72, %s73
    %p84 = scmp.eq.s32.totalorder %s24, 0
    %p85 = por %p83, %p84
    %p86 = scmp.ne.s32.totalorder %s72, %s73
    %p87 = scmp.eq.s32.totalorder %s25, 1
    %p88 = por %p86, %p87
    %p90 = scmp.ne.s32.totalorder %s73, %s89
    %p91 = scmp.eq.s32.totalorder %s25, 0
    %p92 = por %p90, %p91
    %s93 = ssub.s32 %s26, %s38
    %p94 = scmp.eq.s32.totalorder %s93, 0
    %s96 = sadd.s32 %s95, 1
    %s97 = scalar_select %p94, %s95, %s96
    %p100 = pneg %p94
    %p101 = scmp.eq.s32.totalorder %s19, 1
    %p102 = por %p100, %p101
    %p103 = scmp.ne.s32.totalorder %s95, %s98
    %p104 = scmp.eq.s32.totalorder %s19, 0
    %p105 = por %p103, %p104
    %p106 = scmp.ne.s32.totalorder %s95, %s98
    %p107 = scmp.eq.s32.totalorder %s24, 1
    %p108 = por %p106, %p107
    %p109 = scmp.ne.s32.totalorder %s98, %s99
    %p110 = scmp.eq.s32.totalorder %s24, 0
    %p111 = por %p109, %p110
    %p112 = scmp.ne.s32.totalorder %s98, %s99
    %p113 = scmp.eq.s32.totalorder %s25, 1
    %p114 = por %p112, %p113
    %p116 = scmp.ne.s32.totalorder %s99, %s115
    %p117 = scmp.eq.s32.totalorder %s25, 0
    %p118 = por %p116, %p117
    %s119 = ssub.s32 %s26, %s38
    %p120 = scmp.eq.s32.totalorder %s119, 0
    %s122 = sadd.s32 %s121, 1
    %s123 = scalar_select %p120, %s121, %s122
    %p126 = pneg %p120
    %p127 = scmp.eq.s32.totalorder %s19, 1
    %p128 = por %p126, %p127
    %p129 = scmp.ne.s32.totalorder %s121, %s124
    %p130 = scmp.eq.s32.totalorder %s19, 0
    %p131 = por %p129, %p130
    %p132 = scmp.ne.s32.totalorder %s121, %s124
    %p133 = scmp.eq.s32.totalorder %s24, 1
    %p134 = por %p132, %p133
    %p135 = scmp.ne.s32.totalorder %s124, %s125
    %p136 = scmp.eq.s32.totalorder %s24, 0
    %p137 = por %p135, %p136
    %p138 = scmp.ne.s32.totalorder %s124, %s125
    %p139 = scmp.eq.s32.totalorder %s25, 1
    %p140 = por %p138, %p139
    %p142 = scmp.ne.s32.totalorder %s125, %s141
    %p143 = scmp.eq.s32.totalorder %s25, 0
    %p144 = por %p142, %p143
    %s145 = ssub.s32 %s26, %s38
    %p146 = scmp.eq.s32.totalorder %s145, 0
    %s148 = sadd.s32 %s147, 1
    %s149 = scalar_select %p146, %s147, %s148
    %p152 = pneg %p146
    %p153 = scmp.eq.s32.totalorder %s19, 1
    %p154 = por %p152, %p153
    %p155 = scmp.ne.s32.totalorder %s147, %s150
    %p156 = scmp.eq.s32.totalorder %s19, 0
    %p157 = por %p155, %p156
    %p158 = scmp.ne.s32.totalorder %s147, %s150
    %p159 = scmp.eq.s32.totalorder %s24, 1
    %p160 = por %p158, %p159
    %p161 = scmp.ne.s32.totalorder %s150, %s151
    %p162 = scmp.eq.s32.totalorder %s24, 0
    %p163 = por %p161, %p162
    %p164 = scmp.ne.s32.totalorder %s150, %s151
    %p165 = scmp.eq.s32.totalorder %s25, 1
    %p166 = por %p164, %p165
    %p168 = scmp.ne.s32.totalorder %s151, %s167
    %p169 = scmp.eq.s32.totalorder %s25, 0
    %p170 = por %p168, %p169
    %s172 = sadd.s32 %s171, 1
    %p175 = scmp.eq.s32.totalorder %s19, 1
    %p176 = scmp.ne.s32.totalorder %s171, %s173
    %p177 = scmp.eq.s32.totalorder %s19, 0
    %p178 = por %p176, %p177
    %p179 = scmp.ne.s32.totalorder %s171, %s173
    %p180 = scmp.eq.s32.totalorder %s24, 1
    %p181 = por %p179, %p180
    %p182 = scmp.ne.s32.totalorder %s173, %s174
    %p183 = scmp.eq.s32.totalorder %s24, 0
    %p184 = por %p182, %p183
    %p185 = scmp.ne.s32.totalorder %s173, %s174
    %p186 = scmp.eq.s32.totalorder %s25, 1
    %p187 = por %p185, %p186
    %p189 = scmp.ne.s32.totalorder %s174, %s188
    %p190 = scmp.eq.s32.totalorder %s25, 0
    %p191 = por %p189, %p190
    %s193 = sadd.s32 %s192, 1
    %p196 = scmp.eq.s32.totalorder %s19, 1
    %p197 = scmp.ne.s32.totalorder %s192, %s194
    %p198 = scmp.eq.s32.totalorder %s19, 0
    %p199 = por %p197, %p198
    %p200 = scmp.ne.s32.totalorder %s192, %s194
    %p201 = scmp.eq.s32.totalorder %s24, 1
    %p202 = por %p200, %p201
    %p203 = scmp.ne.s32.totalorder %s194, %s195
    %p204 = scmp.eq.s32.totalorder %s24, 0
    %p205 = por %p203, %p204
    %p206 = scmp.ne.s32.totalorder %s194, %s195
    %p207 = scmp.eq.s32.totalorder %s25, 1
    %p208 = por %p206, %p207
    %p210 = scmp.ne.s32.totalorder %s195, %s209
    %p211 = scmp.eq.s32.totalorder %s25, 0
    %p212 = por %p210, %p211
    %s214 = sadd.s32 %s213, 1
    %p217 = scmp.eq.s32.totalorder %s19, 1
    %p218 = scmp.ne.s32.totalorder %s213, %s215
    %p219 = scmp.eq.s32.totalorder %s19, 0
    %p220 = por %p218, %p219
    %p221 = scmp.ne.s32.totalorder %s213, %s215
    %p222 = scmp.eq.s32.totalorder %s24, 1
    %p223 = por %p221, %p222
    %p224 = scmp.ne.s32.totalorder %s215, %s216
    %p225 = scmp.eq.s32.totalorder %s24, 0
    %p226 = por %p224, %p225
    %p227 = scmp.ne.s32.totalorder %s215, %s216
    %p228 = scmp.eq.s32.totalorder %s25, 1
    %p229 = por %p227, %p228
    %p231 = scmp.ne.s32.totalorder %s216, %s230
    %p232 = scmp.eq.s32.totalorder %s25, 0
    %p233 = por %p231, %p232
    %s235 = sadd.s32 %s234, 1
    %p238 = scmp.eq.s32.totalorder %s19, 1
    %p239 = scmp.ne.s32.totalorder %s234, %s236
    %p240 = scmp.eq.s32.totalorder %s19, 0
    %p241 = por %p239, %p240
    %p242 = scmp.ne.s32.totalorder %s234, %s236
    %p243 = scmp.eq.s32.totalorder %s24, 1
    %p244 = por %p242, %p243
    %p245 = scmp.ne.s32.totalorder %s236, %s237
    %p246 = scmp.eq.s32.totalorder %s24, 0
    %p247 = por %p245, %p246
    %p248 = scmp.ne.s32.totalorder %s236, %s237
    %p249 = scmp.eq.s32.totalorder %s25, 1
    %p250 = por %p248, %p249
    %p252 = scmp.ne.s32.totalorder %s237, %s251
    %p253 = scmp.eq.s32.totalorder %s25, 0
    %p254 = por %p252, %p253
    %s256 = sadd.s32 %s255, 1
    %p259 = scmp.eq.s32.totalorder %s19, 1
    %p260 = scmp.ne.s32.totalorder %s255, %s257
    %p261 = scmp.eq.s32.totalorder %s19, 0
    %p262 = por %p260, %p261
    %p263 = scmp.ne.s32.totalorder %s255, %s257
    %p264 = scmp.eq.s32.totalorder %s24, 1
    %p265 = por %p263, %p264
    %p266 = scmp.ne.s32.totalorder %s257, %s258
    %p267 = scmp.eq.s32.totalorder %s24, 0
    %p268 = por %p266, %p267
    %p269 = scmp.ne.s32.totalorder %s257, %s258
    %p270 = scmp.eq.s32.totalorder %s25, 1
    %p271 = por %p269, %p270
    %p273 = scmp.ne.s32.totalorder %s258, %s272
    %p274 = scmp.eq.s32.totalorder %s25, 0
    %p275 = por %p273, %p274
    %s277 = sadd.s32 %s276, 1
    %p280 = scmp.eq.s32.totalorder %s19, 1
    %p281 = scmp.ne.s32.totalorder %s276, %s278
    %p282 = scmp.eq.s32.totalorder %s19, 0
    %p283 = por %p281, %p282
    %p284 = scmp.ne.s32.totalorder %s276, %s278
    %p285 = scmp.eq.s32.totalorder %s24, 1
    %p286 = por %p284, %p285
    %p287 = scmp.ne.s32.totalorder %s278, %s279
    %p288 = scmp.eq.s32.totalorder %s24, 0
    %p289 = por %p287, %p288
    %p290 = scmp.ne.s32.totalorder %s278, %s279
    %p291 = scmp.eq.s32.totalorder %s25, 1
    %p292 = por %p290, %p291
    %p294 = scmp.ne.s32.totalorder %s279, %s293
    %p295 = scmp.eq.s32.totalorder %s25, 0
    %p296 = por %p294, %p295
    %s297 = ssub.s32 %s27, %s34
    %s298 = ssub.s32 %s26, %s38
    %s299 = sor.u32 %s297, %s298
    %p300 = scmp.eq.s32.totalorder %s299, 0
    %s302 = sadd.s32 %s301, 1
    %s303 = scalar_select %p300, %s301, %s302
    %p306 = pneg %p300
    %p307 = scmp.eq.s32.totalorder %s19, 1
    %p308 = por %p306, %p307
    %p309 = scmp.ne.s32.totalorder %s301, %s304
    %p310 = scmp.eq.s32.totalorder %s19, 0
    %p311 = por %p309, %p310
    %p312 = scmp.ne.s32.totalorder %s301, %s304
    %p313 = scmp.eq.s32.totalorder %s24, 1
    %p314 = por %p312, %p313
    %p315 = scmp.ne.s32.totalorder %s304, %s305
    %p316 = scmp.eq.s32.totalorder %s24, 0
    %p317 = por %p315, %p316
    %p318 = scmp.ne.s32.totalorder %s304, %s305
    %p319 = scmp.eq.s32.totalorder %s25, 1
    %p320 = por %p318, %p319
    %p322 = scmp.ne.s32.totalorder %s305, %s321
    %p323 = scmp.eq.s32.totalorder %s25, 0
    %p324 = por %p322, %p323
    %s325 = ssub.s32 %s26, %s38
    %p326 = scmp.eq.s32.totalorder %s325, 0
    %s328 = sadd.s32 %s327, 1
    %s329 = scalar_select %p326, %s327, %s328
    %p332 = pneg %p326
    %p333 = scmp.eq.s32.totalorder %s19, 1
    %p334 = por %p332, %p333
    %p335 = scmp.ne.s32.totalorder %s327, %s330
    %p336 = scmp.eq.s32.totalorder %s19, 0
    %p337 = por %p335, %p336
    %p338 = scmp.ne.s32.totalorder %s327, %s330
    %p339 = scmp.eq.s32.totalorder %s24, 1
    %p340 = por %p338, %p339
    %p341 = scmp.ne.s32.totalorder %s330, %s331
    %p342 = scmp.eq.s32.totalorder %s24, 0
    %p343 = por %p341, %p342
    %p344 = scmp.ne.s32.totalorder %s330, %s331
    %p345 = scmp.eq.s32.totalorder %s25, 1
    %p346 = por %p344, %p345
    %p348 = scmp.ne.s32.totalorder %s331, %s347
    %p349 = scmp.eq.s32.totalorder %s25, 0
    %p350 = por %p348, %p349
    %p351 = scmp.le.s32.totalorder 1, %s19
    %p352 = scmp.lt.s32.totalorder %s19, 3
    %p353 = pnand %p351, %p352
    %p354 = pneg %p353
    // Predicated region
    $region9: #{attention_rnn_forward.1} parent=5 // pred_check
      _
    $region10: #{attention_rnn_forward.1} parent=5 // pred_check_branch
      %356 = sbr.rel (%p353) target = $region12
    $region11: #{attention_rnn_forward.1} parent=5 // pred_region
      %s357 = ssub.s32 %s19, 1
      // Predicated region
      $region13: #{attention_rnn_forward.1} parent=11 // pred_check
        %p358 = pneg %p85
      $region14: #{attention_rnn_forward.1} parent=11 // pred_check_branch
        %360 = sbr.rel (%p358) target = $region16
      $region15: #{attention_rnn_forward.1} parent=11 // pred_region
        %s361 = smul.u32 8, %s28
        %p362 = scmp.lt.s32.totalorder %s361, 7
        %s363 = scalar_select %p362, %s361, 7
        %s364 = smul.addr %s363, 2
        %s365 = smul.addr %s364, 8
        %s366 = scalar_lea.vmem %s1, %s365
        %s367 = smul.u32 8, %s28
      $region16: #{attention_rnn_forward.1} parent=11 // pred_fallthru
        _
      // Predicated region
      $region17: #{attention_rnn_forward.1} parent=11 // pred_check
        %p368 = pneg %p111
      $region18: #{attention_rnn_forward.1} parent=11 // pred_check_branch
        %370 = sbr.rel (%p368) target = $region20
      $region19: #{attention_rnn_forward.1} parent=11 // pred_region
        %s371 = smul.u32 8, %s28
        %p372 = scmp.lt.s32.totalorder %s371, 7
        %s373 = scalar_select %p372, %s371, 7
        %s374 = smul.addr %s373, 2
        %s375 = smul.addr %s374, 8
        %s376 = scalar_lea.vmem %s2, %s375
        %s377 = smul.u32 8, %s28
      $region20: #{attention_rnn_forward.1} parent=11 // pred_fallthru
        _
      // Predicated region
      $region21: #{attention_rnn_forward.1} parent=11 // pred_check
        %p378 = pneg %p137
      $region22: #{attention_rnn_forward.1} parent=11 // pred_check_branch
        %380 = sbr.rel (%p378) target = $region24
      $region23: #{attention_rnn_forward.1} parent=11 // pred_region
        %p381 = scmp.lt.s32.totalorder %s28, 0
        %s382 = scalar_select %p381, %s28, 0
        %s383 = smul.addr %s382, 8
        %s384 = scalar_lea.vmem %s3, %s383
      $region24: #{attention_rnn_forward.1} parent=11 // pred_fallthru
        _
      // Predicated region
      $region25: #{attention_rnn_forward.1} parent=11 // pred_check
        %p385 = pneg %p163
      $region26: #{attention_rnn_forward.1} parent=11 // pred_check_branch
        %387 = sbr.rel (%p385) target = $region28
      $region27: #{attention_rnn_forward.1} parent=11 // pred_region
        %p388 = scmp.lt.s32.totalorder %s28, 0
        %s389 = scalar_select %p388, %s28, 0
        %s390 = smul.addr %s389, 8
        %s391 = scalar_lea.vmem %s4, %s390
      $region28: #{attention_rnn_forward.1} parent=11 // pred_fallthru
        _
      // Predicated region
      $region29: #{attention_rnn_forward.1} parent=11 // pred_check
        %p392 = pneg %p184
      $region30: #{attention_rnn_forward.1} parent=11 // pred_check_branch
        %394 = sbr.rel (%p392) target = $region32
      $region31: #{attention_rnn_forward.1} parent=11 // pred_region
        _
      $region32: #{attention_rnn_forward.1} parent=11 // pred_fallthru
        _
      // Predicated region
      $region33: #{attention_rnn_forward.1} parent=11 // pred_check
        %p395 = pneg %p205
      $region34: #{attention_rnn_forward.1} parent=11 // pred_check_branch
        %397 = sbr.rel (%p395) target = $region36
      $region35: #{attention_rnn_forward.1} parent=11 // pred_region
        _
      $region36: #{attention_rnn_forward.1} parent=11 // pred_fallthru
        _
      // Predicated region
      $region37: #{attention_rnn_forward.1} parent=11 // pred_check
        %p398 = pneg %p226
      $region38: #{attention_rnn_forward.1} parent=11 // pred_check_branch
        %400 = sbr.rel (%p398) target = $region40
      $region39: #{attention_rnn_forward.1} parent=11 // pred_region
        _
      $region40: #{attention_rnn_forward.1} parent=11 // pred_fallthru
        _
      // Predicated region
      $region41: #{attention_rnn_forward.1} parent=11 // pred_check
        %p401 = pneg %p247
      $region42: #{attention_rnn_forward.1} parent=11 // pred_check_branch
        %403 = sbr.rel (%p401) target = $region44
      $region43: #{attention_rnn_forward.1} parent=11 // pred_region
        _
      $region44: #{attention_rnn_forward.1} parent=11 // pred_fallthru
        _
      // Predicated region
      $region45: #{attention_rnn_forward.1} parent=11 // pred_check
        %p404 = pneg %p268
      $region46: #{attention_rnn_forward.1} parent=11 // pred_check_branch
        %406 = sbr.rel (%p404) target = $region48
      $region47: #{attention_rnn_forward.1} parent=11 // pred_region
        _
      $region48: #{attention_rnn_forward.1} parent=11 // pred_fallthru
        _
      // Predicated region
      $region49: #{attention_rnn_forward.1} parent=11 // pred_check
        %p407 = pneg %p289
      $region50: #{attention_rnn_forward.1} parent=11 // pred_check_branch
        %409 = sbr.rel (%p407) target = $region52
      $region51: #{attention_rnn_forward.1} parent=11 // pred_region
        _
      $region52: #{attention_rnn_forward.1} parent=11 // pred_fallthru
        _
    $region12: #{attention_rnn_forward.1} parent=5 // pred_fallthru
      _
    %p410 = scmp.lt.s32.totalorder %s19, 2
    // Predicated region
    $region53: #{attention_rnn_forward.1} parent=5 // pred_check
      %p411 = pneg %p410
    $region54: #{attention_rnn_forward.1} parent=5 // pred_check_branch
      %413 = sbr.rel (%p411) target = $region56
    $region55: #{attention_rnn_forward.1} parent=5 // pred_region
      // Predicated region
      $region57: #{attention_rnn_forward.1} parent=55 // pred_check
        %p414 = pneg %p53
      $region58: #{attention_rnn_forward.1} parent=55 // pred_check_branch
        %416 = sbr.rel (%p414) target = $region60
      $region59: #{attention_rnn_forward.1} parent=55 // pred_region
        %s417 = smul.u32 4, %s27
        %p418 = scmp.lt.s32.totalorder %s417, 7
        %s419 = scalar_select %p418, %s417, 7
        %p420 = scmp.lt.s32.totalorder %s26, 0
        %s421 = scalar_select %p420, %s26, 0
        %s422 = sadd.s32 %s421, %s419
        %s423 = smul.addr %s422, 8
        %s424 = scalar_lea.vmem %s0, %s423
        %s425 = smul.u32 4, %s27
      $region60: #{attention_rnn_forward.1} parent=55 // pred_fallthru
        _
    $region56: #{attention_rnn_forward.1} parent=5 // pred_fallthru
      _
    %p426 = scmp.le.s32.totalorder 1, %s19
    %p427 = scmp.lt.s32.totalorder %s19, 3
    %p428 = pnand %p426, %p427
    %p429 = pneg %p428
    // Predicated region
    $region61: #{attention_rnn_forward.1} parent=5 // pred_check
      _
    $region62: #{attention_rnn_forward.1} parent=5 // pred_check_branch
      %431 = sbr.rel (%p428) target = $region64
    $region63: #{attention_rnn_forward.1} parent=5 // pred_region
      %s432 = ssub.s32 %s19, 1
      %s433 = smul.u32 4, %s29
      %p434 = scmp.lt.s32.totalorder %s433, 7
      %s435 = scalar_select %p434, %s433, 7
      %p436 = scmp.lt.s32.totalorder %s28, 0
      %s437 = scalar_select %p436, %s28, 0
      %s438 = sadd.s32 %s437, %s435
      %s439 = smul.addr %s438, 8
      %s440 = scalar_lea.vmem %s0, %s439
      %p441 = pneg %p59
      %p442 = pneg %p56
      %s443 = smul.u32 8, %s28
      %p444 = scmp.lt.s32.totalorder %s443, 7
      %s445 = scalar_select %p444, %s443, 7
      %s446 = smul.addr %s445, 2
      %s447 = smul.addr %s446, 8
      %s448 = scalar_lea.vmem %s1, %s447
      %p449 = pneg %p85
      %p450 = pneg %p82
      %s451 = smul.u32 8, %s28
      %p452 = scmp.lt.s32.totalorder %s451, 7
      %s453 = scalar_select %p452, %s451, 7
      %s454 = smul.addr %s453, 2
      %s455 = smul.addr %s454, 8
      %s456 = scalar_lea.vmem %s2, %s455
      %p457 = pneg %p111
      %p458 = pneg %p108
      %p459 = scmp.lt.s32.totalorder %s28, 0
      %s460 = scalar_select %p459, %s28, 0
      %s461 = smul.addr %s460, 8
      %s462 = scalar_lea.vmem %s3, %s461
      %p463 = pneg %p137
      %p464 = pneg %p134
      %p465 = scmp.lt.s32.totalorder %s28, 0
      %s466 = scalar_select %p465, %s28, 0
      %s467 = smul.addr %s466, 8
      %s468 = scalar_lea.vmem %s4, %s467
      %p469 = pneg %p163
      %p470 = pneg %p160
      %p471 = pneg %p184
      %p472 = pneg %p181
      %p473 = pneg %p205
      %p474 = pneg %p202
      %p475 = pneg %p226
      %p476 = pneg %p223
      %p477 = pneg %p247
      %p478 = pneg %p244
      %p479 = pneg %p268
      %p480 = pneg %p265
      %p481 = pneg %p289
      %p482 = pneg %p286
      %p483 = pneg %p317
      %p484 = pneg %p314
      %s485 = smul.u32 4, %s29
      %p486 = scmp.lt.s32.totalorder %s485, 7
      %s487 = scalar_select %p486, %s485, 7
      %p488 = scmp.lt.s32.totalorder %s28, 0
      %s489 = scalar_select %p488, %s28, 0
      %s490 = sadd.s32 %s489, %s487
      %s491 = smul.addr %s490, 8
      %s492 = scalar_lea.vmem %s11, %s491
      %p493 = pneg %p343
      %p494 = pneg %p340
      %p495 = scmp.lt.s32.totalorder %s28, 0
      %s496 = scalar_select %p495, %s28, 0
      %s497 = smul.addr %s496, 8
      %s498 = scalar_lea.vmem %s12, %s497
      %s499 = smul.u32 4, %s29
      %p500 = scmp.lt.s32.totalorder %s499, 7
      %s501 = scalar_select %p500, %s499, 7
      %p502 = scmp.lt.s32.totalorder %s28, 0
      %s503 = scalar_select %p502, %s28, 0
      %s504 = sadd.s32 %s503, %s501
      %s505 = smul.addr %s504, 8
      %s506 = scalar_lea.vmem %s0, %s505
      %s507 = smul.u32 4, %s29
      %s508 = smul.u32 8, %s28
      %p509 = scmp.lt.s32.totalorder %s508, 7
      %s510 = scalar_select %p509, %s508, 7
      %s511 = smul.addr %s510, 2
      %s512 = smul.addr %s511, 8
      %s513 = scalar_lea.vmem %s1, %s512
      %s514 = smul.u32 8, %s28
      %s515 = smul.u32 8, %s28
      %p516 = scmp.lt.s32.totalorder %s515, 7
      %s517 = scalar_select %p516, %s515, 7
      %s518 = smul.addr %s517, 2
      %s519 = smul.addr %s518, 8
      %s520 = scalar_lea.vmem %s2, %s519
      %s521 = smul.u32 8, %s28
      %p522 = scmp.lt.s32.totalorder %s28, 0
      %s523 = scalar_select %p522, %s28, 0
      %s524 = smul.addr %s523, 8
      %s525 = scalar_lea.vmem %s3, %s524
      %p526 = scmp.lt.s32.totalorder %s28, 0
      %s527 = scalar_select %p526, %s28, 0
      %s528 = smul.addr %s527, 8
      %s529 = scalar_lea.vmem %s4, %s528
      %s530 = smul.u32 4, %s29
      %p531 = scmp.lt.s32.totalorder %s530, 7
      %s532 = scalar_select %p531, %s530, 7
      %p533 = scmp.lt.s32.totalorder %s28, 0
      %s534 = scalar_select %p533, %s28, 0
      %s535 = sadd.s32 %s534, %s532
      %s536 = smul.addr %s535, 8
      %s537 = scalar_lea.vmem %s11, %s536
      %s538 = smul.u32 4, %s29
      %p539 = scmp.lt.s32.totalorder %s28, 0
      %s540 = scalar_select %p539, %s28, 0
      %s541 = smul.addr %s540, 8
      %s542 = scalar_lea.vmem %s12, %s541
      %p543 = scmp.eq.s32.totalorder %s29, 0
      // Predicated region
      $region65: #{attention_rnn_forward.1} parent=63 // pred_check
        %p544 = pneg %p543
      $region66: #{attention_rnn_forward.1} parent=63 // pred_check_branch
        %546 = sbr.rel (%p544) target = $region68
      $region67: #{attention_rnn_forward.1} parent=63 // pred_region
        %v547 = vld [vmem:[%s529] sm:$0xff]
        %548 = vst [vmem:[#allocation2] sm:$0xff] %v547
      $region68: #{attention_rnn_forward.1} parent=63 // pred_fallthru
        _
      %v549 = vld [vmem:[%s506] sm:$0xff]
      %v550 = vld [vmem:[%s506 + $0x8] sm:$0xff]
      %v551 = vld [vmem:[%s506 + $0x10] sm:$0xff]
      %v552 = vld [vmem:[%s506 + $0x18] sm:$0xff]
      %v553 = vld [vmem:[%s5] sm:$0xff]
      %v554 = vld [vmem:[%s5 + $0x8] sm:$0xff]
      %v555 = vld [vmem:[%s5 + $0x10] sm:$0xff]
      %v556 = vld [vmem:[%s5 + $0x18] sm:$0xff]
      %v557 = vld [vmem:[%s5 + $0x20] sm:$0xff]
      %v558 = vld [vmem:[%s5 + $0x28] sm:$0xff]
      %v559 = vld [vmem:[%s5 + $0x30] sm:$0xff]
      %v560 = vld [vmem:[%s5 + $0x38] sm:$0xff]
      %v561 = vld [vmem:[%s5 + $0x40] sm:$0xff]
      %v562 = vld [vmem:[%s5 + $0x48] sm:$0xff]
      %v563 = vld [vmem:[%s5 + $0x50] sm:$0xff]
      %v564 = vld [vmem:[%s5 + $0x58] sm:$0xff]
      %v565 = vld [vmem:[%s7] sm:$0x7]
      %v567 = vlaneseq
      %v568 = vshrl.u32 %v567, 7
      %v569 = vsub.s32 0, %v568
      %v570 = vrot.slane %v565, %v569
      %v571 = vlaneseq
      %v572 = vshrl.u32 %v571, 7
      %v573 = vsub.s32 1, %v572
      %v574 = vrot.slane %v565, %v573
      %v575 = vlaneseq
      %v576 = vshrl.u32 %v575, 7
      %v577 = vsub.s32 2, %v576
      %v578 = vrot.slane %v565, %v577
      %vm582 = vcmask 261120
      %v584 = vsel %vm582, %v549, 0
      %v587 = vsel %vm582, %v550, 0
      %v590 = vsel %vm582, %v551, 0
      %v593 = vsel %vm582, %v552, 0
      %595 = vmatprep.subr.mxu0 0.0
      %596 = vmatpush1.msra.mxu0 0.0
      %597 = vmatprep.subr.mxu0 0.0
      %598 = vmatpush1.msra.mxu0 0.0
      %599 = vmatprep.subr.mxu0 0.0
      %600 = vmatpush1.msra.mxu0 0.0
      %601 = vmatprep.subr.mxu0 0.0
      %602 = vmatpush1.msra.mxu0 0.0
      %603 = vmatprep.subr.mxu0 0.0
      %604 = vmatpush1.msra.mxu0 0.0
      %605 = vmatprep.subr.mxu0 0.0
      %606 = vmatpush1.msra.mxu0 0.0
      %607 = vmatprep.subr.mxu0 0.0
      %608 = vmatpush1.msra.mxu0 0.0
      %609 = vmatprep.subr.mxu0 0.0
      %610 = vmatpush1.msra.mxu0 0.0
      %611 = vmatprep.subr.mxu0 0.0
      %612 = vmatpush1.msra.mxu0 0.0
      %613 = vmatprep.subr.mxu0 0.0
      %614 = vmatpush1.msra.mxu0 0.0
      %615 = vmatprep.subr.mxu0 0.0
      %616 = vmatpush1.msra.mxu0 0.0
      %617 = vmatprep.subr.mxu0 0.0
      %618 = vmatpush1.msra.mxu0 0.0
      %619 = vmatprep.subr.mxu0 %v563
      %620 = vmatpush1.msra.mxu0 %v562
      %621 = vmatprep.subr.mxu0 %v560
      %622 = vmatpush1.msra.mxu0 %v559
      %623 = vmatprep.subr.mxu0 %v557
      %624 = vmatpush1.msra.mxu0 %v556
      %625 = vmatprep.subr.mxu0 %v554
      %626 = vmatpush1.msra.mxu0 %v553
      %627 = vmatprep.subr.mxu0 0.0
      %628 = vmatpush2.msra.mxu0 0.0
      %629 = vmatprep.subr.mxu0 0.0
      %630 = vmatpush2.msra.mxu0 0.0
      %631 = vmatprep.subr.mxu0 0.0
      %632 = vmatpush2.msra.mxu0 0.0
      %633 = vmatprep.subr.mxu0 0.0
      %634 = vmatpush2.msra.mxu0 0.0
      %635 = vmatprep.subr.mxu0 0.0
      %636 = vmatpush2.msra.mxu0 0.0
      %637 = vmatprep.subr.mxu0 0.0
      %638 = vmatpush2.msra.mxu0 0.0
      %639 = vmatprep.subr.mxu0 0.0
      %640 = vmatpush2.msra.mxu0 0.0
      %641 = vmatprep.subr.mxu0 0.0
      %642 = vmatpush2.msra.mxu0 0.0
      %643 = vmatprep.subr.mxu0 0.0
      %644 = vmatpush2.msra.mxu0 0.0
      %645 = vmatprep.subr.mxu0 0.0
      %646 = vmatpush2.msra.mxu0 0.0
      %647 = vmatprep.subr.mxu0 0.0
      %648 = vmatpush2.msra.mxu0 0.0
      %649 = vmatprep.subr.mxu0 0.0
      %650 = vmatpush2.msra.mxu0 0.0
      %651 = vmatprep.subr.mxu0 0.0
      %652 = vmatpush2.msra.mxu0 0.0
      %653 = vmatprep.subr.mxu0 0.0
      %654 = vmatpush2.msra.mxu0 0.0
      %655 = vmatprep.subr.mxu0 0.0
      %656 = vmatpush2.msra.mxu0 0.0
      %657 = vmatprep.subr.mxu0 0.0
      %658 = vmatpush2.msra.mxu0 0.0
      %659 = vmatprep.mubr.f32.mxu0 0.0
      %660 = vmatmul.mubr.f32.gmra.mxu0 %v584
      %v661 = vpop.f32.mrf.mxu0
      %v662 = vadd.f32 %v570, %v661
      %v663 = vpop.f32.mrf.mxu0
      %v664 = vadd.f32 %v574, %v663
      %665 = vmatprep.mubr.f32.mxu0 0.0
      %666 = vmatmul.mubr.f32.gmra.mxu0 %v587
      %v667 = vpop.f32.mrf.mxu0
      %v668 = vadd.f32 %v570, %v667
      %v669 = vpop.f32.mrf.mxu0
      %v670 = vadd.f32 %v574, %v669
      %671 = vmatprep.mubr.f32.mxu0 0.0
      %672 = vmatmul.mubr.f32.gmra.mxu0 %v590
      %v673 = vpop.f32.mrf.mxu0
      %v674 = vadd.f32 %v570, %v673
      %v675 = vpop.f32.mrf.mxu0
      %v676 = vadd.f32 %v574, %v675
      %677 = vmatprep.mubr.f32.mxu0 0.0
      %678 = vmatmul.mubr.f32.gmra.mxu0 %v593
      %v679 = vpop.f32.mrf.mxu0
      %v680 = vadd.f32 %v570, %v679
      %v681 = vpop.f32.mrf.mxu0
      %v682 = vadd.f32 %v574, %v681
      %683 = vdwg.mxu0
      %684 = vmatprep.subr.mxu0 0.0
      %685 = vmatpush1.msra.mxu0 0.0
      %686 = vmatprep.subr.mxu0 0.0
      %687 = vmatpush1.msra.mxu0 0.0
      %688 = vmatprep.subr.mxu0 0.0
      %689 = vmatpush1.msra.mxu0 0.0
      %690 = vmatprep.subr.mxu0 0.0
      %691 = vmatpush1.msra.mxu0 0.0
      %692 = vmatprep.subr.mxu0 0.0
      %693 = vmatpush1.msra.mxu0 0.0
      %694 = vmatprep.subr.mxu0 0.0
      %695 = vmatpush1.msra.mxu0 0.0
      %696 = vmatprep.subr.mxu0 0.0
      %697 = vmatpush1.msra.mxu0 0.0
      %698 = vmatprep.subr.mxu0 0.0
      %699 = vmatpush1.msra.mxu0 0.0
      %700 = vmatprep.subr.mxu0 0.0
      %701 = vmatpush1.msra.mxu0 0.0
      %702 = vmatprep.subr.mxu0 0.0
      %703 = vmatpush1.msra.mxu0 0.0
      %704 = vmatprep.subr.mxu0 0.0
      %705 = vmatpush1.msra.mxu0 0.0
      %706 = vmatprep.subr.mxu0 0.0
      %707 = vmatpush1.msra.mxu0 0.0
      %708 = vmatprep.subr.mxu0 0.0
      %709 = vmatpush1.msra.mxu0 %v564
      %710 = vmatprep.subr.mxu0 0.0
      %711 = vmatpush1.msra.mxu0 %v561
      %712 = vmatprep.subr.mxu0 0.0
      %713 = vmatpush1.msra.mxu0 %v558
      %714 = vmatprep.subr.mxu0 0.0
      %715 = vmatpush1.msra.mxu0 %v555
      %716 = vmatprep.subr.mxu0 0.0
      %717 = vmatpush2.msra.mxu0 0.0
      %718 = vmatprep.subr.mxu0 0.0
      %719 = vmatpush2.msra.mxu0 0.0
      %720 = vmatprep.subr.mxu0 0.0
      %721 = vmatpush2.msra.mxu0 0.0
      %722 = vmatprep.subr.mxu0 0.0
      %723 = vmatpush2.msra.mxu0 0.0
      %724 = vmatprep.subr.mxu0 0.0
      %725 = vmatpush2.msra.mxu0 0.0
      %726 = vmatprep.subr.mxu0 0.0
      %727 = vmatpush2.msra.mxu0 0.0
      %728 = vmatprep.subr.mxu0 0.0
      %729 = vmatpush2.msra.mxu0 0.0
      %730 = vmatprep.subr.mxu0 0.0
      %731 = vmatpush2.msra.mxu0 0.0
      %732 = vmatprep.subr.mxu0 0.0
      %733 = vmatpush2.msra.mxu0 0.0
      %734 = vmatprep.subr.mxu0 0.0
      %735 = vmatpush2.msra.mxu0 0.0
      %736 = vmatprep.subr.mxu0 0.0
      %737 = vmatpush2.msra.mxu0 0.0
      %738 = vmatprep.subr.mxu0 0.0
      %739 = vmatpush2.msra.mxu0 0.0
      %740 = vmatprep.subr.mxu0 0.0
      %741 = vmatpush2.msra.mxu0 0.0
      %742 = vmatprep.subr.mxu0 0.0
      %743 = vmatpush2.msra.mxu0 0.0
      %744 = vmatprep.subr.mxu0 0.0
      %745 = vmatpush2.msra.mxu0 0.0
      %746 = vmatprep.subr.mxu0 0.0
      %747 = vmatpush2.msra.mxu0 0.0
      %748 = vmatprep.mubr.f32.mxu0 0.0
      %749 = vmatmul.mubr.f32.gmra.mxu0 %v584
      %v750 = vpop.f32.mrf.mxu0
      %v751 = vadd.f32 %v578, %v750
      %v752 = vpop.f32.mrf.mxu0
      %753 = vmatprep.mubr.f32.mxu0 0.0
      %754 = vmatmul.mubr.f32.gmra.mxu0 %v587
      %v755 = vpop.f32.mrf.mxu0
      %v756 = vadd.f32 %v578, %v755
      %v757 = vpop.f32.mrf.mxu0
      %758 = vmatprep.mubr.f32.mxu0 0.0
      %759 = vmatmul.mubr.f32.gmra.mxu0 %v590
      %v760 = vpop.f32.mrf.mxu0
      %v761 = vadd.f32 %v578, %v760
      %v762 = vpop.f32.mrf.mxu0
      %763 = vmatprep.mubr.f32.mxu0 0.0
      %764 = vmatmul.mubr.f32.gmra.mxu0 %v593
      %v765 = vpop.f32.mrf.mxu0
      %v766 = vadd.f32 %v578, %v765
      %v767 = vpop.f32.mrf.mxu0
      %768 = vdwg.mxu0
      %v769 = vld [vmem:[%s6] sm:$0xff]
      %v770 = vld [vmem:[%s6 + $0x8] sm:$0xff]
      %v771 = vld [vmem:[%s6 + $0x10] sm:$0xff]
      %v772 = vld [vmem:[%s6 + $0x18] sm:$0xff]
      %v773 = vld [vmem:[%s6 + $0x20] sm:$0xff]
      %v774 = vld [vmem:[%s6 + $0x28] sm:$0xff]
      %v775 = vld [vmem:[%s6 + $0x30] sm:$0xff]
      %v776 = vld [vmem:[%s6 + $0x38] sm:$0xff]
      %v777 = vld [vmem:[%s6 + $0x40] sm:$0xff]
      %v778 = vld [vmem:[%s6 + $0x48] sm:$0xff]
      %v779 = vld [vmem:[%s6 + $0x50] sm:$0xff]
      %v780 = vld [vmem:[%s6 + $0x58] sm:$0xff]
      %v781 = vld [vmem:[%s6 + $0x60] sm:$0xff]
      %v782 = vld [vmem:[%s6 + $0x68] sm:$0xff]
      %v783 = vld [vmem:[%s6 + $0x70] sm:$0xff]
      %v784 = vld [vmem:[%s6 + $0x78] sm:$0xff]
      %v785 = vld [vmem:[%s6 + $0x80] sm:$0xff]
      %v786 = vld [vmem:[%s6 + $0x88] sm:$0xff]
      %v787 = vld [vmem:[%s6 + $0x90] sm:$0xff]
      %v788 = vld [vmem:[%s6 + $0x98] sm:$0xff]
      %v789 = vld [vmem:[%s6 + $0xa0] sm:$0xff]
      %v790 = vld [vmem:[%s6 + $0xa8] sm:$0xff]
      %v791 = vld [vmem:[%s6 + $0xb0] sm:$0xff]
      %v792 = vld [vmem:[%s6 + $0xb8] sm:$0xff]
      %v793 = vld [vmem:[%s6 + $0xc0] sm:$0xff]
      %v794 = vld [vmem:[%s6 + $0xc8] sm:$0xff]
      %v795 = vld [vmem:[%s6 + $0xd0] sm:$0xff]
      %v796 = vld [vmem:[%s6 + $0xd8] sm:$0xff]
      %v797 = vld [vmem:[%s6 + $0xe0] sm:$0xff]
      %v798 = vld [vmem:[%s6 + $0xe8] sm:$0xff]
      %v799 = vld [vmem:[%s6 + $0xf0] sm:$0xff]
      %v800 = vld [vmem:[%s6 + $0xf8] sm:$0xff]
      %v801 = vld [vmem:[%s6 + $0x100] sm:$0xff]
      %v802 = vld [vmem:[%s6 + $0x108] sm:$0xff]
      %v803 = vld [vmem:[%s6 + $0x110] sm:$0xff]
      %v804 = vld [vmem:[%s6 + $0x118] sm:$0xff]
      %v805 = vld [vmem:[%s6 + $0x120] sm:$0xff]
      %v806 = vld [vmem:[%s6 + $0x128] sm:$0xff]
      %v807 = vld [vmem:[%s6 + $0x130] sm:$0xff]
      %v808 = vld [vmem:[%s6 + $0x138] sm:$0xff]
      %v809 = vld [vmem:[%s6 + $0x140] sm:$0xff]
      %v810 = vld [vmem:[%s6 + $0x148] sm:$0xff]
      %v811 = vld [vmem:[%s6 + $0x150] sm:$0xff]
      %v812 = vld [vmem:[%s6 + $0x158] sm:$0xff]
      %v813 = vld [vmem:[%s6 + $0x160] sm:$0xff]
      %v814 = vld [vmem:[%s6 + $0x168] sm:$0xff]
      %v815 = vld [vmem:[%s6 + $0x170] sm:$0xff]
      %v816 = vld [vmem:[%s6 + $0x178] sm:$0xff]
      %v817 = vld [vmem:[%s8] sm:$0x1]
      %v819 = vlaneseq
      %v820 = vshrl.u32 %v819, 7
      %v821 = vsub.s32 0, %v820
      %v822 = vrot.slane %v817, %v821
      %v824 = vld [vmem:[#allocation2] sm:$0xff]
      %825 = vmatprep.subr.mxu0 %v815
      %826 = vmatpush1.msra.mxu0 %v814
      %827 = vmatprep.subr.mxu0 %v812
      %828 = vmatpush1.msra.mxu0 %v811
      %829 = vmatprep.subr.mxu0 %v809
      %830 = vmatpush1.msra.mxu0 %v808
      %831 = vmatprep.subr.mxu0 %v806
      %832 = vmatpush1.msra.mxu0 %v805
      %833 = vmatprep.subr.mxu0 %v803
      %834 = vmatpush1.msra.mxu0 %v802
      %835 = vmatprep.subr.mxu0 %v800
      %836 = vmatpush1.msra.mxu0 %v799
      %837 = vmatprep.subr.mxu0 %v797
      %838 = vmatpush1.msra.mxu0 %v796
      %839 = vmatprep.subr.mxu0 %v794
      %840 = vmatpush1.msra.mxu0 %v793
      %841 = vmatprep.subr.mxu0 %v791
      %842 = vmatpush1.msra.mxu0 %v790
      %843 = vmatprep.subr.mxu0 %v788
      %844 = vmatpush1.msra.mxu0 %v787
      %845 = vmatprep.subr.mxu0 %v785
      %846 = vmatpush1.msra.mxu0 %v784
      %847 = vmatprep.subr.mxu0 %v782
      %848 = vmatpush1.msra.mxu0 %v781
      %849 = vmatprep.subr.mxu0 %v779
      %850 = vmatpush1.msra.mxu0 %v778
      %851 = vmatprep.subr.mxu0 %v776
      %852 = vmatpush1.msra.mxu0 %v775
      %853 = vmatprep.subr.mxu0 %v773
      %854 = vmatpush1.msra.mxu0 %v772
      %855 = vmatprep.subr.mxu0 %v770
      %856 = vmatpush1.msra.mxu0 %v769
      %857 = vmatprep.subr.mxu0 0.0
      %858 = vmatpush2.msra.mxu0 0.0
      %859 = vmatprep.subr.mxu0 0.0
      %860 = vmatpush2.msra.mxu0 0.0
      %861 = vmatprep.subr.mxu0 0.0
      %862 = vmatpush2.msra.mxu0 0.0
      %863 = vmatprep.subr.mxu0 0.0
      %864 = vmatpush2.msra.mxu0 0.0
      %865 = vmatprep.subr.mxu0 0.0
      %866 = vmatpush2.msra.mxu0 0.0
      %867 = vmatprep.subr.mxu0 0.0
      %868 = vmatpush2.msra.mxu0 0.0
      %869 = vmatprep.subr.mxu0 0.0
      %870 = vmatpush2.msra.mxu0 0.0
      %871 = vmatprep.subr.mxu0 0.0
      %872 = vmatpush2.msra.mxu0 0.0
      %873 = vmatprep.subr.mxu0 0.0
      %874 = vmatpush2.msra.mxu0 0.0
      %875 = vmatprep.subr.mxu0 0.0
      %876 = vmatpush2.msra.mxu0 0.0
      %877 = vmatprep.subr.mxu0 0.0
      %878 = vmatpush2.msra.mxu0 0.0
      %879 = vmatprep.subr.mxu0 0.0
      %880 = vmatpush2.msra.mxu0 0.0
      %881 = vmatprep.subr.mxu0 0.0
      %882 = vmatpush2.msra.mxu0 0.0
      %883 = vmatprep.subr.mxu0 0.0
      %884 = vmatpush2.msra.mxu0 0.0
      %885 = vmatprep.subr.mxu0 0.0
      %886 = vmatpush2.msra.mxu0 0.0
      %887 = vmatprep.subr.mxu0 0.0
      %888 = vmatpush2.msra.mxu0 0.0
      %889 = vmatprep.mubr.f32.mxu0 0.0
      %890 = vmatmul.mubr.f32.gmra.mxu0 %v824
      %v891 = vpop.f32.mrf.mxu0
      %v892 = vadd.f32 0.0, %v891
      %v893 = vpop.f32.mrf.mxu0
      %v894 = vadd.f32 0.0, %v893
      %895 = vdwg.mxu0
      %896 = vmatprep.subr.mxu0 0.0
      %897 = vmatpush1.msra.mxu0 %v816
      %898 = vmatprep.subr.mxu0 0.0
      %899 = vmatpush1.msra.mxu0 %v813
      %900 = vmatprep.subr.mxu0 0.0
      %901 = vmatpush1.msra.mxu0 %v810
      %902 = vmatprep.subr.mxu0 0.0
      %903 = vmatpush1.msra.mxu0 %v807
      %904 = vmatprep.subr.mxu0 0.0
      %905 = vmatpush1.msra.mxu0 %v804
      %906 = vmatprep.subr.mxu0 0.0
      %907 = vmatpush1.msra.mxu0 %v801
      %908 = vmatprep.subr.mxu0 0.0
      %909 = vmatpush1.msra.mxu0 %v798
      %910 = vmatprep.subr.mxu0 0.0
      %911 = vmatpush1.msra.mxu0 %v795
      %912 = vmatprep.subr.mxu0 0.0
      %913 = vmatpush1.msra.mxu0 %v792
      %914 = vmatprep.subr.mxu0 0.0
      %915 = vmatpush1.msra.mxu0 %v789
      %916 = vmatprep.subr.mxu0 0.0
      %917 = vmatpush1.msra.mxu0 %v786
      %918 = vmatprep.subr.mxu0 0.0
      %919 = vmatpush1.msra.mxu0 %v783
      %920 = vmatprep.subr.mxu0 0.0
      %921 = vmatpush1.msra.mxu0 %v780
      %922 = vmatprep.subr.mxu0 0.0
      %923 = vmatpush1.msra.mxu0 %v777
      %924 = vmatprep.subr.mxu0 0.0
      %925 = vmatpush1.msra.mxu0 %v774
      %926 = vmatprep.subr.mxu0 0.0
      %927 = vmatpush1.msra.mxu0 %v771
      %928 = vmatprep.subr.mxu0 0.0
      %929 = vmatpush2.msra.mxu0 0.0
      %930 = vmatprep.subr.mxu0 0.0
      %931 = vmatpush2.msra.mxu0 0.0
      %932 = vmatprep.subr.mxu0 0.0
      %933 = vmatpush2.msra.mxu0 0.0
      %934 = vmatprep.subr.mxu0 0.0
      %935 = vmatpush2.msra.mxu0 0.0
      %936 = vmatprep.subr.mxu0 0.0
      %937 = vmatpush2.msra.mxu0 0.0
      %938 = vmatprep.subr.mxu0 0.0
      %939 = vmatpush2.msra.mxu0 0.0
      %940 = vmatprep.subr.mxu0 0.0
      %941 = vmatpush2.msra.mxu0 0.0
      %942 = vmatprep.subr.mxu0 0.0
      %943 = vmatpush2.msra.mxu0 0.0
      %944 = vmatprep.subr.mxu0 0.0
      %945 = vmatpush2.msra.mxu0 0.0
      %946 = vmatprep.subr.mxu0 0.0
      %947 = vmatpush2.msra.mxu0 0.0
      %948 = vmatprep.subr.mxu0 0.0
      %949 = vmatpush2.msra.mxu0 0.0
      %950 = vmatprep.subr.mxu0 0.0
      %951 = vmatpush2.msra.mxu0 0.0
      %952 = vmatprep.subr.mxu0 0.0
      %953 = vmatpush2.msra.mxu0 0.0
      %954 = vmatprep.subr.mxu0 0.0
      %955 = vmatpush2.msra.mxu0 0.0
      %956 = vmatprep.subr.mxu0 0.0
      %957 = vmatpush2.msra.mxu0 0.0
      %958 = vmatprep.subr.mxu0 0.0
      %959 = vmatpush2.msra.mxu0 0.0
      %960 = vmatprep.mubr.f32.mxu0 0.0
      %961 = vmatmul.mubr.f32.gmra.mxu0 %v824
      %v962 = vpop.f32.mrf.mxu0
      %v963 = vadd.f32 0.0, %v962
      %v964 = vpop.f32.mrf.mxu0
      %965 = vdwg.mxu0
      %v966 = vadd.f32 %v662, %v892
      %v967 = vxor.u32 %v966, 2147483648
      %v968 = vmul.f32 %v967, 1.442695
      %v969 = vpow.pop %v968
      %v970 = vadd.f32 %v969, 1.0
      %v971 = vrcp.pop %v970
      %v972 = vmul.f32 1.0, %v971
      %v973 = vadd.f32 %v664, %v894
      %v974 = vxor.u32 %v973, 2147483648
      %v975 = vmul.f32 %v974, 1.442695
      %v976 = vpow.pop %v975
      %v977 = vadd.f32 %v976, 1.0
      %v978 = vrcp.pop %v977
      %v979 = vmul.f32 1.0, %v978
      %v980 = vadd.f32 %v963, %v822
      %v981 = vmul.f32 %v972, %v980
      %v982 = vadd.f32 %v751, %v981
      %v983 = vtanh.pop %v982
      %v984 = vsub.f32 1.0, %v979
      %v985 = vmul.f32 %v984, %v983
      %v986 = vmul.f32 %v979, %v824
      %v987 = vadd.f32 %v985, %v986
      %988 = vst [vmem:[#allocation3] sm:$0xff] %v987
      %989 = vmatprep.subr.mxu0 %v815
      %990 = vmatpush1.msra.mxu0 %v814
      %991 = vmatprep.subr.mxu0 %v812
      %992 = vmatpush1.msra.mxu0 %v811
      %993 = vmatprep.subr.mxu0 %v809
      %994 = vmatpush1.msra.mxu0 %v808
      %995 = vmatprep.subr.mxu0 %v806
      %996 = vmatpush1.msra.mxu0 %v805
      %997 = vmatprep.subr.mxu0 %v803
      %998 = vmatpush1.msra.mxu0 %v802
      %999 = vmatprep.subr.mxu0 %v800
      %1000 = vmatpush1.msra.mxu0 %v799
      %1001 = vmatprep.subr.mxu0 %v797
      %1002 = vmatpush1.msra.mxu0 %v796
      %1003 = vmatprep.subr.mxu0 %v794
      %1004 = vmatpush1.msra.mxu0 %v793
      %1005 = vmatprep.subr.mxu0 %v791
      %1006 = vmatpush1.msra.mxu0 %v790
      %1007 = vmatprep.subr.mxu0 %v788
      %1008 = vmatpush1.msra.mxu0 %v787
      %1009 = vmatprep.subr.mxu0 %v785
      %1010 = vmatpush1.msra.mxu0 %v784
      %1011 = vmatprep.subr.mxu0 %v782
      %1012 = vmatpush1.msra.mxu0 %v781
      %1013 = vmatprep.subr.mxu0 %v779
      %1014 = vmatpush1.msra.mxu0 %v778
      %1015 = vmatprep.subr.mxu0 %v776
      %1016 = vmatpush1.msra.mxu0 %v775
      %1017 = vmatprep.subr.mxu0 %v773
      %1018 = vmatpush1.msra.mxu0 %v772
      %1019 = vmatprep.subr.mxu0 %v770
      %1020 = vmatpush1.msra.mxu0 %v769
      %1021 = vmatprep.subr.mxu0 0.0
      %1022 = vmatpush2.msra.mxu0 0.0
      %1023 = vmatprep.subr.mxu0 0.0
      %1024 = vmatpush2.msra.mxu0 0.0
      %1025 = vmatprep.subr.mxu0 0.0
      %1026 = vmatpush2.msra.mxu0 0.0
      %1027 = vmatprep.subr.mxu0 0.0
      %1028 = vmatpush2.msra.mxu0 0.0
      %1029 = vmatprep.subr.mxu0 0.0
      %1030 = vmatpush2.msra.mxu0 0.0
      %1031 = vmatprep.subr.mxu0 0.0
      %1032 = vmatpush2.msra.mxu0 0.0
      %1033 = vmatprep.subr.mxu0 0.0
      %1034 = vmatpush2.msra.mxu0 0.0
      %1035 = vmatprep.subr.mxu0 0.0
      %1036 = vmatpush2.msra.mxu0 0.0
      %1037 = vmatprep.subr.mxu0 0.0
      %1038 = vmatpush2.msra.mxu0 0.0
      %1039 = vmatprep.subr.mxu0 0.0
      %1040 = vmatpush2.msra.mxu0 0.0
      %1041 = vmatprep.subr.mxu0 0.0
      %1042 = vmatpush2.msra.mxu0 0.0
      %1043 = vmatprep.subr.mxu0 0.0
      %1044 = vmatpush2.msra.mxu0 0.0
      %1045 = vmatprep.subr.mxu0 0.0
      %1046 = vmatpush2.msra.mxu0 0.0
      %1047 = vmatprep.subr.mxu0 0.0
      %1048 = vmatpush2.msra.mxu0 0.0
      %1049 = vmatprep.subr.mxu0 0.0
      %1050 = vmatpush2.msra.mxu0 0.0
      %1051 = vmatprep.subr.mxu0 0.0
      %1052 = vmatpush2.msra.mxu0 0.0
      %1053 = vmatprep.mubr.f32.mxu0 0.0
      %1054 = vmatmul.mubr.f32.gmra.mxu0 %v987
      %v1055 = vpop.f32.mrf.mxu0
      %v1056 = vadd.f32 0.0, %v1055
      %v1057 = vpop.f32.mrf.mxu0
      %v1058 = vadd.f32 0.0, %v1057
      %1059 = vdwg.mxu0
      %1060 = vmatprep.subr.mxu0 0.0
      %1061 = vmatpush1.msra.mxu0 %v816
      %1062 = vmatprep.subr.mxu0 0.0
      %1063 = vmatpush1.msra.mxu0 %v813
      %1064 = vmatprep.subr.mxu0 0.0
      %1065 = vmatpush1.msra.mxu0 %v810
      %1066 = vmatprep.subr.mxu0 0.0
      %1067 = vmatpush1.msra.mxu0 %v807
      %1068 = vmatprep.subr.mxu0 0.0
      %1069 = vmatpush1.msra.mxu0 %v804
      %1070 = vmatprep.subr.mxu0 0.0
      %1071 = vmatpush1.msra.mxu0 %v801
      %1072 = vmatprep.subr.mxu0 0.0
      %1073 = vmatpush1.msra.mxu0 %v798
      %1074 = vmatprep.subr.mxu0 0.0
      %1075 = vmatpush1.msra.mxu0 %v795
      %1076 = vmatprep.subr.mxu0 0.0
      %1077 = vmatpush1.msra.mxu0 %v792
      %1078 = vmatprep.subr.mxu0 0.0
      %1079 = vmatpush1.msra.mxu0 %v789
      %1080 = vmatprep.subr.mxu0 0.0
      %1081 = vmatpush1.msra.mxu0 %v786
      %1082 = vmatprep.subr.mxu0 0.0
      %1083 = vmatpush1.msra.mxu0 %v783
      %1084 = vmatprep.subr.mxu0 0.0
      %1085 = vmatpush1.msra.mxu0 %v780
      %1086 = vmatprep.subr.mxu0 0.0
      %1087 = vmatpush1.msra.mxu0 %v777
      %1088 = vmatprep.subr.mxu0 0.0
      %1089 = vmatpush1.msra.mxu0 %v774
      %1090 = vmatprep.subr.mxu0 0.0
      %1091 = vmatpush1.msra.mxu0 %v771
      %1092 = vmatprep.subr.mxu0 0.0
      %1093 = vmatpush2.msra.mxu0 0.0
      %1094 = vmatprep.subr.mxu0 0.0
      %1095 = vmatpush2.msra.mxu0 0.0
      %1096 = vmatprep.subr.mxu0 0.0
      %1097 = vmatpush2.msra.mxu0 0.0
      %1098 = vmatprep.subr.mxu0 0.0
      %1099 = vmatpush2.msra.mxu0 0.0
      %1100 = vmatprep.subr.mxu0 0.0
      %1101 = vmatpush2.msra.mxu0 0.0
      %1102 = vmatprep.subr.mxu0 0.0
      %1103 = vmatpush2.msra.mxu0 0.0
      %1104 = vmatprep.subr.mxu0 0.0
      %1105 = vmatpush2.msra.mxu0 0.0
      %1106 = vmatprep.subr.mxu0 0.0
      %1107 = vmatpush2.msra.mxu0 0.0
      %1108 = vmatprep.subr.mxu0 0.0
      %1109 = vmatpush2.msra.mxu0 0.0
      %1110 = vmatprep.subr.mxu0 0.0
      %1111 = vmatpush2.msra.mxu0 0.0
      %1112 = vmatprep.subr.mxu0 0.0
      %1113 = vmatpush2.msra.mxu0 0.0
      %1114 = vmatprep.subr.mxu0 0.0
      %1115 = vmatpush2.msra.mxu0 0.0
      %1116 = vmatprep.subr.mxu0 0.0
      %1117 = vmatpush2.msra.mxu0 0.0
      %1118 = vmatprep.subr.mxu0 0.0
      %1119 = vmatpush2.msra.mxu0 0.0
      %1120 = vmatprep.subr.mxu0 0.0
      %1121 = vmatpush2.msra.mxu0 0.0
      %1122 = vmatprep.subr.mxu0 0.0
      %1123 = vmatpush2.msra.mxu0 0.0
      %1124 = vmatprep.mubr.f32.mxu0 0.0
      %1125 = vmatmul.mubr.f32.gmra.mxu0 %v987
      %v1126 = vpop.f32.mrf.mxu0
      %v1127 = vadd.f32 0.0, %v1126
      %v1128 = vpop.f32.mrf.mxu0
      %1129 = vdwg.mxu0
      %v1130 = vadd.f32 %v668, %v1056
      %v1131 = vxor.u32 %v1130, 2147483648
      %v1132 = vmul.f32 %v1131, 1.442695
      %v1133 = vpow.pop %v1132
      %v1134 = vadd.f32 %v1133, 1.0
      %v1135 = vrcp.pop %v1134
      %v1136 = vmul.f32 1.0, %v1135
      %v1137 = vadd.f32 %v670, %v1058
      %v1138 = vxor.u32 %v1137, 2147483648
      %v1139 = vmul.f32 %v1138, 1.442695
      %v1140 = vpow.pop %v1139
      %v1141 = vadd.f32 %v1140, 1.0
      %v1142 = vrcp.pop %v1141
      %v1143 = vmul.f32 1.0, %v1142
      %v1144 = vadd.f32 %v1127, %v822
      %v1145 = vmul.f32 %v1136, %v1144
      %v1146 = vadd.f32 %v756, %v1145
      %v1147 = vtanh.pop %v1146
      %v1148 = vsub.f32 1.0, %v1143
      %v1149 = vmul.f32 %v1148, %v1147
      %v1150 = vmul.f32 %v1143, %v987
      %v1151 = vadd.f32 %v1149, %v1150
      %s1152 = scalar_lea.vmem [#allocation3], 8
      %1153 = vst [vmem:[%s1152] sm:$0xff] %v1151
      %1154 = vmatprep.subr.mxu0 %v815
      %1155 = vmatpush1.msra.mxu0 %v814
      %1156 = vmatprep.subr.mxu0 %v812
      %1157 = vmatpush1.msra.mxu0 %v811
      %1158 = vmatprep.subr.mxu0 %v809
      %1159 = vmatpush1.msra.mxu0 %v808
      %1160 = vmatprep.subr.mxu0 %v806
      %1161 = vmatpush1.msra.mxu0 %v805
      %1162 = vmatprep.subr.mxu0 %v803
      %1163 = vmatpush1.msra.mxu0 %v802
      %1164 = vmatprep.subr.mxu0 %v800
      %1165 = vmatpush1.msra.mxu0 %v799
      %1166 = vmatprep.subr.mxu0 %v797
      %1167 = vmatpush1.msra.mxu0 %v796
      %1168 = vmatprep.subr.mxu0 %v794
      %1169 = vmatpush1.msra.mxu0 %v793
      %1170 = vmatprep.subr.mxu0 %v791
      %1171 = vmatpush1.msra.mxu0 %v790
      %1172 = vmatprep.subr.mxu0 %v788
      %1173 = vmatpush1.msra.mxu0 %v787
      %1174 = vmatprep.subr.mxu0 %v785
      %1175 = vmatpush1.msra.mxu0 %v784
      %1176 = vmatprep.subr.mxu0 %v782
      %1177 = vmatpush1.msra.mxu0 %v781
      %1178 = vmatprep.subr.mxu0 %v779
      %1179 = vmatpush1.msra.mxu0 %v778
      %1180 = vmatprep.subr.mxu0 %v776
      %1181 = vmatpush1.msra.mxu0 %v775
      %1182 = vmatprep.subr.mxu0 %v773
      %1183 = vmatpush1.msra.mxu0 %v772
      %1184 = vmatprep.subr.mxu0 %v770
      %1185 = vmatpush1.msra.mxu0 %v769
      %1186 = vmatprep.subr.mxu0 0.0
      %1187 = vmatpush2.msra.mxu0 0.0
      %1188 = vmatprep.subr.mxu0 0.0
      %1189 = vmatpush2.msra.mxu0 0.0
      %1190 = vmatprep.subr.mxu0 0.0
      %1191 = vmatpush2.msra.mxu0 0.0
      %1192 = vmatprep.subr.mxu0 0.0
      %1193 = vmatpush2.msra.mxu0 0.0
      %1194 = vmatprep.subr.mxu0 0.0
      %1195 = vmatpush2.msra.mxu0 0.0
      %1196 = vmatprep.subr.mxu0 0.0
      %1197 = vmatpush2.msra.mxu0 0.0
      %1198 = vmatprep.subr.mxu0 0.0
      %1199 = vmatpush2.msra.mxu0 0.0
      %1200 = vmatprep.subr.mxu0 0.0
      %1201 = vmatpush2.msra.mxu0 0.0
      %1202 = vmatprep.subr.mxu0 0.0
      %1203 = vmatpush2.msra.mxu0 0.0
      %1204 = vmatprep.subr.mxu0 0.0
      %1205 = vmatpush2.msra.mxu0 0.0
      %1206 = vmatprep.subr.mxu0 0.0
      %1207 = vmatpush2.msra.mxu0 0.0
      %1208 = vmatprep.subr.mxu0 0.0
      %1209 = vmatpush2.msra.mxu0 0.0
      %1210 = vmatprep.subr.mxu0 0.0
      %1211 = vmatpush2.msra.mxu0 0.0
      %1212 = vmatprep.subr.mxu0 0.0
      %1213 = vmatpush2.msra.mxu0 0.0
      %1214 = vmatprep.subr.mxu0 0.0
      %1215 = vmatpush2.msra.mxu0 0.0
      %1216 = vmatprep.subr.mxu0 0.0
      %1217 = vmatpush2.msra.mxu0 0.0
      %1218 = vmatprep.mubr.f32.mxu0 0.0
      %1219 = vmatmul.mubr.f32.gmra.mxu0 %v1151
      %v1220 = vpop.f32.mrf.mxu0
      %v1221 = vadd.f32 0.0, %v1220
      %v1222 = vpop.f32.mrf.mxu0
      %v1223 = vadd.f32 0.0, %v1222
      %1224 = vdwg.mxu0
      %1225 = vmatprep.subr.mxu0 0.0
      %1226 = vmatpush1.msra.mxu0 %v816
      %1227 = vmatprep.subr.mxu0 0.0
      %1228 = vmatpush1.msra.mxu0 %v813
      %1229 = vmatprep.subr.mxu0 0.0
      %1230 = vmatpush1.msra.mxu0 %v810
      %1231 = vmatprep.subr.mxu0 0.0
      %1232 = vmatpush1.msra.mxu0 %v807
      %1233 = vmatprep.subr.mxu0 0.0
      %1234 = vmatpush1.msra.mxu0 %v804
      %1235 = vmatprep.subr.mxu0 0.0
      %1236 = vmatpush1.msra.mxu0 %v801
      %1237 = vmatprep.subr.mxu0 0.0
      %1238 = vmatpush1.msra.mxu0 %v798
      %1239 = vmatprep.subr.mxu0 0.0
      %1240 = vmatpush1.msra.mxu0 %v795
      %1241 = vmatprep.subr.mxu0 0.0
      %1242 = vmatpush1.msra.mxu0 %v792
      %1243 = vmatprep.subr.mxu0 0.0
      %1244 = vmatpush1.msra.mxu0 %v789
      %1245 = vmatprep.subr.mxu0 0.0
      %1246 = vmatpush1.msra.mxu0 %v786
      %1247 = vmatprep.subr.mxu0 0.0
      %1248 = vmatpush1.msra.mxu0 %v783
      %1249 = vmatprep.subr.mxu0 0.0
      %1250 = vmatpush1.msra.mxu0 %v780
      %1251 = vmatprep.subr.mxu0 0.0
      %1252 = vmatpush1.msra.mxu0 %v777
      %1253 = vmatprep.subr.mxu0 0.0
      %1254 = vmatpush1.msra.mxu0 %v774
      %1255 = vmatprep.subr.mxu0 0.0
      %1256 = vmatpush1.msra.mxu0 %v771
      %1257 = vmatprep.subr.mxu0 0.0
      %1258 = vmatpush2.msra.mxu0 0.0
      %1259 = vmatprep.subr.mxu0 0.0
      %1260 = vmatpush2.msra.mxu0 0.0
      %1261 = vmatprep.subr.mxu0 0.0
      %1262 = vmatpush2.msra.mxu0 0.0
      %1263 = vmatprep.subr.mxu0 0.0
      %1264 = vmatpush2.msra.mxu0 0.0
      %1265 = vmatprep.subr.mxu0 0.0
      %1266 = vmatpush2.msra.mxu0 0.0
      %1267 = vmatprep.subr.mxu0 0.0
      %1268 = vmatpush2.msra.mxu0 0.0
      %1269 = vmatprep.subr.mxu0 0.0
      %1270 = vmatpush2.msra.mxu0 0.0
      %1271 = vmatprep.subr.mxu0 0.0
      %1272 = vmatpush2.msra.mxu0 0.0
      %1273 = vmatprep.subr.mxu0 0.0
      %1274 = vmatpush2.msra.mxu0 0.0
      %1275 = vmatprep.subr.mxu0 0.0
      %1276 = vmatpush2.msra.mxu0 0.0
      %1277 = vmatprep.subr.mxu0 0.0
      %1278 = vmatpush2.msra.mxu0 0.0
      %1279 = vmatprep.subr.mxu0 0.0
      %1280 = vmatpush2.msra.mxu0 0.0
      %1281 = vmatprep.subr.mxu0 0.0
      %1282 = vmatpush2.msra.mxu0 0.0
      %1283 = vmatprep.subr.mxu0 0.0
      %1284 = vmatpush2.msra.mxu0 0.0
      %1285 = vmatprep.subr.mxu0 0.0
      %1286 = vmatpush2.msra.mxu0 0.0
      %1287 = vmatprep.subr.mxu0 0.0
      %1288 = vmatpush2.msra.mxu0 0.0
      %1289 = vmatprep.mubr.f32.mxu0 0.0
      %1290 = vmatmul.mubr.f32.gmra.mxu0 %v1151
      %v1291 = vpop.f32.mrf.mxu0
      %v1292 = vadd.f32 0.0, %v1291
      %v1293 = vpop.f32.mrf.mxu0
      %1294 = vdwg.mxu0
      %v1295 = vadd.f32 %v674, %v1221
      %v1296 = vxor.u32 %v1295, 2147483648
      %v1297 = vmul.f32 %v1296, 1.442695
      %v1298 = vpow.pop %v1297
      %v1299 = vadd.f32 %v1298, 1.0
      %v1300 = vrcp.pop %v1299
      %v1301 = vmul.f32 1.0, %v1300
      %v1302 = vadd.f32 %v676, %v1223
      %v1303 = vxor.u32 %v1302, 2147483648
      %v1304 = vmul.f32 %v1303, 1.442695
      %v1305 = vpow.pop %v1304
      %v1306 = vadd.f32 %v1305, 1.0
      %v1307 = vrcp.pop %v1306
      %v1308 = vmul.f32 1.0, %v1307
      %v1309 = vadd.f32 %v1292, %v822
      %v1310 = vmul.f32 %v1301, %v1309
      %v1311 = vadd.f32 %v761, %v1310
      %v1312 = vtanh.pop %v1311
      %v1313 = vsub.f32 1.0, %v1308
      %v1314 = vmul.f32 %v1313, %v1312
      %v1315 = vmul.f32 %v1308, %v1151
      %v1316 = vadd.f32 %v1314, %v1315
      %s1317 = scalar_lea.vmem [#allocation3], 16
      %1318 = vst [vmem:[%s1317] sm:$0xff] %v1316
      %1319 = vmatprep.subr.mxu0 %v815
      %1320 = vmatpush1.msra.mxu0 %v814
      %1321 = vmatprep.subr.mxu0 %v812
      %1322 = vmatpush1.msra.mxu0 %v811
      %1323 = vmatprep.subr.mxu0 %v809
      %1324 = vmatpush1.msra.mxu0 %v808
      %1325 = vmatprep.subr.mxu0 %v806
      %1326 = vmatpush1.msra.mxu0 %v805
      %1327 = vmatprep.subr.mxu0 %v803
      %1328 = vmatpush1.msra.mxu0 %v802
      %1329 = vmatprep.subr.mxu0 %v800
      %1330 = vmatpush1.msra.mxu0 %v799
      %1331 = vmatprep.subr.mxu0 %v797
      %1332 = vmatpush1.msra.mxu0 %v796
      %1333 = vmatprep.subr.mxu0 %v794
      %1334 = vmatpush1.msra.mxu0 %v793
      %1335 = vmatprep.subr.mxu0 %v791
      %1336 = vmatpush1.msra.mxu0 %v790
      %1337 = vmatprep.subr.mxu0 %v788
      %1338 = vmatpush1.msra.mxu0 %v787
      %1339 = vmatprep.subr.mxu0 %v785
      %1340 = vmatpush1.msra.mxu0 %v784
      %1341 = vmatprep.subr.mxu0 %v782
      %1342 = vmatpush1.msra.mxu0 %v781
      %1343 = vmatprep.subr.mxu0 %v779
      %1344 = vmatpush1.msra.mxu0 %v778
      %1345 = vmatprep.subr.mxu0 %v776
      %1346 = vmatpush1.msra.mxu0 %v775
      %1347 = vmatprep.subr.mxu0 %v773
      %1348 = vmatpush1.msra.mxu0 %v772
      %1349 = vmatprep.subr.mxu0 %v770
      %1350 = vmatpush1.msra.mxu0 %v769
      %1351 = vmatprep.subr.mxu0 0.0
      %1352 = vmatpush2.msra.mxu0 0.0
      %1353 = vmatprep.subr.mxu0 0.0
      %1354 = vmatpush2.msra.mxu0 0.0
      %1355 = vmatprep.subr.mxu0 0.0
      %1356 = vmatpush2.msra.mxu0 0.0
      %1357 = vmatprep.subr.mxu0 0.0
      %1358 = vmatpush2.msra.mxu0 0.0
      %1359 = vmatprep.subr.mxu0 0.0
      %1360 = vmatpush2.msra.mxu0 0.0
      %1361 = vmatprep.subr.mxu0 0.0
      %1362 = vmatpush2.msra.mxu0 0.0
      %1363 = vmatprep.subr.mxu0 0.0
      %1364 = vmatpush2.msra.mxu0 0.0
      %1365 = vmatprep.subr.mxu0 0.0
      %1366 = vmatpush2.msra.mxu0 0.0
      %1367 = vmatprep.subr.mxu0 0.0
      %1368 = vmatpush2.msra.mxu0 0.0
      %1369 = vmatprep.subr.mxu0 0.0
      %1370 = vmatpush2.msra.mxu0 0.0
      %1371 = vmatprep.subr.mxu0 0.0
      %1372 = vmatpush2.msra.mxu0 0.0
      %1373 = vmatprep.subr.mxu0 0.0
      %1374 = vmatpush2.msra.mxu0 0.0
      %1375 = vmatprep.subr.mxu0 0.0
      %1376 = vmatpush2.msra.mxu0 0.0
      %1377 = vmatprep.subr.mxu0 0.0
      %1378 = vmatpush2.msra.mxu0 0.0
      %1379 = vmatprep.subr.mxu0 0.0
      %1380 = vmatpush2.msra.mxu0 0.0
      %1381 = vmatprep.subr.mxu0 0.0
      %1382 = vmatpush2.msra.mxu0 0.0
      %1383 = vmatprep.mubr.f32.mxu0 0.0
      %1384 = vmatmul.mubr.f32.gmra.mxu0 %v1316
      %v1385 = vpop.f32.mrf.mxu0
      %v1386 = vadd.f32 0.0, %v1385
      %v1387 = vpop.f32.mrf.mxu0
      %v1388 = vadd.f32 0.0, %v1387
      %1389 = vdwg.mxu0
      %1390 = vmatprep.subr.mxu0 0.0
      %1391 = vmatpush1.msra.mxu0 %v816
      %1392 = vmatprep.subr.mxu0 0.0
      %1393 = vmatpush1.msra.mxu0 %v813
      %1394 = vmatprep.subr.mxu0 0.0
      %1395 = vmatpush1.msra.mxu0 %v810
      %1396 = vmatprep.subr.mxu0 0.0
      %1397 = vmatpush1.msra.mxu0 %v807
      %1398 = vmatprep.subr.mxu0 0.0
      %1399 = vmatpush1.msra.mxu0 %v804
      %1400 = vmatprep.subr.mxu0 0.0
      %1401 = vmatpush1.msra.mxu0 %v801
      %1402 = vmatprep.subr.mxu0 0.0
      %1403 = vmatpush1.msra.mxu0 %v798
      %1404 = vmatprep.subr.mxu0 0.0
      %1405 = vmatpush1.msra.mxu0 %v795
      %1406 = vmatprep.subr.mxu0 0.0
      %1407 = vmatpush1.msra.mxu0 %v792
      %1408 = vmatprep.subr.mxu0 0.0
      %1409 = vmatpush1.msra.mxu0 %v789
      %1410 = vmatprep.subr.mxu0 0.0
      %1411 = vmatpush1.msra.mxu0 %v786
      %1412 = vmatprep.subr.mxu0 0.0
      %1413 = vmatpush1.msra.mxu0 %v783
      %1414 = vmatprep.subr.mxu0 0.0
      %1415 = vmatpush1.msra.mxu0 %v780
      %1416 = vmatprep.subr.mxu0 0.0
      %1417 = vmatpush1.msra.mxu0 %v777
      %1418 = vmatprep.subr.mxu0 0.0
      %1419 = vmatpush1.msra.mxu0 %v774
      %1420 = vmatprep.subr.mxu0 0.0
      %1421 = vmatpush1.msra.mxu0 %v771
      %1422 = vmatprep.subr.mxu0 0.0
      %1423 = vmatpush2.msra.mxu0 0.0
      %1424 = vmatprep.subr.mxu0 0.0
      %1425 = vmatpush2.msra.mxu0 0.0
      %1426 = vmatprep.subr.mxu0 0.0
      %1427 = vmatpush2.msra.mxu0 0.0
      %1428 = vmatprep.subr.mxu0 0.0
      %1429 = vmatpush2.msra.mxu0 0.0
      %1430 = vmatprep.subr.mxu0 0.0
      %1431 = vmatpush2.msra.mxu0 0.0
      %1432 = vmatprep.subr.mxu0 0.0
      %1433 = vmatpush2.msra.mxu0 0.0
      %1434 = vmatprep.subr.mxu0 0.0
      %1435 = vmatpush2.msra.mxu0 0.0
      %1436 = vmatprep.subr.mxu0 0.0
      %1437 = vmatpush2.msra.mxu0 0.0
      %1438 = vmatprep.subr.mxu0 0.0
      %1439 = vmatpush2.msra.mxu0 0.0
      %1440 = vmatprep.subr.mxu0 0.0
      %1441 = vmatpush2.msra.mxu0 0.0
      %1442 = vmatprep.subr.mxu0 0.0
      %1443 = vmatpush2.msra.mxu0 0.0
      %1444 = vmatprep.subr.mxu0 0.0
      %1445 = vmatpush2.msra.mxu0 0.0
      %1446 = vmatprep.subr.mxu0 0.0
      %1447 = vmatpush2.msra.mxu0 0.0
      %1448 = vmatprep.subr.mxu0 0.0
      %1449 = vmatpush2.msra.mxu0 0.0
      %1450 = vmatprep.subr.mxu0 0.0
      %1451 = vmatpush2.msra.mxu0 0.0
      %1452 = vmatprep.subr.mxu0 0.0
      %1453 = vmatpush2.msra.mxu0 0.0
      %1454 = vmatprep.mubr.f32.mxu0 0.0
      %1455 = vmatmul.mubr.f32.gmra.mxu0 %v1316
      %v1456 = vpop.f32.mrf.mxu0
      %v1457 = vadd.f32 0.0, %v1456
      %v1458 = vpop.f32.mrf.mxu0
      %1459 = vdwg.mxu0
      %v1460 = vadd.f32 %v680, %v1386
      %v1461 = vxor.u32 %v1460, 2147483648
      %v1462 = vmul.f32 %v1461, 1.442695
      %v1463 = vpow.pop %v1462
      %v1464 = vadd.f32 %v1463, 1.0
      %v1465 = vrcp.pop %v1464
      %v1466 = vmul.f32 1.0, %v1465
      %v1467 = vadd.f32 %v682, %v1388
      %v1468 = vxor.u32 %v1467, 2147483648
      %v1469 = vmul.f32 %v1468, 1.442695
      %v1470 = vpow.pop %v1469
      %v1471 = vadd.f32 %v1470, 1.0
      %v1472 = vrcp.pop %v1471
      %v1473 = vmul.f32 1.0, %v1472
      %v1474 = vadd.f32 %v1457, %v822
      %v1475 = vmul.f32 %v1466, %v1474
      %v1476 = vadd.f32 %v766, %v1475
      %v1477 = vtanh.pop %v1476
      %v1478 = vsub.f32 1.0, %v1473
      %v1479 = vmul.f32 %v1478, %v1477
      %v1480 = vmul.f32 %v1473, %v1316
      %v1481 = vadd.f32 %v1479, %v1480
      %s1482 = scalar_lea.vmem [#allocation3], 24
      %1483 = vst [vmem:[%s1482] sm:$0xff] %v1481
      %1484 = vst [vmem:[#allocation2] sm:$0xff] %v1481
      %v1485 = vld [vmem:[#allocation3] sm:$0xff]
      %v1486 = vld [vmem:[#allocation3 + $0x8] sm:$0xff]
      %v1487 = vld [vmem:[#allocation3 + $0x10] sm:$0xff]
      %v1488 = vld [vmem:[#allocation3 + $0x18] sm:$0xff]
      %v1489 = vld [vmem:[%s9] sm:$0xff]
      %v1490 = vld [vmem:[%s9 + $0x8] sm:$0xff]
      %v1491 = vld [vmem:[%s9 + $0x10] sm:$0xff]
      %v1492 = vld [vmem:[%s9 + $0x18] sm:$0xff]
      %v1493 = vld [vmem:[%s9 + $0x20] sm:$0xff]
      %v1494 = vld [vmem:[%s9 + $0x28] sm:$0xff]
      %v1495 = vld [vmem:[%s9 + $0x30] sm:$0xff]
      %v1496 = vld [vmem:[%s9 + $0x38] sm:$0xff]
      %v1497 = vld [vmem:[%s9 + $0x40] sm:$0xff]
      %v1498 = vld [vmem:[%s9 + $0x48] sm:$0xff]
      %v1499 = vld [vmem:[%s9 + $0x50] sm:$0xff]
      %v1500 = vld [vmem:[%s9 + $0x58] sm:$0xff]
      %v1501 = vld [vmem:[%s9 + $0x60] sm:$0xff]
      %v1502 = vld [vmem:[%s9 + $0x68] sm:$0xff]
      %v1503 = vld [vmem:[%s9 + $0x70] sm:$0xff]
      %v1504 = vld [vmem:[%s9 + $0x78] sm:$0xff]
      %1505 = vmatprep.subr.mxu0 0.0
      %1506 = vmatpush1.msra.mxu0 %v1504
      %1507 = vmatprep.subr.mxu0 0.0
      %1508 = vmatpush1.msra.mxu0 %v1503
      %1509 = vmatprep.subr.mxu0 0.0
      %1510 = vmatpush1.msra.mxu0 %v1502
      %1511 = vmatprep.subr.mxu0 0.0
      %1512 = vmatpush1.msra.mxu0 %v1501
      %1513 = vmatprep.subr.mxu0 0.0
      %1514 = vmatpush1.msra.mxu0 %v1500
      %1515 = vmatprep.subr.mxu0 0.0
      %1516 = vmatpush1.msra.mxu0 %v1499
      %1517 = vmatprep.subr.mxu0 0.0
      %1518 = vmatpush1.msra.mxu0 %v1498
      %1519 = vmatprep.subr.mxu0 0.0
      %1520 = vmatpush1.msra.mxu0 %v1497
      %1521 = vmatprep.subr.mxu0 0.0
      %1522 = vmatpush1.msra.mxu0 %v1496
      %1523 = vmatprep.subr.mxu0 0.0
      %1524 = vmatpush1.msra.mxu0 %v1495
      %1525 = vmatprep.subr.mxu0 0.0
      %1526 = vmatpush1.msra.mxu0 %v1494
      %1527 = vmatprep.subr.mxu0 0.0
      %1528 = vmatpush1.msra.mxu0 %v1493
      %1529 = vmatprep.subr.mxu0 0.0
      %1530 = vmatpush1.msra.mxu0 %v1492
      %1531 = vmatprep.subr.mxu0 0.0
      %1532 = vmatpush1.msra.mxu0 %v1491
      %1533 = vmatprep.subr.mxu0 0.0
      %1534 = vmatpush1.msra.mxu0 %v1490
      %1535 = vmatprep.subr.mxu0 0.0
      %1536 = vmatpush1.msra.mxu0 %v1489
      %1537 = vmatprep.subr.mxu0 0.0
      %1538 = vmatpush2.msra.mxu0 0.0
      %1539 = vmatprep.subr.mxu0 0.0
      %1540 = vmatpush2.msra.mxu0 0.0
      %1541 = vmatprep.subr.mxu0 0.0
      %1542 = vmatpush2.msra.mxu0 0.0
      %1543 = vmatprep.subr.mxu0 0.0
      %1544 = vmatpush2.msra.mxu0 0.0
      %1545 = vmatprep.subr.mxu0 0.0
      %1546 = vmatpush2.msra.mxu0 0.0
      %1547 = vmatprep.subr.mxu0 0.0
      %1548 = vmatpush2.msra.mxu0 0.0
      %1549 = vmatprep.subr.mxu0 0.0
      %1550 = vmatpush2.msra.mxu0 0.0
      %1551 = vmatprep.subr.mxu0 0.0
      %1552 = vmatpush2.msra.mxu0 0.0
      %1553 = vmatprep.subr.mxu0 0.0
      %1554 = vmatpush2.msra.mxu0 0.0
      %1555 = vmatprep.subr.mxu0 0.0
      %1556 = vmatpush2.msra.mxu0 0.0
      %1557 = vmatprep.subr.mxu0 0.0
      %1558 = vmatpush2.msra.mxu0 0.0
      %1559 = vmatprep.subr.mxu0 0.0
      %1560 = vmatpush2.msra.mxu0 0.0
      %1561 = vmatprep.subr.mxu0 0.0
      %1562 = vmatpush2.msra.mxu0 0.0
      %1563 = vmatprep.subr.mxu0 0.0
      %1564 = vmatpush2.msra.mxu0 0.0
      %1565 = vmatprep.subr.mxu0 0.0
      %1566 = vmatpush2.msra.mxu0 0.0
      %1567 = vmatprep.subr.mxu0 0.0
      %1568 = vmatpush2.msra.mxu0 0.0
      %1569 = vmatprep.mubr.f32.mxu0 0.0
      %1570 = vmatmul.mubr.f32.gmra.mxu0 %v1485
      %v1571 = vpop.f32.mrf.mxu0
      %v1572 = vadd.f32 0.0, %v1571
      %v1573 = vpop.f32.mrf.mxu0
      %1574 = vmatprep.mubr.f32.mxu0 0.0
      %1575 = vmatmul.mubr.f32.gmra.mxu0 %v1486
      %v1576 = vpop.f32.mrf.mxu0
      %v1577 = vadd.f32 0.0, %v1576
      %v1578 = vpop.f32.mrf.mxu0
      %1579 = vmatprep.mubr.f32.mxu0 0.0
      %1580 = vmatmul.mubr.f32.gmra.mxu0 %v1487
      %v1581 = vpop.f32.mrf.mxu0
      %v1582 = vadd.f32 0.0, %v1581
      %v1583 = vpop.f32.mrf.mxu0
      %1584 = vmatprep.mubr.f32.mxu0 0.0
      %1585 = vmatmul.mubr.f32.gmra.mxu0 %v1488
      %v1586 = vpop.f32.mrf.mxu0
      %v1587 = vadd.f32 0.0, %v1586
      %v1588 = vpop.f32.mrf.mxu0
      %1589 = vdwg.mxu0
      %v1594 = vcombine.high %v1572, %v1572
      %v1596 = vunpack.c.l.s4 1966171168
      %v1597 = vunpack.c.0.s8 %v1596
      %v1598 = vlaneseq
      %v1599 = vshrl.u32 %v1598, 7
      %v1600 = vsub.s32 %v1597, %v1599
      %v1601 = vrot.slane %v1572, %v1600
      %v1603 = vunpack.c.l.s4 1966171168
      %v1604 = vunpack.c.0.s8 %v1603
      %v1605 = vlaneseq
      %v1606 = vshrl.u32 %v1605, 7
      %v1607 = vsub.s32 %v1604, %v1606
      %v1608 = vrot.slane %v1594, %v1607
      %v1609 = vcombine.high %v1601, %v1601
      %v1610 = vcombine.high %v1608, %v1608
      %v1612 = vunpack.c.l.s4 1966171168
      %v1613 = vunpack.c.0.s8 %v1612
      %v1614 = vlaneseq
      %v1615 = vshrl.u32 %v1614, 7
      %v1616 = vsub.s32 %v1613, %v1615
      %v1617 = vrot.slane %v1601, %v1616
      %v1619 = vunpack.c.l.s4 1966171168
      %v1620 = vunpack.c.0.s8 %v1619
      %v1621 = vlaneseq
      %v1622 = vshrl.u32 %v1621, 7
      %v1623 = vsub.s32 %v1620, %v1622
      %v1624 = vrot.slane %v1608, %v1623
      %v1626 = vunpack.c.l.s4 1966171168
      %v1627 = vunpack.c.0.s8 %v1626
      %v1628 = vlaneseq
      %v1629 = vshrl.u32 %v1628, 7
      %v1630 = vsub.s32 %v1627, %v1629
      %v1631 = vrot.slane %v1609, %v1630
      %v1633 = vunpack.c.l.s4 1966171168
      %v1634 = vunpack.c.0.s8 %v1633
      %v1635 = vlaneseq
      %v1636 = vshrl.u32 %v1635, 7
      %v1637 = vsub.s32 %v1634, %v1636
      %v1638 = vrot.slane %v1610, %v1637
      %v1639 = vcombine.high %v1617, %v1617
      %v1640 = vcombine.high %v1624, %v1624
      %v1641 = vcombine.high %v1631, %v1631
      %v1642 = vcombine.high %v1638, %v1638
      %v1643 = vcombine.high %v1577, %v1577
      %v1645 = vunpack.c.l.s4 1966171168
      %v1646 = vunpack.c.0.s8 %v1645
      %v1647 = vlaneseq
      %v1648 = vshrl.u32 %v1647, 7
      %v1649 = vsub.s32 %v1646, %v1648
      %v1650 = vrot.slane %v1577, %v1649
      %v1652 = vunpack.c.l.s4 1966171168
      %v1653 = vunpack.c.0.s8 %v1652
      %v1654 = vlaneseq
      %v1655 = vshrl.u32 %v1654, 7
      %v1656 = vsub.s32 %v1653, %v1655
      %v1657 = vrot.slane %v1643, %v1656
      %v1658 = vcombine.high %v1650, %v1650
      %v1659 = vcombine.high %v1657, %v1657
      %v1661 = vunpack.c.l.s4 1966171168
      %v1662 = vunpack.c.0.s8 %v1661
      %v1663 = vlaneseq
      %v1664 = vshrl.u32 %v1663, 7
      %v1665 = vsub.s32 %v1662, %v1664
      %v1666 = vrot.slane %v1650, %v1665
      %v1668 = vunpack.c.l.s4 1966171168
      %v1669 = vunpack.c.0.s8 %v1668
      %v1670 = vlaneseq
      %v1671 = vshrl.u32 %v1670, 7
      %v1672 = vsub.s32 %v1669, %v1671
      %v1673 = vrot.slane %v1657, %v1672
      %v1675 = vunpack.c.l.s4 1966171168
      %v1676 = vunpack.c.0.s8 %v1675
      %v1677 = vlaneseq
      %v1678 = vshrl.u32 %v1677, 7
      %v1679 = vsub.s32 %v1676, %v1678
      %v1680 = vrot.slane %v1658, %v1679
      %v1682 = vunpack.c.l.s4 1966171168
      %v1683 = vunpack.c.0.s8 %v1682
      %v1684 = vlaneseq
      %v1685 = vshrl.u32 %v1684, 7
      %v1686 = vsub.s32 %v1683, %v1685
      %v1687 = vrot.slane %v1659, %v1686
      %v1688 = vcombine.high %v1666, %v1666
      %v1689 = vcombine.high %v1673, %v1673
      %v1690 = vcombine.high %v1680, %v1680
      %v1691 = vcombine.high %v1687, %v1687
      %v1692 = vcombine.high %v1582, %v1582
      %v1694 = vunpack.c.l.s4 1966171168
      %v1695 = vunpack.c.0.s8 %v1694
      %v1696 = vlaneseq
      %v1697 = vshrl.u32 %v1696, 7
      %v1698 = vsub.s32 %v1695, %v1697
      %v1699 = vrot.slane %v1582, %v1698
      %v1701 = vunpack.c.l.s4 1966171168
      %v1702 = vunpack.c.0.s8 %v1701
      %v1703 = vlaneseq
      %v1704 = vshrl.u32 %v1703, 7
      %v1705 = vsub.s32 %v1702, %v1704
      %v1706 = vrot.slane %v1692, %v1705
      %v1707 = vcombine.high %v1699, %v1699
      %v1708 = vcombine.high %v1706, %v1706
      %v1710 = vunpack.c.l.s4 1966171168
      %v1711 = vunpack.c.0.s8 %v1710
      %v1712 = vlaneseq
      %v1713 = vshrl.u32 %v1712, 7
      %v1714 = vsub.s32 %v1711, %v1713
      %v1715 = vrot.slane %v1699, %v1714
      %v1717 = vunpack.c.l.s4 1966171168
      %v1718 = vunpack.c.0.s8 %v1717
      %v1719 = vlaneseq
      %v1720 = vshrl.u32 %v1719, 7
      %v1721 = vsub.s32 %v1718, %v1720
      %v1722 = vrot.slane %v1706, %v1721
      %v1724 = vunpack.c.l.s4 1966171168
      %v1725 = vunpack.c.0.s8 %v1724
      %v1726 = vlaneseq
      %v1727 = vshrl.u32 %v1726, 7
      %v1728 = vsub.s32 %v1725, %v1727
      %v1729 = vrot.slane %v1707, %v1728
      %v1731 = vunpack.c.l.s4 1966171168
      %v1732 = vunpack.c.0.s8 %v1731
      %v1733 = vlaneseq
      %v1734 = vshrl.u32 %v1733, 7
      %v1735 = vsub.s32 %v1732, %v1734
      %v1736 = vrot.slane %v1708, %v1735
      %v1737 = vcombine.high %v1715, %v1715
      %v1738 = vcombine.high %v1722, %v1722
      %v1739 = vcombine.high %v1729, %v1729
      %v1740 = vcombine.high %v1736, %v1736
      %v1741 = vcombine.high %v1587, %v1587
      %v1743 = vunpack.c.l.s4 1966171168
      %v1744 = vunpack.c.0.s8 %v1743
      %v1745 = vlaneseq
      %v1746 = vshrl.u32 %v1745, 7
      %v1747 = vsub.s32 %v1744, %v1746
      %v1748 = vrot.slane %v1587, %v1747
      %v1750 = vunpack.c.l.s4 1966171168
      %v1751 = vunpack.c.0.s8 %v1750
      %v1752 = vlaneseq
      %v1753 = vshrl.u32 %v1752, 7
      %v1754 = vsub.s32 %v1751, %v1753
      %v1755 = vrot.slane %v1741, %v1754
      %v1756 = vcombine.high %v1748, %v1748
      %v1757 = vcombine.high %v1755, %v1755
      %v1759 = vunpack.c.l.s4 1966171168
      %v1760 = vunpack.c.0.s8 %v1759
      %v1761 = vlaneseq
      %v1762 = vshrl.u32 %v1761, 7
      %v1763 = vsub.s32 %v1760, %v1762
      %v1764 = vrot.slane %v1748, %v1763
      %v1766 = vunpack.c.l.s4 1966171168
      %v1767 = vunpack.c.0.s8 %v1766
      %v1768 = vlaneseq
      %v1769 = vshrl.u32 %v1768, 7
      %v1770 = vsub.s32 %v1767, %v1769
      %v1771 = vrot.slane %v1755, %v1770
      %v1773 = vunpack.c.l.s4 1966171168
      %v1774 = vunpack.c.0.s8 %v1773
      %v1775 = vlaneseq
      %v1776 = vshrl.u32 %v1775, 7
      %v1777 = vsub.s32 %v1774, %v1776
      %v1778 = vrot.slane %v1756, %v1777
      %v1780 = vunpack.c.l.s4 1966171168
      %v1781 = vunpack.c.0.s8 %v1780
      %v1782 = vlaneseq
      %v1783 = vshrl.u32 %v1782, 7
      %v1784 = vsub.s32 %v1781, %v1783
      %v1785 = vrot.slane %v1757, %v1784
      %v1786 = vcombine.high %v1764, %v1764
      %v1787 = vcombine.high %v1771, %v1771
      %v1788 = vcombine.high %v1778, %v1778
      %v1789 = vcombine.high %v1785, %v1785
      %v1790 = vld [vmem:[%s520] sm:$0xff]
      %v1791 = vld [vmem:[%s520 + $0x8] sm:$0xff]
      %v1792 = vld [vmem:[%s520 + $0x10] sm:$0xff]
      %v1793 = vld [vmem:[%s520 + $0x18] sm:$0xff]
      %v1794 = vld [vmem:[%s520 + $0x20] sm:$0xff]
      %v1795 = vld [vmem:[%s520 + $0x28] sm:$0xff]
      %v1796 = vld [vmem:[%s520 + $0x30] sm:$0xff]
      %v1797 = vld [vmem:[%s520 + $0x38] sm:$0xff]
      %v1798 = vld [vmem:[%s520 + $0x40] sm:$0xff]
      %v1799 = vld [vmem:[%s520 + $0x48] sm:$0xff]
      %v1800 = vld [vmem:[%s520 + $0x50] sm:$0xff]
      %v1801 = vld [vmem:[%s520 + $0x58] sm:$0xff]
      %v1802 = vld [vmem:[%s520 + $0x60] sm:$0xff]
      %v1803 = vld [vmem:[%s520 + $0x68] sm:$0xff]
      %v1804 = vld [vmem:[%s520 + $0x70] sm:$0xff]
      %v1805 = vld [vmem:[%s520 + $0x78] sm:$0xff]
      %v1806 = vlaneseq
      %v1807 = vshrl.u32 %v1806, 7
      %v1808 = vsub.s32 0, %v1807
      %v1809 = vrot.slane %v1617, %v1808
      %v1810 = vlaneseq
      %v1811 = vshrl.u32 %v1810, 7
      %v1812 = vsub.s32 0, %v1811
      %v1813 = vrot.slane %v1631, %v1812
      %v1814 = vlaneseq
      %v1815 = vshrl.u32 %v1814, 7
      %v1816 = vsub.s32 0, %v1815
      %v1817 = vrot.slane %v1639, %v1816
      %v1818 = vlaneseq
      %v1819 = vshrl.u32 %v1818, 7
      %v1820 = vsub.s32 0, %v1819
      %v1821 = vrot.slane %v1641, %v1820
      %v1822 = vlaneseq
      %v1823 = vshrl.u32 %v1822, 7
      %v1824 = vsub.s32 0, %v1823
      %v1825 = vrot.slane %v1624, %v1824
      %v1826 = vlaneseq
      %v1827 = vshrl.u32 %v1826, 7
      %v1828 = vsub.s32 0, %v1827
      %v1829 = vrot.slane %v1638, %v1828
      %v1830 = vlaneseq
      %v1831 = vshrl.u32 %v1830, 7
      %v1832 = vsub.s32 0, %v1831
      %v1833 = vrot.slane %v1640, %v1832
      %v1834 = vlaneseq
      %v1835 = vshrl.u32 %v1834, 7
      %v1836 = vsub.s32 0, %v1835
      %v1837 = vrot.slane %v1642, %v1836
      %v1838 = vlaneseq
      %v1839 = vshrl.u32 %v1838, 7
      %v1840 = vsub.s32 0, %v1839
      %v1841 = vrot.slane %v1666, %v1840
      %v1842 = vlaneseq
      %v1843 = vshrl.u32 %v1842, 7
      %v1844 = vsub.s32 0, %v1843
      %v1845 = vrot.slane %v1680, %v1844
      %v1846 = vlaneseq
      %v1847 = vshrl.u32 %v1846, 7
      %v1848 = vsub.s32 0, %v1847
      %v1849 = vrot.slane %v1688, %v1848
      %v1850 = vlaneseq
      %v1851 = vshrl.u32 %v1850, 7
      %v1852 = vsub.s32 0, %v1851
      %v1853 = vrot.slane %v1690, %v1852
      %v1854 = vlaneseq
      %v1855 = vshrl.u32 %v1854, 7
      %v1856 = vsub.s32 0, %v1855
      %v1857 = vrot.slane %v1673, %v1856
      %v1858 = vlaneseq
      %v1859 = vshrl.u32 %v1858, 7
      %v1860 = vsub.s32 0, %v1859
      %v1861 = vrot.slane %v1687, %v1860
      %v1862 = vlaneseq
      %v1863 = vshrl.u32 %v1862, 7
      %v1864 = vsub.s32 0, %v1863
      %v1865 = vrot.slane %v1689, %v1864
      %v1866 = vlaneseq
      %v1867 = vshrl.u32 %v1866, 7
      %v1868 = vsub.s32 0, %v1867
      %v1869 = vrot.slane %v1691, %v1868
      %v1870 = vlaneseq
      %v1871 = vshrl.u32 %v1870, 7
      %v1872 = vsub.s32 0, %v1871
      %v1873 = vrot.slane %v1715, %v1872
      %v1874 = vlaneseq
      %v1875 = vshrl.u32 %v1874, 7
      %v1876 = vsub.s32 0, %v1875
      %v1877 = vrot.slane %v1729, %v1876
      %v1878 = vlaneseq
      %v1879 = vshrl.u32 %v1878, 7
      %v1880 = vsub.s32 0, %v1879
      %v1881 = vrot.slane %v1737, %v1880
      %v1882 = vlaneseq
      %v1883 = vshrl.u32 %v1882, 7
      %v1884 = vsub.s32 0, %v1883
      %v1885 = vrot.slane %v1739, %v1884
      %v1886 = vlaneseq
      %v1887 = vshrl.u32 %v1886, 7
      %v1888 = vsub.s32 0, %v1887
      %v1889 = vrot.slane %v1722, %v1888
      %v1890 = vlaneseq
      %v1891 = vshrl.u32 %v1890, 7
      %v1892 = vsub.s32 0, %v1891
      %v1893 = vrot.slane %v1736, %v1892
      %v1894 = vlaneseq
      %v1895 = vshrl.u32 %v1894, 7
      %v1896 = vsub.s32 0, %v1895
      %v1897 = vrot.slane %v1738, %v1896
      %v1898 = vlaneseq
      %v1899 = vshrl.u32 %v1898, 7
      %v1900 = vsub.s32 0, %v1899
      %v1901 = vrot.slane %v1740, %v1900
      %v1902 = vlaneseq
      %v1903 = vshrl.u32 %v1902, 7
      %v1904 = vsub.s32 0, %v1903
      %v1905 = vrot.slane %v1764, %v1904
      %v1906 = vlaneseq
      %v1907 = vshrl.u32 %v1906, 7
      %v1908 = vsub.s32 0, %v1907
      %v1909 = vrot.slane %v1778, %v1908
      %v1910 = vlaneseq
      %v1911 = vshrl.u32 %v1910, 7
      %v1912 = vsub.s32 0, %v1911
      %v1913 = vrot.slane %v1786, %v1912
      %v1914 = vlaneseq
      %v1915 = vshrl.u32 %v1914, 7
      %v1916 = vsub.s32 0, %v1915
      %v1917 = vrot.slane %v1788, %v1916
      %v1918 = vlaneseq
      %v1919 = vshrl.u32 %v1918, 7
      %v1920 = vsub.s32 0, %v1919
      %v1921 = vrot.slane %v1771, %v1920
      %v1922 = vlaneseq
      %v1923 = vshrl.u32 %v1922, 7
      %v1924 = vsub.s32 0, %v1923
      %v1925 = vrot.slane %v1785, %v1924
      %v1926 = vlaneseq
      %v1927 = vshrl.u32 %v1926, 7
      %v1928 = vsub.s32 0, %v1927
      %v1929 = vrot.slane %v1787, %v1928
      %v1930 = vlaneseq
      %v1931 = vshrl.u32 %v1930, 7
      %v1932 = vsub.s32 0, %v1931
      %v1933 = vrot.slane %v1789, %v1932
      %v1966 = vadd.f32 %v1809, %v1790
      %v1967 = vadd.f32 %v1809, %v1791
      %v1968 = vadd.f32 %v1813, %v1792
      %v1969 = vadd.f32 %v1813, %v1793
      %v1970 = vadd.f32 %v1817, %v1794
      %v1971 = vadd.f32 %v1817, %v1795
      %v1972 = vadd.f32 %v1821, %v1796
      %v1973 = vadd.f32 %v1821, %v1797
      %v1974 = vadd.f32 %v1825, %v1798
      %v1975 = vadd.f32 %v1825, %v1799
      %v1976 = vadd.f32 %v1829, %v1800
      %v1977 = vadd.f32 %v1829, %v1801
      %v1978 = vadd.f32 %v1833, %v1802
      %v1979 = vadd.f32 %v1833, %v1803
      %v1980 = vadd.f32 %v1837, %v1804
      %v1981 = vadd.f32 %v1837, %v1805
      %v1982 = vadd.f32 %v1841, %v1790
      %v1983 = vadd.f32 %v1841, %v1791
      %v1984 = vadd.f32 %v1845, %v1792
      %v1985 = vadd.f32 %v1845, %v1793
      %v1986 = vadd.f32 %v1849, %v1794
      %v1987 = vadd.f32 %v1849, %v1795
      %v1988 = vadd.f32 %v1853, %v1796
      %v1989 = vadd.f32 %v1853, %v1797
      %v1990 = vadd.f32 %v1857, %v1798
      %v1991 = vadd.f32 %v1857, %v1799
      %v1992 = vadd.f32 %v1861, %v1800
      %v1993 = vadd.f32 %v1861, %v1801
      %v1994 = vadd.f32 %v1865, %v1802
      %v1995 = vadd.f32 %v1865, %v1803
      %v1996 = vadd.f32 %v1869, %v1804
      %v1997 = vadd.f32 %v1869, %v1805
      %v1998 = vadd.f32 %v1873, %v1790
      %v1999 = vadd.f32 %v1873, %v1791
      %v2000 = vadd.f32 %v1877, %v1792
      %v2001 = vadd.f32 %v1877, %v1793
      %v2002 = vadd.f32 %v1881, %v1794
      %v2003 = vadd.f32 %v1881, %v1795
      %v2004 = vadd.f32 %v1885, %v1796
      %v2005 = vadd.f32 %v1885, %v1797
      %v2006 = vadd.f32 %v1889, %v1798
      %v2007 = vadd.f32 %v1889, %v1799
      %v2008 = vadd.f32 %v1893, %v1800
      %v2009 = vadd.f32 %v1893, %v1801
      %v2010 = vadd.f32 %v1897, %v1802
      %v2011 = vadd.f32 %v1897, %v1803
      %v2012 = vadd.f32 %v1901, %v1804
      %v2013 = vadd.f32 %v1901, %v1805
      %v2014 = vadd.f32 %v1905, %v1790
      %v2015 = vadd.f32 %v1905, %v1791
      %v2016 = vadd.f32 %v1909, %v1792
      %v2017 = vadd.f32 %v1909, %v1793
      %v2018 = vadd.f32 %v1913, %v1794
      %v2019 = vadd.f32 %v1913, %v1795
      %v2020 = vadd.f32 %v1917, %v1796
      %v2021 = vadd.f32 %v1917, %v1797
      %v2022 = vadd.f32 %v1921, %v1798
      %v2023 = vadd.f32 %v1921, %v1799
      %v2024 = vadd.f32 %v1925, %v1800
      %v2025 = vadd.f32 %v1925, %v1801
      %v2026 = vadd.f32 %v1929, %v1802
      %v2027 = vadd.f32 %v1929, %v1803
      %v2028 = vadd.f32 %v1933, %v1804
      %v2029 = vadd.f32 %v1933, %v1805
      %v2030 = vtanh.pop %v1966
      %v2031 = vtanh.pop %v1967
      %v2032 = vtanh.pop %v1968
      %v2033 = vtanh.pop %v1969
      %v2034 = vtanh.pop %v1970
      %v2035 = vtanh.pop %v1971
      %v2036 = vtanh.pop %v1972
      %v2037 = vtanh.pop %v1973
      %v2038 = vtanh.pop %v1974
      %v2039 = vtanh.pop %v1975
      %v2040 = vtanh.pop %v1976
      %v2041 = vtanh.pop %v1977
      %v2042 = vtanh.pop %v1978
      %v2043 = vtanh.pop %v1979
      %v2044 = vtanh.pop %v1980
      %v2045 = vtanh.pop %v1981
      %v2046 = vtanh.pop %v1982
      %v2047 = vtanh.pop %v1983
      %v2048 = vtanh.pop %v1984
      %v2049 = vtanh.pop %v1985
      %v2050 = vtanh.pop %v1986
      %v2051 = vtanh.pop %v1987
      %v2052 = vtanh.pop %v1988
      %v2053 = vtanh.pop %v1989
      %v2054 = vtanh.pop %v1990
      %v2055 = vtanh.pop %v1991
      %v2056 = vtanh.pop %v1992
      %v2057 = vtanh.pop %v1993
      %v2058 = vtanh.pop %v1994
      %v2059 = vtanh.pop %v1995
      %v2060 = vtanh.pop %v1996
      %v2061 = vtanh.pop %v1997
      %v2062 = vtanh.pop %v1998
      %v2063 = vtanh.pop %v1999
      %v2064 = vtanh.pop %v2000
      %v2065 = vtanh.pop %v2001
      %v2066 = vtanh.pop %v2002
      %v2067 = vtanh.pop %v2003
      %v2068 = vtanh.pop %v2004
      %v2069 = vtanh.pop %v2005
      %v2070 = vtanh.pop %v2006
      %v2071 = vtanh.pop %v2007
      %v2072 = vtanh.pop %v2008
      %v2073 = vtanh.pop %v2009
      %v2074 = vtanh.pop %v2010
      %v2075 = vtanh.pop %v2011
      %v2076 = vtanh.pop %v2012
      %v2077 = vtanh.pop %v2013
      %v2078 = vtanh.pop %v2014
      %v2079 = vtanh.pop %v2015
      %v2080 = vtanh.pop %v2016
      %v2081 = vtanh.pop %v2017
      %v2082 = vtanh.pop %v2018
      %v2083 = vtanh.pop %v2019
      %v2084 = vtanh.pop %v2020
      %v2085 = vtanh.pop %v2021
      %v2086 = vtanh.pop %v2022
      %v2087 = vtanh.pop %v2023
      %v2088 = vtanh.pop %v2024
      %v2089 = vtanh.pop %v2025
      %v2090 = vtanh.pop %v2026
      %v2091 = vtanh.pop %v2027
      %v2092 = vtanh.pop %v2028
      %v2093 = vtanh.pop %v2029
      %v2094 = vld [vmem:[%s10] sm:$0x1]
      %v2096 = vlaneseq
      %v2097 = vshrl.u32 %v2096, 7
      %v2098 = vsub.s32 0, %v2097
      %v2099 = vrot.slane %v2094, %v2098
      %v2101 = vmul.f32 %v2030, %v2099
      %v2102 = vmul.f32 %v2031, %v2099
      %v2103 = vmul.f32 %v2032, %v2099
      %v2104 = vmul.f32 %v2033, %v2099
      %v2105 = vmul.f32 %v2034, %v2099
      %v2106 = vmul.f32 %v2035, %v2099
      %v2107 = vmul.f32 %v2036, %v2099
      %v2108 = vmul.f32 %v2037, %v2099
      %v2109 = vmul.f32 %v2038, %v2099
      %v2110 = vmul.f32 %v2039, %v2099
      %v2111 = vmul.f32 %v2040, %v2099
      %v2112 = vmul.f32 %v2041, %v2099
      %v2113 = vmul.f32 %v2042, %v2099
      %v2114 = vmul.f32 %v2043, %v2099
      %v2115 = vmul.f32 %v2044, %v2099
      %v2116 = vmul.f32 %v2045, %v2099
      %v2117 = vmul.f32 %v2046, %v2099
      %v2118 = vmul.f32 %v2047, %v2099
      %v2119 = vmul.f32 %v2048, %v2099
      %v2120 = vmul.f32 %v2049, %v2099
      %v2121 = vmul.f32 %v2050, %v2099
      %v2122 = vmul.f32 %v2051, %v2099
      %v2123 = vmul.f32 %v2052, %v2099
      %v2124 = vmul.f32 %v2053, %v2099
      %v2125 = vmul.f32 %v2054, %v2099
      %v2126 = vmul.f32 %v2055, %v2099
      %v2127 = vmul.f32 %v2056, %v2099
      %v2128 = vmul.f32 %v2057, %v2099
      %v2129 = vmul.f32 %v2058, %v2099
      %v2130 = vmul.f32 %v2059, %v2099
      %v2131 = vmul.f32 %v2060, %v2099
      %v2132 = vmul.f32 %v2061, %v2099
      %v2133 = vmul.f32 %v2062, %v2099
      %v2134 = vmul.f32 %v2063, %v2099
      %v2135 = vmul.f32 %v2064, %v2099
      %v2136 = vmul.f32 %v2065, %v2099
      %v2137 = vmul.f32 %v2066, %v2099
      %v2138 = vmul.f32 %v2067, %v2099
      %v2139 = vmul.f32 %v2068, %v2099
      %v2140 = vmul.f32 %v2069, %v2099
      %v2141 = vmul.f32 %v2070, %v2099
      %v2142 = vmul.f32 %v2071, %v2099
      %v2143 = vmul.f32 %v2072, %v2099
      %v2144 = vmul.f32 %v2073, %v2099
      %v2145 = vmul.f32 %v2074, %v2099
      %v2146 = vmul.f32 %v2075, %v2099
      %v2147 = vmul.f32 %v2076, %v2099
      %v2148 = vmul.f32 %v2077, %v2099
      %v2149 = vmul.f32 %v2078, %v2099
      %v2150 = vmul.f32 %v2079, %v2099
      %v2151 = vmul.f32 %v2080, %v2099
      %v2152 = vmul.f32 %v2081, %v2099
      %v2153 = vmul.f32 %v2082, %v2099
      %v2154 = vmul.f32 %v2083, %v2099
      %v2155 = vmul.f32 %v2084, %v2099
      %v2156 = vmul.f32 %v2085, %v2099
      %v2157 = vmul.f32 %v2086, %v2099
      %v2158 = vmul.f32 %v2087, %v2099
      %v2159 = vmul.f32 %v2088, %v2099
      %v2160 = vmul.f32 %v2089, %v2099
      %v2161 = vmul.f32 %v2090, %v2099
      %v2162 = vmul.f32 %v2091, %v2099
      %v2163 = vmul.f32 %v2092, %v2099
      %v2164 = vmul.f32 %v2093, %v2099
      %v2165 = vsel %vm582, %v2101, 0.0
      %2166 = vadd.xlane.f32.xlu0 %v2165
      %v2167 = vpop.xlane.xlu0 %2166
      %v2168 = vsel %vm582, %v2102, 0.0
      %2169 = vadd.xlane.f32.xlu0 %v2168
      %v2170 = vpop.xlane.xlu0 %2169
      %v2171 = vsel %vm582, %v2103, 0.0
      %2172 = vadd.xlane.f32.xlu0 %v2171
      %v2173 = vpop.xlane.xlu0 %2172
      %v2174 = vsel %vm582, %v2104, 0.0
      %2175 = vadd.xlane.f32.xlu0 %v2174
      %v2176 = vpop.xlane.xlu0 %2175
      %v2177 = vsel %vm582, %v2105, 0.0
      %2178 = vadd.xlane.f32.xlu0 %v2177
      %v2179 = vpop.xlane.xlu0 %2178
      %v2180 = vsel %vm582, %v2106, 0.0
      %2181 = vadd.xlane.f32.xlu0 %v2180
      %v2182 = vpop.xlane.xlu0 %2181
      %v2183 = vsel %vm582, %v2107, 0.0
      %2184 = vadd.xlane.f32.xlu0 %v2183
      %v2185 = vpop.xlane.xlu0 %2184
      %v2186 = vsel %vm582, %v2108, 0.0
      %2187 = vadd.xlane.f32.xlu0 %v2186
      %v2188 = vpop.xlane.xlu0 %2187
      %v2189 = vsel %vm582, %v2109, 0.0
      %2190 = vadd.xlane.f32.xlu0 %v2189
      %v2191 = vpop.xlane.xlu0 %2190
      %v2192 = vsel %vm582, %v2110, 0.0
      %2193 = vadd.xlane.f32.xlu0 %v2192
      %v2194 = vpop.xlane.xlu0 %2193
      %v2195 = vsel %vm582, %v2111, 0.0
      %2196 = vadd.xlane.f32.xlu0 %v2195
      %v2197 = vpop.xlane.xlu0 %2196
      %v2198 = vsel %vm582, %v2112, 0.0
      %2199 = vadd.xlane.f32.xlu0 %v2198
      %v2200 = vpop.xlane.xlu0 %2199
      %v2201 = vsel %vm582, %v2113, 0.0
      %2202 = vadd.xlane.f32.xlu0 %v2201
      %v2203 = vpop.xlane.xlu0 %2202
      %v2204 = vsel %vm582, %v2114, 0.0
      %2205 = vadd.xlane.f32.xlu0 %v2204
      %v2206 = vpop.xlane.xlu0 %2205
      %v2207 = vsel %vm582, %v2115, 0.0
      %2208 = vadd.xlane.f32.xlu0 %v2207
      %v2209 = vpop.xlane.xlu0 %2208
      %v2210 = vsel %vm582, %v2116, 0.0
      %2211 = vadd.xlane.f32.xlu0 %v2210
      %v2212 = vpop.xlane.xlu0 %2211
      %v2213 = vsel %vm582, %v2117, 0.0
      %2214 = vadd.xlane.f32.xlu0 %v2213
      %v2215 = vpop.xlane.xlu0 %2214
      %v2216 = vsel %vm582, %v2118, 0.0
      %2217 = vadd.xlane.f32.xlu0 %v2216
      %v2218 = vpop.xlane.xlu0 %2217
      %v2219 = vsel %vm582, %v2119, 0.0
      %2220 = vadd.xlane.f32.xlu0 %v2219
      %v2221 = vpop.xlane.xlu0 %2220
      %v2222 = vsel %vm582, %v2120, 0.0
      %2223 = vadd.xlane.f32.xlu0 %v2222
      %v2224 = vpop.xlane.xlu0 %2223
      %v2225 = vsel %vm582, %v2121, 0.0
      %2226 = vadd.xlane.f32.xlu0 %v2225
      %v2227 = vpop.xlane.xlu0 %2226
      %v2228 = vsel %vm582, %v2122, 0.0
      %2229 = vadd.xlane.f32.xlu0 %v2228
      %v2230 = vpop.xlane.xlu0 %2229
      %v2231 = vsel %vm582, %v2123, 0.0
      %2232 = vadd.xlane.f32.xlu0 %v2231
      %v2233 = vpop.xlane.xlu0 %2232
      %v2234 = vsel %vm582, %v2124, 0.0
      %2235 = vadd.xlane.f32.xlu0 %v2234
      %v2236 = vpop.xlane.xlu0 %2235
      %v2237 = vsel %vm582, %v2125, 0.0
      %2238 = vadd.xlane.f32.xlu0 %v2237
      %v2239 = vpop.xlane.xlu0 %2238
      %v2240 = vsel %vm582, %v2126, 0.0
      %2241 = vadd.xlane.f32.xlu0 %v2240
      %v2242 = vpop.xlane.xlu0 %2241
      %v2243 = vsel %vm582, %v2127, 0.0
      %2244 = vadd.xlane.f32.xlu0 %v2243
      %v2245 = vpop.xlane.xlu0 %2244
      %v2246 = vsel %vm582, %v2128, 0.0
      %2247 = vadd.xlane.f32.xlu0 %v2246
      %v2248 = vpop.xlane.xlu0 %2247
      %v2249 = vsel %vm582, %v2129, 0.0
      %2250 = vadd.xlane.f32.xlu0 %v2249
      %v2251 = vpop.xlane.xlu0 %2250
      %v2252 = vsel %vm582, %v2130, 0.0
      %2253 = vadd.xlane.f32.xlu0 %v2252
      %v2254 = vpop.xlane.xlu0 %2253
      %v2255 = vsel %vm582, %v2131, 0.0
      %2256 = vadd.xlane.f32.xlu0 %v2255
      %v2257 = vpop.xlane.xlu0 %2256
      %v2258 = vsel %vm582, %v2132, 0.0
      %2259 = vadd.xlane.f32.xlu0 %v2258
      %v2260 = vpop.xlane.xlu0 %2259
      %v2261 = vsel %vm582, %v2133, 0.0
      %2262 = vadd.xlane.f32.xlu0 %v2261
      %v2263 = vpop.xlane.xlu0 %2262
      %v2264 = vsel %vm582, %v2134, 0.0
      %2265 = vadd.xlane.f32.xlu0 %v2264
      %v2266 = vpop.xlane.xlu0 %2265
      %v2267 = vsel %vm582, %v2135, 0.0
      %2268 = vadd.xlane.f32.xlu0 %v2267
      %v2269 = vpop.xlane.xlu0 %2268
      %v2270 = vsel %vm582, %v2136, 0.0
      %2271 = vadd.xlane.f32.xlu0 %v2270
      %v2272 = vpop.xlane.xlu0 %2271
      %v2273 = vsel %vm582, %v2137, 0.0
      %2274 = vadd.xlane.f32.xlu0 %v2273
      %v2275 = vpop.xlane.xlu0 %2274
      %v2276 = vsel %vm582, %v2138, 0.0
      %2277 = vadd.xlane.f32.xlu0 %v2276
      %v2278 = vpop.xlane.xlu0 %2277
      %v2279 = vsel %vm582, %v2139, 0.0
      %2280 = vadd.xlane.f32.xlu0 %v2279
      %v2281 = vpop.xlane.xlu0 %2280
      %v2282 = vsel %vm582, %v2140, 0.0
      %2283 = vadd.xlane.f32.xlu0 %v2282
      %v2284 = vpop.xlane.xlu0 %2283
      %v2285 = vsel %vm582, %v2141, 0.0
      %2286 = vadd.xlane.f32.xlu0 %v2285
      %v2287 = vpop.xlane.xlu0 %2286
      %v2288 = vsel %vm582, %v2142, 0.0
      %2289 = vadd.xlane.f32.xlu0 %v2288
      %v2290 = vpop.xlane.xlu0 %2289
      %v2291 = vsel %vm582, %v2143, 0.0
      %2292 = vadd.xlane.f32.xlu0 %v2291
      %v2293 = vpop.xlane.xlu0 %2292
      %v2294 = vsel %vm582, %v2144, 0.0
      %2295 = vadd.xlane.f32.xlu0 %v2294
      %v2296 = vpop.xlane.xlu0 %2295
      %v2297 = vsel %vm582, %v2145, 0.0
      %2298 = vadd.xlane.f32.xlu0 %v2297
      %v2299 = vpop.xlane.xlu0 %2298
      %v2300 = vsel %vm582, %v2146, 0.0
      %2301 = vadd.xlane.f32.xlu0 %v2300
      %v2302 = vpop.xlane.xlu0 %2301
      %v2303 = vsel %vm582, %v2147, 0.0
      %2304 = vadd.xlane.f32.xlu0 %v2303
      %v2305 = vpop.xlane.xlu0 %2304
      %v2306 = vsel %vm582, %v2148, 0.0
      %2307 = vadd.xlane.f32.xlu0 %v2306
      %v2308 = vpop.xlane.xlu0 %2307
      %v2309 = vsel %vm582, %v2149, 0.0
      %2310 = vadd.xlane.f32.xlu0 %v2309
      %v2311 = vpop.xlane.xlu0 %2310
      %v2312 = vsel %vm582, %v2150, 0.0
      %2313 = vadd.xlane.f32.xlu0 %v2312
      %v2314 = vpop.xlane.xlu0 %2313
      %v2315 = vsel %vm582, %v2151, 0.0
      %2316 = vadd.xlane.f32.xlu0 %v2315
      %v2317 = vpop.xlane.xlu0 %2316
      %v2318 = vsel %vm582, %v2152, 0.0
      %2319 = vadd.xlane.f32.xlu0 %v2318
      %v2320 = vpop.xlane.xlu0 %2319
      %v2321 = vsel %vm582, %v2153, 0.0
      %2322 = vadd.xlane.f32.xlu0 %v2321
      %v2323 = vpop.xlane.xlu0 %2322
      %v2324 = vsel %vm582, %v2154, 0.0
      %2325 = vadd.xlane.f32.xlu0 %v2324
      %v2326 = vpop.xlane.xlu0 %2325
      %v2327 = vsel %vm582, %v2155, 0.0
      %2328 = vadd.xlane.f32.xlu0 %v2327
      %v2329 = vpop.xlane.xlu0 %2328
      %v2330 = vsel %vm582, %v2156, 0.0
      %2331 = vadd.xlane.f32.xlu0 %v2330
      %v2332 = vpop.xlane.xlu0 %2331
      %v2333 = vsel %vm582, %v2157, 0.0
      %2334 = vadd.xlane.f32.xlu0 %v2333
      %v2335 = vpop.xlane.xlu0 %2334
      %v2336 = vsel %vm582, %v2158, 0.0
      %2337 = vadd.xlane.f32.xlu0 %v2336
      %v2338 = vpop.xlane.xlu0 %2337
      %v2339 = vsel %vm582, %v2159, 0.0
      %2340 = vadd.xlane.f32.xlu0 %v2339
      %v2341 = vpop.xlane.xlu0 %2340
      %v2342 = vsel %vm582, %v2160, 0.0
      %2343 = vadd.xlane.f32.xlu0 %v2342
      %v2344 = vpop.xlane.xlu0 %2343
      %v2345 = vsel %vm582, %v2161, 0.0
      %2346 = vadd.xlane.f32.xlu0 %v2345
      %v2347 = vpop.xlane.xlu0 %2346
      %v2348 = vsel %vm582, %v2162, 0.0
      %2349 = vadd.xlane.f32.xlu0 %v2348
      %v2350 = vpop.xlane.xlu0 %2349
      %v2351 = vsel %vm582, %v2163, 0.0
      %2352 = vadd.xlane.f32.xlu0 %v2351
      %v2353 = vpop.xlane.xlu0 %2352
      %v2354 = vsel %vm582, %v2164, 0.0
      %2355 = vadd.xlane.f32.xlu0 %v2354
      %v2356 = vpop.xlane.xlu0 %2355
      %v2357 = vld [vmem:[%s525] sm:$0xff]
      %v2359 = vlaneseq
      %v2360 = vshrl.u32 %v2359, 7
      %v2361 = vsub.s32 0, %v2360
      %v2362 = vrot.slane %v2357, %v2361
      %2364 = vbcast.lane.b32.xlu0 %v2362, 256
      %v2365 = vpop.permute.xlu0 %2364
      %s2367 = sor.u32 256, 8
      %2368 = vbcast.lane.b32.xlu0 %v2362, %s2367
      %v2369 = vpop.permute.xlu0 %2368
      %v2370 = vlaneseq
      %v2371 = vshrl.u32 %v2370, 7
      %v2372 = vsub.s32 1, %v2371
      %v2373 = vrot.slane %v2357, %v2372
      %2375 = vbcast.lane.b32.xlu0 %v2373, 256
      %v2376 = vpop.permute.xlu0 %2375
      %s2378 = sor.u32 256, 8
      %2379 = vbcast.lane.b32.xlu0 %v2373, %s2378
      %v2380 = vpop.permute.xlu0 %2379
      %v2381 = vlaneseq
      %v2382 = vshrl.u32 %v2381, 7
      %v2383 = vsub.s32 2, %v2382
      %v2384 = vrot.slane %v2357, %v2383
      %2386 = vbcast.lane.b32.xlu0 %v2384, 256
      %v2387 = vpop.permute.xlu0 %2386
      %s2389 = sor.u32 256, 8
      %2390 = vbcast.lane.b32.xlu0 %v2384, %s2389
      %v2391 = vpop.permute.xlu0 %2390
      %v2392 = vlaneseq
      %v2393 = vshrl.u32 %v2392, 7
      %v2394 = vsub.s32 3, %v2393
      %v2395 = vrot.slane %v2357, %v2394
      %2397 = vbcast.lane.b32.xlu0 %v2395, 256
      %v2398 = vpop.permute.xlu0 %2397
      %s2400 = sor.u32 256, 8
      %2401 = vbcast.lane.b32.xlu0 %v2395, %s2400
      %v2402 = vpop.permute.xlu0 %2401
      %v2403 = vlaneseq
      %v2404 = vshrl.u32 %v2403, 7
      %v2405 = vsub.s32 4, %v2404
      %v2406 = vrot.slane %v2357, %v2405
      %2408 = vbcast.lane.b32.xlu0 %v2406, 256
      %v2409 = vpop.permute.xlu0 %2408
      %s2411 = sor.u32 256, 8
      %2412 = vbcast.lane.b32.xlu0 %v2406, %s2411
      %v2413 = vpop.permute.xlu0 %2412
      %v2414 = vlaneseq
      %v2415 = vshrl.u32 %v2414, 7
      %v2416 = vsub.s32 5, %v2415
      %v2417 = vrot.slane %v2357, %v2416
      %2419 = vbcast.lane.b32.xlu0 %v2417, 256
      %v2420 = vpop.permute.xlu0 %2419
      %s2422 = sor.u32 256, 8
      %2423 = vbcast.lane.b32.xlu0 %v2417, %s2422
      %v2424 = vpop.permute.xlu0 %2423
      %v2425 = vlaneseq
      %v2426 = vshrl.u32 %v2425, 7
      %v2427 = vsub.s32 6, %v2426
      %v2428 = vrot.slane %v2357, %v2427
      %2430 = vbcast.lane.b32.xlu0 %v2428, 256
      %v2431 = vpop.permute.xlu0 %2430
      %s2433 = sor.u32 256, 8
      %2434 = vbcast.lane.b32.xlu0 %v2428, %s2433
      %v2435 = vpop.permute.xlu0 %2434
      %v2436 = vlaneseq
      %v2437 = vshrl.u32 %v2436, 7
      %v2438 = vsub.s32 7, %v2437
      %v2439 = vrot.slane %v2357, %v2438
      %2441 = vbcast.lane.b32.xlu0 %v2439, 256
      %v2442 = vpop.permute.xlu0 %2441
      %s2444 = sor.u32 256, 8
      %2445 = vbcast.lane.b32.xlu0 %v2439, %s2444
      %v2446 = vpop.permute.xlu0 %2445
      %v2463 = vadd.f32 %v2167, %v2365
      %v2464 = vadd.f32 %v2170, %v2369
      %v2465 = vadd.f32 %v2173, %v2376
      %v2466 = vadd.f32 %v2176, %v2380
      %v2467 = vadd.f32 %v2179, %v2387
      %v2468 = vadd.f32 %v2182, %v2391
      %v2469 = vadd.f32 %v2185, %v2398
      %v2470 = vadd.f32 %v2188, %v2402
      %v2471 = vadd.f32 %v2191, %v2409
      %v2472 = vadd.f32 %v2194, %v2413
      %v2473 = vadd.f32 %v2197, %v2420
      %v2474 = vadd.f32 %v2200, %v2424
      %v2475 = vadd.f32 %v2203, %v2431
      %v2476 = vadd.f32 %v2206, %v2435
      %v2477 = vadd.f32 %v2209, %v2442
      %v2478 = vadd.f32 %v2212, %v2446
      %v2479 = vadd.f32 %v2215, %v2365
      %v2480 = vadd.f32 %v2218, %v2369
      %v2481 = vadd.f32 %v2221, %v2376
      %v2482 = vadd.f32 %v2224, %v2380
      %v2483 = vadd.f32 %v2227, %v2387
      %v2484 = vadd.f32 %v2230, %v2391
      %v2485 = vadd.f32 %v2233, %v2398
      %v2486 = vadd.f32 %v2236, %v2402
      %v2487 = vadd.f32 %v2239, %v2409
      %v2488 = vadd.f32 %v2242, %v2413
      %v2489 = vadd.f32 %v2245, %v2420
      %v2490 = vadd.f32 %v2248, %v2424
      %v2491 = vadd.f32 %v2251, %v2431
      %v2492 = vadd.f32 %v2254, %v2435
      %v2493 = vadd.f32 %v2257, %v2442
      %v2494 = vadd.f32 %v2260, %v2446
      %v2495 = vadd.f32 %v2263, %v2365
      %v2496 = vadd.f32 %v2266, %v2369
      %v2497 = vadd.f32 %v2269, %v2376
      %v2498 = vadd.f32 %v2272, %v2380
      %v2499 = vadd.f32 %v2275, %v2387
      %v2500 = vadd.f32 %v2278, %v2391
      %v2501 = vadd.f32 %v2281, %v2398
      %v2502 = vadd.f32 %v2284, %v2402
      %v2503 = vadd.f32 %v2287, %v2409
      %v2504 = vadd.f32 %v2290, %v2413
      %v2505 = vadd.f32 %v2293, %v2420
      %v2506 = vadd.f32 %v2296, %v2424
      %v2507 = vadd.f32 %v2299, %v2431
      %v2508 = vadd.f32 %v2302, %v2435
      %v2509 = vadd.f32 %v2305, %v2442
      %v2510 = vadd.f32 %v2308, %v2446
      %v2511 = vadd.f32 %v2311, %v2365
      %v2512 = vadd.f32 %v2314, %v2369
      %v2513 = vadd.f32 %v2317, %v2376
      %v2514 = vadd.f32 %v2320, %v2380
      %v2515 = vadd.f32 %v2323, %v2387
      %v2516 = vadd.f32 %v2326, %v2391
      %v2517 = vadd.f32 %v2329, %v2398
      %v2518 = vadd.f32 %v2332, %v2402
      %v2519 = vadd.f32 %v2335, %v2409
      %v2520 = vadd.f32 %v2338, %v2413
      %v2521 = vadd.f32 %v2341, %v2420
      %v2522 = vadd.f32 %v2344, %v2424
      %v2523 = vadd.f32 %v2347, %v2431
      %v2524 = vadd.f32 %v2350, %v2435
      %v2525 = vadd.f32 %v2353, %v2442
      %v2526 = vadd.f32 %v2356, %v2446
      %2591 = vset.pattern.permute.xlu0 0
      %2592 = vperm.xlu0 %2591, %v2463
      %v2593 = vpop.permute.xlu0 %2592
      %2594 = vset.pattern.permute.xlu0 0
      %2595 = vperm.xlu0 %2594, %v2464
      %v2596 = vpop.permute.xlu0 %2595
      %2597 = vset.pattern.permute.xlu0 0
      %2598 = vperm.xlu0 %2597, %v2465
      %v2599 = vpop.permute.xlu0 %2598
      %2600 = vset.pattern.permute.xlu0 0
      %2601 = vperm.xlu0 %2600, %v2466
      %v2602 = vpop.permute.xlu0 %2601
      %2603 = vset.pattern.permute.xlu0 0
      %2604 = vperm.xlu0 %2603, %v2467
      %v2605 = vpop.permute.xlu0 %2604
      %2606 = vset.pattern.permute.xlu0 0
      %2607 = vperm.xlu0 %2606, %v2468
      %v2608 = vpop.permute.xlu0 %2607
      %2609 = vset.pattern.permute.xlu0 0
      %2610 = vperm.xlu0 %2609, %v2469
      %v2611 = vpop.permute.xlu0 %2610
      %2612 = vset.pattern.permute.xlu0 0
      %2613 = vperm.xlu0 %2612, %v2470
      %v2614 = vpop.permute.xlu0 %2613
      %2615 = vset.pattern.permute.xlu0 0
      %2616 = vperm.xlu0 %2615, %v2471
      %v2617 = vpop.permute.xlu0 %2616
      %2618 = vset.pattern.permute.xlu0 0
      %2619 = vperm.xlu0 %2618, %v2472
      %v2620 = vpop.permute.xlu0 %2619
      %2621 = vset.pattern.permute.xlu0 0
      %2622 = vperm.xlu0 %2621, %v2473
      %v2623 = vpop.permute.xlu0 %2622
      %2624 = vset.pattern.permute.xlu0 0
      %2625 = vperm.xlu0 %2624, %v2474
      %v2626 = vpop.permute.xlu0 %2625
      %2627 = vset.pattern.permute.xlu0 0
      %2628 = vperm.xlu0 %2627, %v2475
      %v2629 = vpop.permute.xlu0 %2628
      %2630 = vset.pattern.permute.xlu0 0
      %2631 = vperm.xlu0 %2630, %v2476
      %v2632 = vpop.permute.xlu0 %2631
      %2633 = vset.pattern.permute.xlu0 0
      %2634 = vperm.xlu0 %2633, %v2477
      %v2635 = vpop.permute.xlu0 %2634
      %2636 = vset.pattern.permute.xlu0 0
      %2637 = vperm.xlu0 %2636, %v2478
      %v2638 = vpop.permute.xlu0 %2637
      %2639 = vset.pattern.permute.xlu0 0
      %2640 = vperm.xlu0 %2639, %v2479
      %v2641 = vpop.permute.xlu0 %2640
      %2642 = vset.pattern.permute.xlu0 0
      %2643 = vperm.xlu0 %2642, %v2480
      %v2644 = vpop.permute.xlu0 %2643
      %2645 = vset.pattern.permute.xlu0 0
      %2646 = vperm.xlu0 %2645, %v2481
      %v2647 = vpop.permute.xlu0 %2646
      %2648 = vset.pattern.permute.xlu0 0
      %2649 = vperm.xlu0 %2648, %v2482
      %v2650 = vpop.permute.xlu0 %2649
      %2651 = vset.pattern.permute.xlu0 0
      %2652 = vperm.xlu0 %2651, %v2483
      %v2653 = vpop.permute.xlu0 %2652
      %2654 = vset.pattern.permute.xlu0 0
      %2655 = vperm.xlu0 %2654, %v2484
      %v2656 = vpop.permute.xlu0 %2655
      %2657 = vset.pattern.permute.xlu0 0
      %2658 = vperm.xlu0 %2657, %v2485
      %v2659 = vpop.permute.xlu0 %2658
      %2660 = vset.pattern.permute.xlu0 0
      %2661 = vperm.xlu0 %2660, %v2486
      %v2662 = vpop.permute.xlu0 %2661
      %2663 = vset.pattern.permute.xlu0 0
      %2664 = vperm.xlu0 %2663, %v2487
      %v2665 = vpop.permute.xlu0 %2664
      %2666 = vset.pattern.permute.xlu0 0
      %2667 = vperm.xlu0 %2666, %v2488
      %v2668 = vpop.permute.xlu0 %2667
      %2669 = vset.pattern.permute.xlu0 0
      %2670 = vperm.xlu0 %2669, %v2489
      %v2671 = vpop.permute.xlu0 %2670
      %2672 = vset.pattern.permute.xlu0 0
      %2673 = vperm.xlu0 %2672, %v2490
      %v2674 = vpop.permute.xlu0 %2673
      %2675 = vset.pattern.permute.xlu0 0
      %2676 = vperm.xlu0 %2675, %v2491
      %v2677 = vpop.permute.xlu0 %2676
      %2678 = vset.pattern.permute.xlu0 0
      %2679 = vperm.xlu0 %2678, %v2492
      %v2680 = vpop.permute.xlu0 %2679
      %2681 = vset.pattern.permute.xlu0 0
      %2682 = vperm.xlu0 %2681, %v2493
      %v2683 = vpop.permute.xlu0 %2682
      %2684 = vset.pattern.permute.xlu0 0
      %2685 = vperm.xlu0 %2684, %v2494
      %v2686 = vpop.permute.xlu0 %2685
      %2687 = vset.pattern.permute.xlu0 0
      %2688 = vperm.xlu0 %2687, %v2495
      %v2689 = vpop.permute.xlu0 %2688
      %2690 = vset.pattern.permute.xlu0 0
      %2691 = vperm.xlu0 %2690, %v2496
      %v2692 = vpop.permute.xlu0 %2691
      %2693 = vset.pattern.permute.xlu0 0
      %2694 = vperm.xlu0 %2693, %v2497
      %v2695 = vpop.permute.xlu0 %2694
      %2696 = vset.pattern.permute.xlu0 0
      %2697 = vperm.xlu0 %2696, %v2498
      %v2698 = vpop.permute.xlu0 %2697
      %2699 = vset.pattern.permute.xlu0 0
      %2700 = vperm.xlu0 %2699, %v2499
      %v2701 = vpop.permute.xlu0 %2700
      %2702 = vset.pattern.permute.xlu0 0
      %2703 = vperm.xlu0 %2702, %v2500
      %v2704 = vpop.permute.xlu0 %2703
      %2705 = vset.pattern.permute.xlu0 0
      %2706 = vperm.xlu0 %2705, %v2501
      %v2707 = vpop.permute.xlu0 %2706
      %2708 = vset.pattern.permute.xlu0 0
      %2709 = vperm.xlu0 %2708, %v2502
      %v2710 = vpop.permute.xlu0 %2709
      %2711 = vset.pattern.permute.xlu0 0
      %2712 = vperm.xlu0 %2711, %v2503
      %v2713 = vpop.permute.xlu0 %2712
      %2714 = vset.pattern.permute.xlu0 0
      %2715 = vperm.xlu0 %2714, %v2504
      %v2716 = vpop.permute.xlu0 %2715
      %2717 = vset.pattern.permute.xlu0 0
      %2718 = vperm.xlu0 %2717, %v2505
      %v2719 = vpop.permute.xlu0 %2718
      %2720 = vset.pattern.permute.xlu0 0
      %2721 = vperm.xlu0 %2720, %v2506
      %v2722 = vpop.permute.xlu0 %2721
      %2723 = vset.pattern.permute.xlu0 0
      %2724 = vperm.xlu0 %2723, %v2507
      %v2725 = vpop.permute.xlu0 %2724
      %2726 = vset.pattern.permute.xlu0 0
      %2727 = vperm.xlu0 %2726, %v2508
      %v2728 = vpop.permute.xlu0 %2727
      %2729 = vset.pattern.permute.xlu0 0
      %2730 = vperm.xlu0 %2729, %v2509
      %v2731 = vpop.permute.xlu0 %2730
      %2732 = vset.pattern.permute.xlu0 0
      %2733 = vperm.xlu0 %2732, %v2510
      %v2734 = vpop.permute.xlu0 %2733
      %2735 = vset.pattern.permute.xlu0 0
      %2736 = vperm.xlu0 %2735, %v2511
      %v2737 = vpop.permute.xlu0 %2736
      %2738 = vset.pattern.permute.xlu0 0
      %2739 = vperm.xlu0 %2738, %v2512
      %v2740 = vpop.permute.xlu0 %2739
      %2741 = vset.pattern.permute.xlu0 0
      %2742 = vperm.xlu0 %2741, %v2513
      %v2743 = vpop.permute.xlu0 %2742
      %2744 = vset.pattern.permute.xlu0 0
      %2745 = vperm.xlu0 %2744, %v2514
      %v2746 = vpop.permute.xlu0 %2745
      %2747 = vset.pattern.permute.xlu0 0
      %2748 = vperm.xlu0 %2747, %v2515
      %v2749 = vpop.permute.xlu0 %2748
      %2750 = vset.pattern.permute.xlu0 0
      %2751 = vperm.xlu0 %2750, %v2516
      %v2752 = vpop.permute.xlu0 %2751
      %2753 = vset.pattern.permute.xlu0 0
      %2754 = vperm.xlu0 %2753, %v2517
      %v2755 = vpop.permute.xlu0 %2754
      %2756 = vset.pattern.permute.xlu0 0
      %2757 = vperm.xlu0 %2756, %v2518
      %v2758 = vpop.permute.xlu0 %2757
      %2759 = vset.pattern.permute.xlu0 0
      %2760 = vperm.xlu0 %2759, %v2519
      %v2761 = vpop.permute.xlu0 %2760
      %2762 = vset.pattern.permute.xlu0 0
      %2763 = vperm.xlu0 %2762, %v2520
      %v2764 = vpop.permute.xlu0 %2763
      %2765 = vset.pattern.permute.xlu0 0
      %2766 = vperm.xlu0 %2765, %v2521
      %v2767 = vpop.permute.xlu0 %2766
      %2768 = vset.pattern.permute.xlu0 0
      %2769 = vperm.xlu0 %2768, %v2522
      %v2770 = vpop.permute.xlu0 %2769
      %2771 = vset.pattern.permute.xlu0 0
      %2772 = vperm.xlu0 %2771, %v2523
      %v2773 = vpop.permute.xlu0 %2772
      %2774 = vset.pattern.permute.xlu0 0
      %2775 = vperm.xlu0 %2774, %v2524
      %v2776 = vpop.permute.xlu0 %2775
      %2777 = vset.pattern.permute.xlu0 0
      %2778 = vperm.xlu0 %2777, %v2525
      %v2779 = vpop.permute.xlu0 %2778
      %2780 = vset.pattern.permute.xlu0 0
      %2781 = vperm.xlu0 %2780, %v2526
      %v2782 = vpop.permute.xlu0 %2781
      %v2783 = vlaneseq
      %v2784 = vand.u32 %v2783, 127
      %v2785 = vlaneseq
      %v2786 = vshrl.u32 %v2785, 7
      %v2787 = vsub.s32 %v2784, %v2786
      %v2788 = vrot.slane %v2593, %v2787
      %v2789 = vadd.s32 %v2784, 4294967288
      %v2790 = vlaneseq
      %v2791 = vshrl.u32 %v2790, 7
      %v2792 = vsub.s32 %v2789, %v2791
      %v2793 = vrot.slane %v2596, %v2792
      %vm2794 = vcmask 130112
      %v2795 = vsel %vm2794, %v2793, %v2788
      %v2796 = vlaneseq
      %v2797 = vshrl.u32 %v2796, 7
      %v2798 = vsub.s32 %v2784, %v2797
      %v2799 = vrot.slane %v2599, %v2798
      %v2800 = vlaneseq
      %v2801 = vshrl.u32 %v2800, 7
      %v2802 = vsub.s32 %v2789, %v2801
      %v2803 = vrot.slane %v2602, %v2802
      %v2804 = vsel %vm2794, %v2803, %v2799
      %v2805 = vlaneseq
      %v2806 = vshrl.u32 %v2805, 7
      %v2807 = vsub.s32 %v2784, %v2806
      %v2808 = vrot.slane %v2605, %v2807
      %v2809 = vlaneseq
      %v2810 = vshrl.u32 %v2809, 7
      %v2811 = vsub.s32 %v2789, %v2810
      %v2812 = vrot.slane %v2608, %v2811
      %v2813 = vsel %vm2794, %v2812, %v2808
      %v2814 = vlaneseq
      %v2815 = vshrl.u32 %v2814, 7
      %v2816 = vsub.s32 %v2784, %v2815
      %v2817 = vrot.slane %v2611, %v2816
      %v2818 = vlaneseq
      %v2819 = vshrl.u32 %v2818, 7
      %v2820 = vsub.s32 %v2789, %v2819
      %v2821 = vrot.slane %v2614, %v2820
      %v2822 = vsel %vm2794, %v2821, %v2817
      %v2823 = vlaneseq
      %v2824 = vshrl.u32 %v2823, 7
      %v2825 = vsub.s32 %v2784, %v2824
      %v2826 = vrot.slane %v2617, %v2825
      %v2827 = vlaneseq
      %v2828 = vshrl.u32 %v2827, 7
      %v2829 = vsub.s32 %v2789, %v2828
      %v2830 = vrot.slane %v2620, %v2829
      %v2831 = vsel %vm2794, %v2830, %v2826
      %v2832 = vlaneseq
      %v2833 = vshrl.u32 %v2832, 7
      %v2834 = vsub.s32 %v2784, %v2833
      %v2835 = vrot.slane %v2623, %v2834
      %v2836 = vlaneseq
      %v2837 = vshrl.u32 %v2836, 7
      %v2838 = vsub.s32 %v2789, %v2837
      %v2839 = vrot.slane %v2626, %v2838
      %v2840 = vsel %vm2794, %v2839, %v2835
      %v2841 = vlaneseq
      %v2842 = vshrl.u32 %v2841, 7
      %v2843 = vsub.s32 %v2784, %v2842
      %v2844 = vrot.slane %v2629, %v2843
      %v2845 = vlaneseq
      %v2846 = vshrl.u32 %v2845, 7
      %v2847 = vsub.s32 %v2789, %v2846
      %v2848 = vrot.slane %v2632, %v2847
      %v2849 = vsel %vm2794, %v2848, %v2844
      %v2850 = vlaneseq
      %v2851 = vshrl.u32 %v2850, 7
      %v2852 = vsub.s32 %v2784, %v2851
      %v2853 = vrot.slane %v2635, %v2852
      %v2854 = vlaneseq
      %v2855 = vshrl.u32 %v2854, 7
      %v2856 = vsub.s32 %v2789, %v2855
      %v2857 = vrot.slane %v2638, %v2856
      %v2858 = vsel %vm2794, %v2857, %v2853
      %v2859 = vlaneseq
      %v2860 = vshrl.u32 %v2859, 7
      %v2861 = vsub.s32 %v2784, %v2860
      %v2862 = vrot.slane %v2641, %v2861
      %v2863 = vlaneseq
      %v2864 = vshrl.u32 %v2863, 7
      %v2865 = vsub.s32 %v2789, %v2864
      %v2866 = vrot.slane %v2644, %v2865
      %v2867 = vsel %vm2794, %v2866, %v2862
      %v2868 = vlaneseq
      %v2869 = vshrl.u32 %v2868, 7
      %v2870 = vsub.s32 %v2784, %v2869
      %v2871 = vrot.slane %v2647, %v2870
      %v2872 = vlaneseq
      %v2873 = vshrl.u32 %v2872, 7
      %v2874 = vsub.s32 %v2789, %v2873
      %v2875 = vrot.slane %v2650, %v2874
      %v2876 = vsel %vm2794, %v2875, %v2871
      %v2877 = vlaneseq
      %v2878 = vshrl.u32 %v2877, 7
      %v2879 = vsub.s32 %v2784, %v2878
      %v2880 = vrot.slane %v2653, %v2879
      %v2881 = vlaneseq
      %v2882 = vshrl.u32 %v2881, 7
      %v2883 = vsub.s32 %v2789, %v2882
      %v2884 = vrot.slane %v2656, %v2883
      %v2885 = vsel %vm2794, %v2884, %v2880
      %v2886 = vlaneseq
      %v2887 = vshrl.u32 %v2886, 7
      %v2888 = vsub.s32 %v2784, %v2887
      %v2889 = vrot.slane %v2659, %v2888
      %v2890 = vlaneseq
      %v2891 = vshrl.u32 %v2890, 7
      %v2892 = vsub.s32 %v2789, %v2891
      %v2893 = vrot.slane %v2662, %v2892
      %v2894 = vsel %vm2794, %v2893, %v2889
      %v2895 = vlaneseq
      %v2896 = vshrl.u32 %v2895, 7
      %v2897 = vsub.s32 %v2784, %v2896
      %v2898 = vrot.slane %v2665, %v2897
      %v2899 = vlaneseq
      %v2900 = vshrl.u32 %v2899, 7
      %v2901 = vsub.s32 %v2789, %v2900
      %v2902 = vrot.slane %v2668, %v2901
      %v2903 = vsel %vm2794, %v2902, %v2898
      %v2904 = vlaneseq
      %v2905 = vshrl.u32 %v2904, 7
      %v2906 = vsub.s32 %v2784, %v2905
      %v2907 = vrot.slane %v2671, %v2906
      %v2908 = vlaneseq
      %v2909 = vshrl.u32 %v2908, 7
      %v2910 = vsub.s32 %v2789, %v2909
      %v2911 = vrot.slane %v2674, %v2910
      %v2912 = vsel %vm2794, %v2911, %v2907
      %v2913 = vlaneseq
      %v2914 = vshrl.u32 %v2913, 7
      %v2915 = vsub.s32 %v2784, %v2914
      %v2916 = vrot.slane %v2677, %v2915
      %v2917 = vlaneseq
      %v2918 = vshrl.u32 %v2917, 7
      %v2919 = vsub.s32 %v2789, %v2918
      %v2920 = vrot.slane %v2680, %v2919
      %v2921 = vsel %vm2794, %v2920, %v2916
      %v2922 = vlaneseq
      %v2923 = vshrl.u32 %v2922, 7
      %v2924 = vsub.s32 %v2784, %v2923
      %v2925 = vrot.slane %v2683, %v2924
      %v2926 = vlaneseq
      %v2927 = vshrl.u32 %v2926, 7
      %v2928 = vsub.s32 %v2789, %v2927
      %v2929 = vrot.slane %v2686, %v2928
      %v2930 = vsel %vm2794, %v2929, %v2925
      %v2931 = vlaneseq
      %v2932 = vshrl.u32 %v2931, 7
      %v2933 = vsub.s32 %v2784, %v2932
      %v2934 = vrot.slane %v2689, %v2933
      %v2935 = vlaneseq
      %v2936 = vshrl.u32 %v2935, 7
      %v2937 = vsub.s32 %v2789, %v2936
      %v2938 = vrot.slane %v2692, %v2937
      %v2939 = vsel %vm2794, %v2938, %v2934
      %v2940 = vlaneseq
      %v2941 = vshrl.u32 %v2940, 7
      %v2942 = vsub.s32 %v2784, %v2941
      %v2943 = vrot.slane %v2695, %v2942
      %v2944 = vlaneseq
      %v2945 = vshrl.u32 %v2944, 7
      %v2946 = vsub.s32 %v2789, %v2945
      %v2947 = vrot.slane %v2698, %v2946
      %v2948 = vsel %vm2794, %v2947, %v2943
      %v2949 = vlaneseq
      %v2950 = vshrl.u32 %v2949, 7
      %v2951 = vsub.s32 %v2784, %v2950
      %v2952 = vrot.slane %v2701, %v2951
      %v2953 = vlaneseq
      %v2954 = vshrl.u32 %v2953, 7
      %v2955 = vsub.s32 %v2789, %v2954
      %v2956 = vrot.slane %v2704, %v2955
      %v2957 = vsel %vm2794, %v2956, %v2952
      %v2958 = vlaneseq
      %v2959 = vshrl.u32 %v2958, 7
      %v2960 = vsub.s32 %v2784, %v2959
      %v2961 = vrot.slane %v2707, %v2960
      %v2962 = vlaneseq
      %v2963 = vshrl.u32 %v2962, 7
      %v2964 = vsub.s32 %v2789, %v2963
      %v2965 = vrot.slane %v2710, %v2964
      %v2966 = vsel %vm2794, %v2965, %v2961
      %v2967 = vlaneseq
      %v2968 = vshrl.u32 %v2967, 7
      %v2969 = vsub.s32 %v2784, %v2968
      %v2970 = vrot.slane %v2713, %v2969
      %v2971 = vlaneseq
      %v2972 = vshrl.u32 %v2971, 7
      %v2973 = vsub.s32 %v2789, %v2972
      %v2974 = vrot.slane %v2716, %v2973
      %v2975 = vsel %vm2794, %v2974, %v2970
      %v2976 = vlaneseq
      %v2977 = vshrl.u32 %v2976, 7
      %v2978 = vsub.s32 %v2784, %v2977
      %v2979 = vrot.slane %v2719, %v2978
      %v2980 = vlaneseq
      %v2981 = vshrl.u32 %v2980, 7
      %v2982 = vsub.s32 %v2789, %v2981
      %v2983 = vrot.slane %v2722, %v2982
      %v2984 = vsel %vm2794, %v2983, %v2979
      %v2985 = vlaneseq
      %v2986 = vshrl.u32 %v2985, 7
      %v2987 = vsub.s32 %v2784, %v2986
      %v2988 = vrot.slane %v2725, %v2987
      %v2989 = vlaneseq
      %v2990 = vshrl.u32 %v2989, 7
      %v2991 = vsub.s32 %v2789, %v2990
      %v2992 = vrot.slane %v2728, %v2991
      %v2993 = vsel %vm2794, %v2992, %v2988
      %v2994 = vlaneseq
      %v2995 = vshrl.u32 %v2994, 7
      %v2996 = vsub.s32 %v2784, %v2995
      %v2997 = vrot.slane %v2731, %v2996
      %v2998 = vlaneseq
      %v2999 = vshrl.u32 %v2998, 7
      %v3000 = vsub.s32 %v2789, %v2999
      %v3001 = vrot.slane %v2734, %v3000
      %v3002 = vsel %vm2794, %v3001, %v2997
      %v3003 = vlaneseq
      %v3004 = vshrl.u32 %v3003, 7
      %v3005 = vsub.s32 %v2784, %v3004
      %v3006 = vrot.slane %v2737, %v3005
      %v3007 = vlaneseq
      %v3008 = vshrl.u32 %v3007, 7
      %v3009 = vsub.s32 %v2789, %v3008
      %v3010 = vrot.slane %v2740, %v3009
      %v3011 = vsel %vm2794, %v3010, %v3006
      %v3012 = vlaneseq
      %v3013 = vshrl.u32 %v3012, 7
      %v3014 = vsub.s32 %v2784, %v3013
      %v3015 = vrot.slane %v2743, %v3014
      %v3016 = vlaneseq
      %v3017 = vshrl.u32 %v3016, 7
      %v3018 = vsub.s32 %v2789, %v3017
      %v3019 = vrot.slane %v2746, %v3018
      %v3020 = vsel %vm2794, %v3019, %v3015
      %v3021 = vlaneseq
      %v3022 = vshrl.u32 %v3021, 7
      %v3023 = vsub.s32 %v2784, %v3022
      %v3024 = vrot.slane %v2749, %v3023
      %v3025 = vlaneseq
      %v3026 = vshrl.u32 %v3025, 7
      %v3027 = vsub.s32 %v2789, %v3026
      %v3028 = vrot.slane %v2752, %v3027
      %v3029 = vsel %vm2794, %v3028, %v3024
      %v3030 = vlaneseq
      %v3031 = vshrl.u32 %v3030, 7
      %v3032 = vsub.s32 %v2784, %v3031
      %v3033 = vrot.slane %v2755, %v3032
      %v3034 = vlaneseq
      %v3035 = vshrl.u32 %v3034, 7
      %v3036 = vsub.s32 %v2789, %v3035
      %v3037 = vrot.slane %v2758, %v3036
      %v3038 = vsel %vm2794, %v3037, %v3033
      %v3039 = vlaneseq
      %v3040 = vshrl.u32 %v3039, 7
      %v3041 = vsub.s32 %v2784, %v3040
      %v3042 = vrot.slane %v2761, %v3041
      %v3043 = vlaneseq
      %v3044 = vshrl.u32 %v3043, 7
      %v3045 = vsub.s32 %v2789, %v3044
      %v3046 = vrot.slane %v2764, %v3045
      %v3047 = vsel %vm2794, %v3046, %v3042
      %v3048 = vlaneseq
      %v3049 = vshrl.u32 %v3048, 7
      %v3050 = vsub.s32 %v2784, %v3049
      %v3051 = vrot.slane %v2767, %v3050
      %v3052 = vlaneseq
      %v3053 = vshrl.u32 %v3052, 7
      %v3054 = vsub.s32 %v2789, %v3053
      %v3055 = vrot.slane %v2770, %v3054
      %v3056 = vsel %vm2794, %v3055, %v3051
      %v3057 = vlaneseq
      %v3058 = vshrl.u32 %v3057, 7
      %v3059 = vsub.s32 %v2784, %v3058
      %v3060 = vrot.slane %v2773, %v3059
      %v3061 = vlaneseq
      %v3062 = vshrl.u32 %v3061, 7
      %v3063 = vsub.s32 %v2789, %v3062
      %v3064 = vrot.slane %v2776, %v3063
      %v3065 = vsel %vm2794, %v3064, %v3060
      %v3066 = vlaneseq
      %v3067 = vshrl.u32 %v3066, 7
      %v3068 = vsub.s32 %v2784, %v3067
      %v3069 = vrot.slane %v2779, %v3068
      %v3070 = vlaneseq
      %v3071 = vshrl.u32 %v3070, 7
      %v3072 = vsub.s32 %v2789, %v3071
      %v3073 = vrot.slane %v2782, %v3072
      %v3074 = vsel %vm2794, %v3073, %v3069
      %vm3075 = vcmask 1041409
      %v3076 = vsel %vm3075, %v2804, %v2795
      %vm3077 = vcmask 1042434
      %v3078 = vsel %vm3077, %v2813, %v3076
      %vm3079 = vcmask 1043459
      %v3080 = vsel %vm3079, %v2822, %v3078
      %vm3081 = vcmask 1044484
      %v3082 = vsel %vm3081, %v2831, %v3080
      %vm3083 = vcmask 1045509
      %v3084 = vsel %vm3083, %v2840, %v3082
      %vm3085 = vcmask 1046534
      %v3086 = vsel %vm3085, %v2849, %v3084
      %vm3087 = vcmask 1047559
      %v3088 = vsel %vm3087, %v2858, %v3086
      %v3089 = vsel %vm3075, %v2876, %v2867
      %v3090 = vsel %vm3077, %v2885, %v3089
      %v3091 = vsel %vm3079, %v2894, %v3090
      %v3092 = vsel %vm3081, %v2903, %v3091
      %v3093 = vsel %vm3083, %v2912, %v3092
      %v3094 = vsel %vm3085, %v2921, %v3093
      %v3095 = vsel %vm3087, %v2930, %v3094
      %v3096 = vsel %vm3075, %v2948, %v2939
      %v3097 = vsel %vm3077, %v2957, %v3096
      %v3098 = vsel %vm3079, %v2966, %v3097
      %v3099 = vsel %vm3081, %v2975, %v3098
      %v3100 = vsel %vm3083, %v2984, %v3099
      %v3101 = vsel %vm3085, %v2993, %v3100
      %v3102 = vsel %vm3087, %v3002, %v3101
      %v3103 = vsel %vm3075, %v3020, %v3011
      %v3104 = vsel %vm3077, %v3029, %v3103
      %v3105 = vsel %vm3079, %v3038, %v3104
      %v3106 = vsel %vm3081, %v3047, %v3105
      %v3107 = vsel %vm3083, %v3056, %v3106
      %v3108 = vsel %vm3085, %v3065, %v3107
      %v3109 = vsel %vm3087, %v3074, %v3108
      %vm3114 = vcmask 130048
      %v3115 = vsel %vm3114, %v3088, -inf
      %3116 = vmax.xlane.f32.xlu0 %v3115
      %v3117 = vpop.xlane.xlu0 %3116
      %v3118 = vsel %vm3114, %v3095, -inf
      %3119 = vmax.xlane.f32.xlu0 %v3118
      %v3120 = vpop.xlane.xlu0 %3119
      %v3121 = vsel %vm3114, %v3102, -inf
      %3122 = vmax.xlane.f32.xlu0 %v3121
      %v3123 = vpop.xlane.xlu0 %3122
      %v3124 = vsel %vm3114, %v3109, -inf
      %3125 = vmax.xlane.f32.xlu0 %v3124
      %v3126 = vpop.xlane.xlu0 %3125
      %v3131 = vlaneseq
      %v3132 = vshrl.u32 %v3131, 7
      %v3133 = vsub.s32 0, %v3132
      %v3134 = vrot.slane %v3117, %v3133
      %v3135 = vlaneseq
      %v3136 = vshrl.u32 %v3135, 7
      %v3137 = vsub.s32 1, %v3136
      %v3138 = vrot.slane %v3117, %v3137
      %v3139 = vlaneseq
      %v3140 = vshrl.u32 %v3139, 7
      %v3141 = vsub.s32 2, %v3140
      %v3142 = vrot.slane %v3117, %v3141
      %v3143 = vlaneseq
      %v3144 = vshrl.u32 %v3143, 7
      %v3145 = vsub.s32 3, %v3144
      %v3146 = vrot.slane %v3117, %v3145
      %v3147 = vlaneseq
      %v3148 = vshrl.u32 %v3147, 7
      %v3149 = vsub.s32 4, %v3148
      %v3150 = vrot.slane %v3117, %v3149
      %v3151 = vlaneseq
      %v3152 = vshrl.u32 %v3151, 7
      %v3153 = vsub.s32 5, %v3152
      %v3154 = vrot.slane %v3117, %v3153
      %v3155 = vlaneseq
      %v3156 = vshrl.u32 %v3155, 7
      %v3157 = vsub.s32 6, %v3156
      %v3158 = vrot.slane %v3117, %v3157
      %v3159 = vlaneseq
      %v3160 = vshrl.u32 %v3159, 7
      %v3161 = vsub.s32 7, %v3160
      %v3162 = vrot.slane %v3117, %v3161
      %v3163 = vlaneseq
      %v3164 = vshrl.u32 %v3163, 7
      %v3165 = vsub.s32 0, %v3164
      %v3166 = vrot.slane %v3120, %v3165
      %v3167 = vlaneseq
      %v3168 = vshrl.u32 %v3167, 7
      %v3169 = vsub.s32 1, %v3168
      %v3170 = vrot.slane %v3120, %v3169
      %v3171 = vlaneseq
      %v3172 = vshrl.u32 %v3171, 7
      %v3173 = vsub.s32 2, %v3172
      %v3174 = vrot.slane %v3120, %v3173
      %v3175 = vlaneseq
      %v3176 = vshrl.u32 %v3175, 7
      %v3177 = vsub.s32 3, %v3176
      %v3178 = vrot.slane %v3120, %v3177
      %v3179 = vlaneseq
      %v3180 = vshrl.u32 %v3179, 7
      %v3181 = vsub.s32 4, %v3180
      %v3182 = vrot.slane %v3120, %v3181
      %v3183 = vlaneseq
      %v3184 = vshrl.u32 %v3183, 7
      %v3185 = vsub.s32 5, %v3184
      %v3186 = vrot.slane %v3120, %v3185
      %v3187 = vlaneseq
      %v3188 = vshrl.u32 %v3187, 7
      %v3189 = vsub.s32 6, %v3188
      %v3190 = vrot.slane %v3120, %v3189
      %v3191 = vlaneseq
      %v3192 = vshrl.u32 %v3191, 7
      %v3193 = vsub.s32 7, %v3192
      %v3194 = vrot.slane %v3120, %v3193
      %v3195 = vlaneseq
      %v3196 = vshrl.u32 %v3195, 7
      %v3197 = vsub.s32 0, %v3196
      %v3198 = vrot.slane %v3123, %v3197
      %v3199 = vlaneseq
      %v3200 = vshrl.u32 %v3199, 7
      %v3201 = vsub.s32 1, %v3200
      %v3202 = vrot.slane %v3123, %v3201
      %v3203 = vlaneseq
      %v3204 = vshrl.u32 %v3203, 7
      %v3205 = vsub.s32 2, %v3204
      %v3206 = vrot.slane %v3123, %v3205
      %v3207 = vlaneseq
      %v3208 = vshrl.u32 %v3207, 7
      %v3209 = vsub.s32 3, %v3208
      %v3210 = vrot.slane %v3123, %v3209
      %v3211 = vlaneseq
      %v3212 = vshrl.u32 %v3211, 7
      %v3213 = vsub.s32 4, %v3212
      %v3214 = vrot.slane %v3123, %v3213
      %v3215 = vlaneseq
      %v3216 = vshrl.u32 %v3215, 7
      %v3217 = vsub.s32 5, %v3216
      %v3218 = vrot.slane %v3123, %v3217
      %v3219 = vlaneseq
      %v3220 = vshrl.u32 %v3219, 7
      %v3221 = vsub.s32 6, %v3220
      %v3222 = vrot.slane %v3123, %v3221
      %v3223 = vlaneseq
      %v3224 = vshrl.u32 %v3223, 7
      %v3225 = vsub.s32 7, %v3224
      %v3226 = vrot.slane %v3123, %v3225
      %v3227 = vlaneseq
      %v3228 = vshrl.u32 %v3227, 7
      %v3229 = vsub.s32 0, %v3228
      %v3230 = vrot.slane %v3126, %v3229
      %v3231 = vlaneseq
      %v3232 = vshrl.u32 %v3231, 7
      %v3233 = vsub.s32 1, %v3232
      %v3234 = vrot.slane %v3126, %v3233
      %v3235 = vlaneseq
      %v3236 = vshrl.u32 %v3235, 7
      %v3237 = vsub.s32 2, %v3236
      %v3238 = vrot.slane %v3126, %v3237
      %v3239 = vlaneseq
      %v3240 = vshrl.u32 %v3239, 7
      %v3241 = vsub.s32 3, %v3240
      %v3242 = vrot.slane %v3126, %v3241
      %v3243 = vlaneseq
      %v3244 = vshrl.u32 %v3243, 7
      %v3245 = vsub.s32 4, %v3244
      %v3246 = vrot.slane %v3126, %v3245
      %v3247 = vlaneseq
      %v3248 = vshrl.u32 %v3247, 7
      %v3249 = vsub.s32 5, %v3248
      %v3250 = vrot.slane %v3126, %v3249
      %v3251 = vlaneseq
      %v3252 = vshrl.u32 %v3251, 7
      %v3253 = vsub.s32 6, %v3252
      %v3254 = vrot.slane %v3126, %v3253
      %v3255 = vlaneseq
      %v3256 = vshrl.u32 %v3255, 7
      %v3257 = vsub.s32 7, %v3256
      %v3258 = vrot.slane %v3126, %v3257
      %v3291 = vsub.f32 %v2463, %v3134
      %v3292 = vsub.f32 %v2464, %v3134
      %v3293 = vsub.f32 %v2465, %v3138
      %v3294 = vsub.f32 %v2466, %v3138
      %v3295 = vsub.f32 %v2467, %v3142
      %v3296 = vsub.f32 %v2468, %v3142
      %v3297 = vsub.f32 %v2469, %v3146
      %v3298 = vsub.f32 %v2470, %v3146
      %v3299 = vsub.f32 %v2471, %v3150
      %v3300 = vsub.f32 %v2472, %v3150
      %v3301 = vsub.f32 %v2473, %v3154
      %v3302 = vsub.f32 %v2474, %v3154
      %v3303 = vsub.f32 %v2475, %v3158
      %v3304 = vsub.f32 %v2476, %v3158
      %v3305 = vsub.f32 %v2477, %v3162
      %v3306 = vsub.f32 %v2478, %v3162
      %v3307 = vsub.f32 %v2479, %v3166
      %v3308 = vsub.f32 %v2480, %v3166
      %v3309 = vsub.f32 %v2481, %v3170
      %v3310 = vsub.f32 %v2482, %v3170
      %v3311 = vsub.f32 %v2483, %v3174
      %v3312 = vsub.f32 %v2484, %v3174
      %v3313 = vsub.f32 %v2485, %v3178
      %v3314 = vsub.f32 %v2486, %v3178
      %v3315 = vsub.f32 %v2487, %v3182
      %v3316 = vsub.f32 %v2488, %v3182
      %v3317 = vsub.f32 %v2489, %v3186
      %v3318 = vsub.f32 %v2490, %v3186
      %v3319 = vsub.f32 %v2491, %v3190
      %v3320 = vsub.f32 %v2492, %v3190
      %v3321 = vsub.f32 %v2493, %v3194
      %v3322 = vsub.f32 %v2494, %v3194
      %v3323 = vsub.f32 %v2495, %v3198
      %v3324 = vsub.f32 %v2496, %v3198
      %v3325 = vsub.f32 %v2497, %v3202
      %v3326 = vsub.f32 %v2498, %v3202
      %v3327 = vsub.f32 %v2499, %v3206
      %v3328 = vsub.f32 %v2500, %v3206
      %v3329 = vsub.f32 %v2501, %v3210
      %v3330 = vsub.f32 %v2502, %v3210
      %v3331 = vsub.f32 %v2503, %v3214
      %v3332 = vsub.f32 %v2504, %v3214
      %v3333 = vsub.f32 %v2505, %v3218
      %v3334 = vsub.f32 %v2506, %v3218
      %v3335 = vsub.f32 %v2507, %v3222
      %v3336 = vsub.f32 %v2508, %v3222
      %v3337 = vsub.f32 %v2509, %v3226
      %v3338 = vsub.f32 %v2510, %v3226
      %v3339 = vsub.f32 %v2511, %v3230
      %v3340 = vsub.f32 %v2512, %v3230
      %v3341 = vsub.f32 %v2513, %v3234
      %v3342 = vsub.f32 %v2514, %v3234
      %v3343 = vsub.f32 %v2515, %v3238
      %v3344 = vsub.f32 %v2516, %v3238
      %v3345 = vsub.f32 %v2517, %v3242
      %v3346 = vsub.f32 %v2518, %v3242
      %v3347 = vsub.f32 %v2519, %v3246
      %v3348 = vsub.f32 %v2520, %v3246
      %v3349 = vsub.f32 %v2521, %v3250
      %v3350 = vsub.f32 %v2522, %v3250
      %v3351 = vsub.f32 %v2523, %v3254
      %v3352 = vsub.f32 %v2524, %v3254
      %v3353 = vsub.f32 %v2525, %v3258
      %v3354 = vsub.f32 %v2526, %v3258
      %v3355 = vmul.f32 %v3291, 1.442695
      %v3356 = vpow.pop %v3355
      %v3357 = vmul.f32 %v3292, 1.442695
      %v3358 = vpow.pop %v3357
      %v3359 = vmul.f32 %v3293, 1.442695
      %v3360 = vpow.pop %v3359
      %v3361 = vmul.f32 %v3294, 1.442695
      %v3362 = vpow.pop %v3361
      %v3363 = vmul.f32 %v3295, 1.442695
      %v3364 = vpow.pop %v3363
      %v3365 = vmul.f32 %v3296, 1.442695
      %v3366 = vpow.pop %v3365
      %v3367 = vmul.f32 %v3297, 1.442695
      %v3368 = vpow.pop %v3367
      %v3369 = vmul.f32 %v3298, 1.442695
      %v3370 = vpow.pop %v3369
      %v3371 = vmul.f32 %v3299, 1.442695
      %v3372 = vpow.pop %v3371
      %v3373 = vmul.f32 %v3300, 1.442695
      %v3374 = vpow.pop %v3373
      %v3375 = vmul.f32 %v3301, 1.442695
      %v3376 = vpow.pop %v3375
      %v3377 = vmul.f32 %v3302, 1.442695
      %v3378 = vpow.pop %v3377
      %v3379 = vmul.f32 %v3303, 1.442695
      %v3380 = vpow.pop %v3379
      %v3381 = vmul.f32 %v3304, 1.442695
      %v3382 = vpow.pop %v3381
      %v3383 = vmul.f32 %v3305, 1.442695
      %v3384 = vpow.pop %v3383
      %v3385 = vmul.f32 %v3306, 1.442695
      %v3386 = vpow.pop %v3385
      %v3387 = vmul.f32 %v3307, 1.442695
      %v3388 = vpow.pop %v3387
      %v3389 = vmul.f32 %v3308, 1.442695
      %v3390 = vpow.pop %v3389
      %v3391 = vmul.f32 %v3309, 1.442695
      %v3392 = vpow.pop %v3391
      %v3393 = vmul.f32 %v3310, 1.442695
      %v3394 = vpow.pop %v3393
      %v3395 = vmul.f32 %v3311, 1.442695
      %v3396 = vpow.pop %v3395
      %v3397 = vmul.f32 %v3312, 1.442695
      %v3398 = vpow.pop %v3397
      %v3399 = vmul.f32 %v3313, 1.442695
      %v3400 = vpow.pop %v3399
      %v3401 = vmul.f32 %v3314, 1.442695
      %v3402 = vpow.pop %v3401
      %v3403 = vmul.f32 %v3315, 1.442695
      %v3404 = vpow.pop %v3403
      %v3405 = vmul.f32 %v3316, 1.442695
      %v3406 = vpow.pop %v3405
      %v3407 = vmul.f32 %v3317, 1.442695
      %v3408 = vpow.pop %v3407
      %v3409 = vmul.f32 %v3318, 1.442695
      %v3410 = vpow.pop %v3409
      %v3411 = vmul.f32 %v3319, 1.442695
      %v3412 = vpow.pop %v3411
      %v3413 = vmul.f32 %v3320, 1.442695
      %v3414 = vpow.pop %v3413
      %v3415 = vmul.f32 %v3321, 1.442695
      %v3416 = vpow.pop %v3415
      %v3417 = vmul.f32 %v3322, 1.442695
      %v3418 = vpow.pop %v3417
      %v3419 = vmul.f32 %v3323, 1.442695
      %v3420 = vpow.pop %v3419
      %v3421 = vmul.f32 %v3324, 1.442695
      %v3422 = vpow.pop %v3421
      %v3423 = vmul.f32 %v3325, 1.442695
      %v3424 = vpow.pop %v3423
      %v3425 = vmul.f32 %v3326, 1.442695
      %v3426 = vpow.pop %v3425
      %v3427 = vmul.f32 %v3327, 1.442695
      %v3428 = vpow.pop %v3427
      %v3429 = vmul.f32 %v3328, 1.442695
      %v3430 = vpow.pop %v3429
      %v3431 = vmul.f32 %v3329, 1.442695
      %v3432 = vpow.pop %v3431
      %v3433 = vmul.f32 %v3330, 1.442695
      %v3434 = vpow.pop %v3433
      %v3435 = vmul.f32 %v3331, 1.442695
      %v3436 = vpow.pop %v3435
      %v3437 = vmul.f32 %v3332, 1.442695
      %v3438 = vpow.pop %v3437
      %v3439 = vmul.f32 %v3333, 1.442695
      %v3440 = vpow.pop %v3439
      %v3441 = vmul.f32 %v3334, 1.442695
      %v3442 = vpow.pop %v3441
      %v3443 = vmul.f32 %v3335, 1.442695
      %v3444 = vpow.pop %v3443
      %v3445 = vmul.f32 %v3336, 1.442695
      %v3446 = vpow.pop %v3445
      %v3447 = vmul.f32 %v3337, 1.442695
      %v3448 = vpow.pop %v3447
      %v3449 = vmul.f32 %v3338, 1.442695
      %v3450 = vpow.pop %v3449
      %v3451 = vmul.f32 %v3339, 1.442695
      %v3452 = vpow.pop %v3451
      %v3453 = vmul.f32 %v3340, 1.442695
      %v3454 = vpow.pop %v3453
      %v3455 = vmul.f32 %v3341, 1.442695
      %v3456 = vpow.pop %v3455
      %v3457 = vmul.f32 %v3342, 1.442695
      %v3458 = vpow.pop %v3457
      %v3459 = vmul.f32 %v3343, 1.442695
      %v3460 = vpow.pop %v3459
      %v3461 = vmul.f32 %v3344, 1.442695
      %v3462 = vpow.pop %v3461
      %v3463 = vmul.f32 %v3345, 1.442695
      %v3464 = vpow.pop %v3463
      %v3465 = vmul.f32 %v3346, 1.442695
      %v3466 = vpow.pop %v3465
      %v3467 = vmul.f32 %v3347, 1.442695
      %v3468 = vpow.pop %v3467
      %v3469 = vmul.f32 %v3348, 1.442695
      %v3470 = vpow.pop %v3469
      %v3471 = vmul.f32 %v3349, 1.442695
      %v3472 = vpow.pop %v3471
      %v3473 = vmul.f32 %v3350, 1.442695
      %v3474 = vpow.pop %v3473
      %v3475 = vmul.f32 %v3351, 1.442695
      %v3476 = vpow.pop %v3475
      %v3477 = vmul.f32 %v3352, 1.442695
      %v3478 = vpow.pop %v3477
      %v3479 = vmul.f32 %v3353, 1.442695
      %v3480 = vpow.pop %v3479
      %v3481 = vmul.f32 %v3354, 1.442695
      %v3482 = vpow.pop %v3481
      %3547 = vset.pattern.permute.xlu0 0
      %3548 = vperm.xlu0 %3547, %v3356
      %v3549 = vpop.permute.xlu0 %3548
      %3550 = vset.pattern.permute.xlu0 0
      %3551 = vperm.xlu0 %3550, %v3358
      %v3552 = vpop.permute.xlu0 %3551
      %3553 = vset.pattern.permute.xlu0 0
      %3554 = vperm.xlu0 %3553, %v3360
      %v3555 = vpop.permute.xlu0 %3554
      %3556 = vset.pattern.permute.xlu0 0
      %3557 = vperm.xlu0 %3556, %v3362
      %v3558 = vpop.permute.xlu0 %3557
      %3559 = vset.pattern.permute.xlu0 0
      %3560 = vperm.xlu0 %3559, %v3364
      %v3561 = vpop.permute.xlu0 %3560
      %3562 = vset.pattern.permute.xlu0 0
      %3563 = vperm.xlu0 %3562, %v3366
      %v3564 = vpop.permute.xlu0 %3563
      %3565 = vset.pattern.permute.xlu0 0
      %3566 = vperm.xlu0 %3565, %v3368
      %v3567 = vpop.permute.xlu0 %3566
      %3568 = vset.pattern.permute.xlu0 0
      %3569 = vperm.xlu0 %3568, %v3370
      %v3570 = vpop.permute.xlu0 %3569
      %3571 = vset.pattern.permute.xlu0 0
      %3572 = vperm.xlu0 %3571, %v3372
      %v3573 = vpop.permute.xlu0 %3572
      %3574 = vset.pattern.permute.xlu0 0
      %3575 = vperm.xlu0 %3574, %v3374
      %v3576 = vpop.permute.xlu0 %3575
      %3577 = vset.pattern.permute.xlu0 0
      %3578 = vperm.xlu0 %3577, %v3376
      %v3579 = vpop.permute.xlu0 %3578
      %3580 = vset.pattern.permute.xlu0 0
      %3581 = vperm.xlu0 %3580, %v3378
      %v3582 = vpop.permute.xlu0 %3581
      %3583 = vset.pattern.permute.xlu0 0
      %3584 = vperm.xlu0 %3583, %v3380
      %v3585 = vpop.permute.xlu0 %3584
      %3586 = vset.pattern.permute.xlu0 0
      %3587 = vperm.xlu0 %3586, %v3382
      %v3588 = vpop.permute.xlu0 %3587
      %3589 = vset.pattern.permute.xlu0 0
      %3590 = vperm.xlu0 %3589, %v3384
      %v3591 = vpop.permute.xlu0 %3590
      %3592 = vset.pattern.permute.xlu0 0
      %3593 = vperm.xlu0 %3592, %v3386
      %v3594 = vpop.permute.xlu0 %3593
      %3595 = vset.pattern.permute.xlu0 0
      %3596 = vperm.xlu0 %3595, %v3388
      %v3597 = vpop.permute.xlu0 %3596
      %3598 = vset.pattern.permute.xlu0 0
      %3599 = vperm.xlu0 %3598, %v3390
      %v3600 = vpop.permute.xlu0 %3599
      %3601 = vset.pattern.permute.xlu0 0
      %3602 = vperm.xlu0 %3601, %v3392
      %v3603 = vpop.permute.xlu0 %3602
      %3604 = vset.pattern.permute.xlu0 0
      %3605 = vperm.xlu0 %3604, %v3394
      %v3606 = vpop.permute.xlu0 %3605
      %3607 = vset.pattern.permute.xlu0 0
      %3608 = vperm.xlu0 %3607, %v3396
      %v3609 = vpop.permute.xlu0 %3608
      %3610 = vset.pattern.permute.xlu0 0
      %3611 = vperm.xlu0 %3610, %v3398
      %v3612 = vpop.permute.xlu0 %3611
      %3613 = vset.pattern.permute.xlu0 0
      %3614 = vperm.xlu0 %3613, %v3400
      %v3615 = vpop.permute.xlu0 %3614
      %3616 = vset.pattern.permute.xlu0 0
      %3617 = vperm.xlu0 %3616, %v3402
      %v3618 = vpop.permute.xlu0 %3617
      %3619 = vset.pattern.permute.xlu0 0
      %3620 = vperm.xlu0 %3619, %v3404
      %v3621 = vpop.permute.xlu0 %3620
      %3622 = vset.pattern.permute.xlu0 0
      %3623 = vperm.xlu0 %3622, %v3406
      %v3624 = vpop.permute.xlu0 %3623
      %3625 = vset.pattern.permute.xlu0 0
      %3626 = vperm.xlu0 %3625, %v3408
      %v3627 = vpop.permute.xlu0 %3626
      %3628 = vset.pattern.permute.xlu0 0
      %3629 = vperm.xlu0 %3628, %v3410
      %v3630 = vpop.permute.xlu0 %3629
      %3631 = vset.pattern.permute.xlu0 0
      %3632 = vperm.xlu0 %3631, %v3412
      %v3633 = vpop.permute.xlu0 %3632
      %3634 = vset.pattern.permute.xlu0 0
      %3635 = vperm.xlu0 %3634, %v3414
      %v3636 = vpop.permute.xlu0 %3635
      %3637 = vset.pattern.permute.xlu0 0
      %3638 = vperm.xlu0 %3637, %v3416
      %v3639 = vpop.permute.xlu0 %3638
      %3640 = vset.pattern.permute.xlu0 0
      %3641 = vperm.xlu0 %3640, %v3418
      %v3642 = vpop.permute.xlu0 %3641
      %3643 = vset.pattern.permute.xlu0 0
      %3644 = vperm.xlu0 %3643, %v3420
      %v3645 = vpop.permute.xlu0 %3644
      %3646 = vset.pattern.permute.xlu0 0
      %3647 = vperm.xlu0 %3646, %v3422
      %v3648 = vpop.permute.xlu0 %3647
      %3649 = vset.pattern.permute.xlu0 0
      %3650 = vperm.xlu0 %3649, %v3424
      %v3651 = vpop.permute.xlu0 %3650
      %3652 = vset.pattern.permute.xlu0 0
      %3653 = vperm.xlu0 %3652, %v3426
      %v3654 = vpop.permute.xlu0 %3653
      %3655 = vset.pattern.permute.xlu0 0
      %3656 = vperm.xlu0 %3655, %v3428
      %v3657 = vpop.permute.xlu0 %3656
      %3658 = vset.pattern.permute.xlu0 0
      %3659 = vperm.xlu0 %3658, %v3430
      %v3660 = vpop.permute.xlu0 %3659
      %3661 = vset.pattern.permute.xlu0 0
      %3662 = vperm.xlu0 %3661, %v3432
      %v3663 = vpop.permute.xlu0 %3662
      %3664 = vset.pattern.permute.xlu0 0
      %3665 = vperm.xlu0 %3664, %v3434
      %v3666 = vpop.permute.xlu0 %3665
      %3667 = vset.pattern.permute.xlu0 0
      %3668 = vperm.xlu0 %3667, %v3436
      %v3669 = vpop.permute.xlu0 %3668
      %3670 = vset.pattern.permute.xlu0 0
      %3671 = vperm.xlu0 %3670, %v3438
      %v3672 = vpop.permute.xlu0 %3671
      %3673 = vset.pattern.permute.xlu0 0
      %3674 = vperm.xlu0 %3673, %v3440
      %v3675 = vpop.permute.xlu0 %3674
      %3676 = vset.pattern.permute.xlu0 0
      %3677 = vperm.xlu0 %3676, %v3442
      %v3678 = vpop.permute.xlu0 %3677
      %3679 = vset.pattern.permute.xlu0 0
      %3680 = vperm.xlu0 %3679, %v3444
      %v3681 = vpop.permute.xlu0 %3680
      %3682 = vset.pattern.permute.xlu0 0
      %3683 = vperm.xlu0 %3682, %v3446
      %v3684 = vpop.permute.xlu0 %3683
      %3685 = vset.pattern.permute.xlu0 0
      %3686 = vperm.xlu0 %3685, %v3448
      %v3687 = vpop.permute.xlu0 %3686
      %3688 = vset.pattern.permute.xlu0 0
      %3689 = vperm.xlu0 %3688, %v3450
      %v3690 = vpop.permute.xlu0 %3689
      %3691 = vset.pattern.permute.xlu0 0
      %3692 = vperm.xlu0 %3691, %v3452
      %v3693 = vpop.permute.xlu0 %3692
      %3694 = vset.pattern.permute.xlu0 0
      %3695 = vperm.xlu0 %3694, %v3454
      %v3696 = vpop.permute.xlu0 %3695
      %3697 = vset.pattern.permute.xlu0 0
      %3698 = vperm.xlu0 %3697, %v3456
      %v3699 = vpop.permute.xlu0 %3698
      %3700 = vset.pattern.permute.xlu0 0
      %3701 = vperm.xlu0 %3700, %v3458
      %v3702 = vpop.permute.xlu0 %3701
      %3703 = vset.pattern.permute.xlu0 0
      %3704 = vperm.xlu0 %3703, %v3460
      %v3705 = vpop.permute.xlu0 %3704
      %3706 = vset.pattern.permute.xlu0 0
      %3707 = vperm.xlu0 %3706, %v3462
      %v3708 = vpop.permute.xlu0 %3707
      %3709 = vset.pattern.permute.xlu0 0
      %3710 = vperm.xlu0 %3709, %v3464
      %v3711 = vpop.permute.xlu0 %3710
      %3712 = vset.pattern.permute.xlu0 0
      %3713 = vperm.xlu0 %3712, %v3466
      %v3714 = vpop.permute.xlu0 %3713
      %3715 = vset.pattern.permute.xlu0 0
      %3716 = vperm.xlu0 %3715, %v3468
      %v3717 = vpop.permute.xlu0 %3716
      %3718 = vset.pattern.permute.xlu0 0
      %3719 = vperm.xlu0 %3718, %v3470
      %v3720 = vpop.permute.xlu0 %3719
      %3721 = vset.pattern.permute.xlu0 0
      %3722 = vperm.xlu0 %3721, %v3472
      %v3723 = vpop.permute.xlu0 %3722
      %3724 = vset.pattern.permute.xlu0 0
      %3725 = vperm.xlu0 %3724, %v3474
      %v3726 = vpop.permute.xlu0 %3725
      %3727 = vset.pattern.permute.xlu0 0
      %3728 = vperm.xlu0 %3727, %v3476
      %v3729 = vpop.permute.xlu0 %3728
      %3730 = vset.pattern.permute.xlu0 0
      %3731 = vperm.xlu0 %3730, %v3478
      %v3732 = vpop.permute.xlu0 %3731
      %3733 = vset.pattern.permute.xlu0 0
      %3734 = vperm.xlu0 %3733, %v3480
      %v3735 = vpop.permute.xlu0 %3734
      %3736 = vset.pattern.permute.xlu0 0
      %3737 = vperm.xlu0 %3736, %v3482
      %v3738 = vpop.permute.xlu0 %3737
      %v3739 = vlaneseq
      %v3740 = vshrl.u32 %v3739, 7
      %v3741 = vsub.s32 %v2784, %v3740
      %v3742 = vrot.slane %v3549, %v3741
      %v3743 = vlaneseq
      %v3744 = vshrl.u32 %v3743, 7
      %v3745 = vsub.s32 %v2789, %v3744
      %v3746 = vrot.slane %v3552, %v3745
      %v3747 = vsel %vm2794, %v3746, %v3742
      %v3748 = vlaneseq
      %v3749 = vshrl.u32 %v3748, 7
      %v3750 = vsub.s32 %v2784, %v3749
      %v3751 = vrot.slane %v3555, %v3750
      %v3752 = vlaneseq
      %v3753 = vshrl.u32 %v3752, 7
      %v3754 = vsub.s32 %v2789, %v3753
      %v3755 = vrot.slane %v3558, %v3754
      %v3756 = vsel %vm2794, %v3755, %v3751
      %v3757 = vlaneseq
      %v3758 = vshrl.u32 %v3757, 7
      %v3759 = vsub.s32 %v2784, %v3758
      %v3760 = vrot.slane %v3561, %v3759
      %v3761 = vlaneseq
      %v3762 = vshrl.u32 %v3761, 7
      %v3763 = vsub.s32 %v2789, %v3762
      %v3764 = vrot.slane %v3564, %v3763
      %v3765 = vsel %vm2794, %v3764, %v3760
      %v3766 = vlaneseq
      %v3767 = vshrl.u32 %v3766, 7
      %v3768 = vsub.s32 %v2784, %v3767
      %v3769 = vrot.slane %v3567, %v3768
      %v3770 = vlaneseq
      %v3771 = vshrl.u32 %v3770, 7
      %v3772 = vsub.s32 %v2789, %v3771
      %v3773 = vrot.slane %v3570, %v3772
      %v3774 = vsel %vm2794, %v3773, %v3769
      %v3775 = vlaneseq
      %v3776 = vshrl.u32 %v3775, 7
      %v3777 = vsub.s32 %v2784, %v3776
      %v3778 = vrot.slane %v3573, %v3777
      %v3779 = vlaneseq
      %v3780 = vshrl.u32 %v3779, 7
      %v3781 = vsub.s32 %v2789, %v3780
      %v3782 = vrot.slane %v3576, %v3781
      %v3783 = vsel %vm2794, %v3782, %v3778
      %v3784 = vlaneseq
      %v3785 = vshrl.u32 %v3784, 7
      %v3786 = vsub.s32 %v2784, %v3785
      %v3787 = vrot.slane %v3579, %v3786
      %v3788 = vlaneseq
      %v3789 = vshrl.u32 %v3788, 7
      %v3790 = vsub.s32 %v2789, %v3789
      %v3791 = vrot.slane %v3582, %v3790
      %v3792 = vsel %vm2794, %v3791, %v3787
      %v3793 = vlaneseq
      %v3794 = vshrl.u32 %v3793, 7
      %v3795 = vsub.s32 %v2784, %v3794
      %v3796 = vrot.slane %v3585, %v3795
      %v3797 = vlaneseq
      %v3798 = vshrl.u32 %v3797, 7
      %v3799 = vsub.s32 %v2789, %v3798
      %v3800 = vrot.slane %v3588, %v3799
      %v3801 = vsel %vm2794, %v3800, %v3796
      %v3802 = vlaneseq
      %v3803 = vshrl.u32 %v3802, 7
      %v3804 = vsub.s32 %v2784, %v3803
      %v3805 = vrot.slane %v3591, %v3804
      %v3806 = vlaneseq
      %v3807 = vshrl.u32 %v3806, 7
      %v3808 = vsub.s32 %v2789, %v3807
      %v3809 = vrot.slane %v3594, %v3808
      %v3810 = vsel %vm2794, %v3809, %v3805
      %v3811 = vlaneseq
      %v3812 = vshrl.u32 %v3811, 7
      %v3813 = vsub.s32 %v2784, %v3812
      %v3814 = vrot.slane %v3597, %v3813
      %v3815 = vlaneseq
      %v3816 = vshrl.u32 %v3815, 7
      %v3817 = vsub.s32 %v2789, %v3816
      %v3818 = vrot.slane %v3600, %v3817
      %v3819 = vsel %vm2794, %v3818, %v3814
      %v3820 = vlaneseq
      %v3821 = vshrl.u32 %v3820, 7
      %v3822 = vsub.s32 %v2784, %v3821
      %v3823 = vrot.slane %v3603, %v3822
      %v3824 = vlaneseq
      %v3825 = vshrl.u32 %v3824, 7
      %v3826 = vsub.s32 %v2789, %v3825
      %v3827 = vrot.slane %v3606, %v3826
      %v3828 = vsel %vm2794, %v3827, %v3823
      %v3829 = vlaneseq
      %v3830 = vshrl.u32 %v3829, 7
      %v3831 = vsub.s32 %v2784, %v3830
      %v3832 = vrot.slane %v3609, %v3831
      %v3833 = vlaneseq
      %v3834 = vshrl.u32 %v3833, 7
      %v3835 = vsub.s32 %v2789, %v3834
      %v3836 = vrot.slane %v3612, %v3835
      %v3837 = vsel %vm2794, %v3836, %v3832
      %v3838 = vlaneseq
      %v3839 = vshrl.u32 %v3838, 7
      %v3840 = vsub.s32 %v2784, %v3839
      %v3841 = vrot.slane %v3615, %v3840
      %v3842 = vlaneseq
      %v3843 = vshrl.u32 %v3842, 7
      %v3844 = vsub.s32 %v2789, %v3843
      %v3845 = vrot.slane %v3618, %v3844
      %v3846 = vsel %vm2794, %v3845, %v3841
      %v3847 = vlaneseq
      %v3848 = vshrl.u32 %v3847, 7
      %v3849 = vsub.s32 %v2784, %v3848
      %v3850 = vrot.slane %v3621, %v3849
      %v3851 = vlaneseq
      %v3852 = vshrl.u32 %v3851, 7
      %v3853 = vsub.s32 %v2789, %v3852
      %v3854 = vrot.slane %v3624, %v3853
      %v3855 = vsel %vm2794, %v3854, %v3850
      %v3856 = vlaneseq
      %v3857 = vshrl.u32 %v3856, 7
      %v3858 = vsub.s32 %v2784, %v3857
      %v3859 = vrot.slane %v3627, %v3858
      %v3860 = vlaneseq
      %v3861 = vshrl.u32 %v3860, 7
      %v3862 = vsub.s32 %v2789, %v3861
      %v3863 = vrot.slane %v3630, %v3862
      %v3864 = vsel %vm2794, %v3863, %v3859
      %v3865 = vlaneseq
      %v3866 = vshrl.u32 %v3865, 7
      %v3867 = vsub.s32 %v2784, %v3866
      %v3868 = vrot.slane %v3633, %v3867
      %v3869 = vlaneseq
      %v3870 = vshrl.u32 %v3869, 7
      %v3871 = vsub.s32 %v2789, %v3870
      %v3872 = vrot.slane %v3636, %v3871
      %v3873 = vsel %vm2794, %v3872, %v3868
      %v3874 = vlaneseq
      %v3875 = vshrl.u32 %v3874, 7
      %v3876 = vsub.s32 %v2784, %v3875
      %v3877 = vrot.slane %v3639, %v3876
      %v3878 = vlaneseq
      %v3879 = vshrl.u32 %v3878, 7
      %v3880 = vsub.s32 %v2789, %v3879
      %v3881 = vrot.slane %v3642, %v3880
      %v3882 = vsel %vm2794, %v3881, %v3877
      %v3883 = vlaneseq
      %v3884 = vshrl.u32 %v3883, 7
      %v3885 = vsub.s32 %v2784, %v3884
      %v3886 = vrot.slane %v3645, %v3885
      %v3887 = vlaneseq
      %v3888 = vshrl.u32 %v3887, 7
      %v3889 = vsub.s32 %v2789, %v3888
      %v3890 = vrot.slane %v3648, %v3889
      %v3891 = vsel %vm2794, %v3890, %v3886
      %v3892 = vlaneseq
      %v3893 = vshrl.u32 %v3892, 7
      %v3894 = vsub.s32 %v2784, %v3893
      %v3895 = vrot.slane %v3651, %v3894
      %v3896 = vlaneseq
      %v3897 = vshrl.u32 %v3896, 7
      %v3898 = vsub.s32 %v2789, %v3897
      %v3899 = vrot.slane %v3654, %v3898
      %v3900 = vsel %vm2794, %v3899, %v3895
      %v3901 = vlaneseq
      %v3902 = vshrl.u32 %v3901, 7
      %v3903 = vsub.s32 %v2784, %v3902
      %v3904 = vrot.slane %v3657, %v3903
      %v3905 = vlaneseq
      %v3906 = vshrl.u32 %v3905, 7
      %v3907 = vsub.s32 %v2789, %v3906
      %v3908 = vrot.slane %v3660, %v3907
      %v3909 = vsel %vm2794, %v3908, %v3904
      %v3910 = vlaneseq
      %v3911 = vshrl.u32 %v3910, 7
      %v3912 = vsub.s32 %v2784, %v3911
      %v3913 = vrot.slane %v3663, %v3912
      %v3914 = vlaneseq
      %v3915 = vshrl.u32 %v3914, 7
      %v3916 = vsub.s32 %v2789, %v3915
      %v3917 = vrot.slane %v3666, %v3916
      %v3918 = vsel %vm2794, %v3917, %v3913
      %v3919 = vlaneseq
      %v3920 = vshrl.u32 %v3919, 7
      %v3921 = vsub.s32 %v2784, %v3920
      %v3922 = vrot.slane %v3669, %v3921
      %v3923 = vlaneseq
      %v3924 = vshrl.u32 %v3923, 7
      %v3925 = vsub.s32 %v2789, %v3924
      %v3926 = vrot.slane %v3672, %v3925
      %v3927 = vsel %vm2794, %v3926, %v3922
      %v3928 = vlaneseq
      %v3929 = vshrl.u32 %v3928, 7
      %v3930 = vsub.s32 %v2784, %v3929
      %v3931 = vrot.slane %v3675, %v3930
      %v3932 = vlaneseq
      %v3933 = vshrl.u32 %v3932, 7
      %v3934 = vsub.s32 %v2789, %v3933
      %v3935 = vrot.slane %v3678, %v3934
      %v3936 = vsel %vm2794, %v3935, %v3931
      %v3937 = vlaneseq
      %v3938 = vshrl.u32 %v3937, 7
      %v3939 = vsub.s32 %v2784, %v3938
      %v3940 = vrot.slane %v3681, %v3939
      %v3941 = vlaneseq
      %v3942 = vshrl.u32 %v3941, 7
      %v3943 = vsub.s32 %v2789, %v3942
      %v3944 = vrot.slane %v3684, %v3943
      %v3945 = vsel %vm2794, %v3944, %v3940
      %v3946 = vlaneseq
      %v3947 = vshrl.u32 %v3946, 7
      %v3948 = vsub.s32 %v2784, %v3947
      %v3949 = vrot.slane %v3687, %v3948
      %v3950 = vlaneseq
      %v3951 = vshrl.u32 %v3950, 7
      %v3952 = vsub.s32 %v2789, %v3951
      %v3953 = vrot.slane %v3690, %v3952
      %v3954 = vsel %vm2794, %v3953, %v3949
      %v3955 = vlaneseq
      %v3956 = vshrl.u32 %v3955, 7
      %v3957 = vsub.s32 %v2784, %v3956
      %v3958 = vrot.slane %v3693, %v3957
      %v3959 = vlaneseq
      %v3960 = vshrl.u32 %v3959, 7
      %v3961 = vsub.s32 %v2789, %v3960
      %v3962 = vrot.slane %v3696, %v3961
      %v3963 = vsel %vm2794, %v3962, %v3958
      %v3964 = vlaneseq
      %v3965 = vshrl.u32 %v3964, 7
      %v3966 = vsub.s32 %v2784, %v3965
      %v3967 = vrot.slane %v3699, %v3966
      %v3968 = vlaneseq
      %v3969 = vshrl.u32 %v3968, 7
      %v3970 = vsub.s32 %v2789, %v3969
      %v3971 = vrot.slane %v3702, %v3970
      %v3972 = vsel %vm2794, %v3971, %v3967
      %v3973 = vlaneseq
      %v3974 = vshrl.u32 %v3973, 7
      %v3975 = vsub.s32 %v2784, %v3974
      %v3976 = vrot.slane %v3705, %v3975
      %v3977 = vlaneseq
      %v3978 = vshrl.u32 %v3977, 7
      %v3979 = vsub.s32 %v2789, %v3978
      %v3980 = vrot.slane %v3708, %v3979
      %v3981 = vsel %vm2794, %v3980, %v3976
      %v3982 = vlaneseq
      %v3983 = vshrl.u32 %v3982, 7
      %v3984 = vsub.s32 %v2784, %v3983
      %v3985 = vrot.slane %v3711, %v3984
      %v3986 = vlaneseq
      %v3987 = vshrl.u32 %v3986, 7
      %v3988 = vsub.s32 %v2789, %v3987
      %v3989 = vrot.slane %v3714, %v3988
      %v3990 = vsel %vm2794, %v3989, %v3985
      %v3991 = vlaneseq
      %v3992 = vshrl.u32 %v3991, 7
      %v3993 = vsub.s32 %v2784, %v3992
      %v3994 = vrot.slane %v3717, %v3993
      %v3995 = vlaneseq
      %v3996 = vshrl.u32 %v3995, 7
      %v3997 = vsub.s32 %v2789, %v3996
      %v3998 = vrot.slane %v3720, %v3997
      %v3999 = vsel %vm2794, %v3998, %v3994
      %v4000 = vlaneseq
      %v4001 = vshrl.u32 %v4000, 7
      %v4002 = vsub.s32 %v2784, %v4001
      %v4003 = vrot.slane %v3723, %v4002
      %v4004 = vlaneseq
      %v4005 = vshrl.u32 %v4004, 7
      %v4006 = vsub.s32 %v2789, %v4005
      %v4007 = vrot.slane %v3726, %v4006
      %v4008 = vsel %vm2794, %v4007, %v4003
      %v4009 = vlaneseq
      %v4010 = vshrl.u32 %v4009, 7
      %v4011 = vsub.s32 %v2784, %v4010
      %v4012 = vrot.slane %v3729, %v4011
      %v4013 = vlaneseq
      %v4014 = vshrl.u32 %v4013, 7
      %v4015 = vsub.s32 %v2789, %v4014
      %v4016 = vrot.slane %v3732, %v4015
      %v4017 = vsel %vm2794, %v4016, %v4012
      %v4018 = vlaneseq
      %v4019 = vshrl.u32 %v4018, 7
      %v4020 = vsub.s32 %v2784, %v4019
      %v4021 = vrot.slane %v3735, %v4020
      %v4022 = vlaneseq
      %v4023 = vshrl.u32 %v4022, 7
      %v4024 = vsub.s32 %v2789, %v4023
      %v4025 = vrot.slane %v3738, %v4024
      %v4026 = vsel %vm2794, %v4025, %v4021
      %v4027 = vsel %vm3075, %v3756, %v3747
      %v4028 = vsel %vm3077, %v3765, %v4027
      %v4029 = vsel %vm3079, %v3774, %v4028
      %v4030 = vsel %vm3081, %v3783, %v4029
      %v4031 = vsel %vm3083, %v3792, %v4030
      %v4032 = vsel %vm3085, %v3801, %v4031
      %v4033 = vsel %vm3087, %v3810, %v4032
      %v4034 = vsel %vm3075, %v3828, %v3819
      %v4035 = vsel %vm3077, %v3837, %v4034
      %v4036 = vsel %vm3079, %v3846, %v4035
      %v4037 = vsel %vm3081, %v3855, %v4036
      %v4038 = vsel %vm3083, %v3864, %v4037
      %v4039 = vsel %vm3085, %v3873, %v4038
      %v4040 = vsel %vm3087, %v3882, %v4039
      %v4041 = vsel %vm3075, %v3900, %v3891
      %v4042 = vsel %vm3077, %v3909, %v4041
      %v4043 = vsel %vm3079, %v3918, %v4042
      %v4044 = vsel %vm3081, %v3927, %v4043
      %v4045 = vsel %vm3083, %v3936, %v4044
      %v4046 = vsel %vm3085, %v3945, %v4045
      %v4047 = vsel %vm3087, %v3954, %v4046
      %v4048 = vsel %vm3075, %v3972, %v3963
      %v4049 = vsel %vm3077, %v3981, %v4048
      %v4050 = vsel %vm3079, %v3990, %v4049
      %v4051 = vsel %vm3081, %v3999, %v4050
      %v4052 = vsel %vm3083, %v4008, %v4051
      %v4053 = vsel %vm3085, %v4017, %v4052
      %v4054 = vsel %vm3087, %v4026, %v4053
      %v4059 = vsel %vm3114, %v4033, 0.0
      %4060 = vadd.xlane.f32.xlu0 %v4059
      %v4061 = vpop.xlane.xlu0 %4060
      %v4062 = vsel %vm3114, %v4040, 0.0
      %4063 = vadd.xlane.f32.xlu0 %v4062
      %v4064 = vpop.xlane.xlu0 %4063
      %v4065 = vsel %vm3114, %v4047, 0.0
      %4066 = vadd.xlane.f32.xlu0 %v4065
      %v4067 = vpop.xlane.xlu0 %4066
      %v4068 = vsel %vm3114, %v4054, 0.0
      %4069 = vadd.xlane.f32.xlu0 %v4068
      %v4070 = vpop.xlane.xlu0 %4069
      %v4071 = vrcp.pop %v4061
      %v4072 = vrcp.pop %v4064
      %v4073 = vrcp.pop %v4067
      %v4074 = vrcp.pop %v4070
      %v4079 = vlaneseq
      %v4080 = vshrl.u32 %v4079, 7
      %v4081 = vsub.s32 0, %v4080
      %v4082 = vrot.slane %v4071, %v4081
      %v4083 = vlaneseq
      %v4084 = vshrl.u32 %v4083, 7
      %v4085 = vsub.s32 1, %v4084
      %v4086 = vrot.slane %v4071, %v4085
      %v4087 = vlaneseq
      %v4088 = vshrl.u32 %v4087, 7
      %v4089 = vsub.s32 2, %v4088
      %v4090 = vrot.slane %v4071, %v4089
      %v4091 = vlaneseq
      %v4092 = vshrl.u32 %v4091, 7
      %v4093 = vsub.s32 3, %v4092
      %v4094 = vrot.slane %v4071, %v4093
      %v4095 = vlaneseq
      %v4096 = vshrl.u32 %v4095, 7
      %v4097 = vsub.s32 4, %v4096
      %v4098 = vrot.slane %v4071, %v4097
      %v4099 = vlaneseq
      %v4100 = vshrl.u32 %v4099, 7
      %v4101 = vsub.s32 5, %v4100
      %v4102 = vrot.slane %v4071, %v4101
      %v4103 = vlaneseq
      %v4104 = vshrl.u32 %v4103, 7
      %v4105 = vsub.s32 6, %v4104
      %v4106 = vrot.slane %v4071, %v4105
      %v4107 = vlaneseq
      %v4108 = vshrl.u32 %v4107, 7
      %v4109 = vsub.s32 7, %v4108
      %v4110 = vrot.slane %v4071, %v4109
      %v4111 = vlaneseq
      %v4112 = vshrl.u32 %v4111, 7
      %v4113 = vsub.s32 0, %v4112
      %v4114 = vrot.slane %v4072, %v4113
      %v4115 = vlaneseq
      %v4116 = vshrl.u32 %v4115, 7
      %v4117 = vsub.s32 1, %v4116
      %v4118 = vrot.slane %v4072, %v4117
      %v4119 = vlaneseq
      %v4120 = vshrl.u32 %v4119, 7
      %v4121 = vsub.s32 2, %v4120
      %v4122 = vrot.slane %v4072, %v4121
      %v4123 = vlaneseq
      %v4124 = vshrl.u32 %v4123, 7
      %v4125 = vsub.s32 3, %v4124
      %v4126 = vrot.slane %v4072, %v4125
      %v4127 = vlaneseq
      %v4128 = vshrl.u32 %v4127, 7
      %v4129 = vsub.s32 4, %v4128
      %v4130 = vrot.slane %v4072, %v4129
      %v4131 = vlaneseq
      %v4132 = vshrl.u32 %v4131, 7
      %v4133 = vsub.s32 5, %v4132
      %v4134 = vrot.slane %v4072, %v4133
      %v4135 = vlaneseq
      %v4136 = vshrl.u32 %v4135, 7
      %v4137 = vsub.s32 6, %v4136
      %v4138 = vrot.slane %v4072, %v4137
      %v4139 = vlaneseq
      %v4140 = vshrl.u32 %v4139, 7
      %v4141 = vsub.s32 7, %v4140
      %v4142 = vrot.slane %v4072, %v4141
      %v4143 = vlaneseq
      %v4144 = vshrl.u32 %v4143, 7
      %v4145 = vsub.s32 0, %v4144
      %v4146 = vrot.slane %v4073, %v4145
      %v4147 = vlaneseq
      %v4148 = vshrl.u32 %v4147, 7
      %v4149 = vsub.s32 1, %v4148
      %v4150 = vrot.slane %v4073, %v4149
      %v4151 = vlaneseq
      %v4152 = vshrl.u32 %v4151, 7
      %v4153 = vsub.s32 2, %v4152
      %v4154 = vrot.slane %v4073, %v4153
      %v4155 = vlaneseq
      %v4156 = vshrl.u32 %v4155, 7
      %v4157 = vsub.s32 3, %v4156
      %v4158 = vrot.slane %v4073, %v4157
      %v4159 = vlaneseq
      %v4160 = vshrl.u32 %v4159, 7
      %v4161 = vsub.s32 4, %v4160
      %v4162 = vrot.slane %v4073, %v4161
      %v4163 = vlaneseq
      %v4164 = vshrl.u32 %v4163, 7
      %v4165 = vsub.s32 5, %v4164
      %v4166 = vrot.slane %v4073, %v4165
      %v4167 = vlaneseq
      %v4168 = vshrl.u32 %v4167, 7
      %v4169 = vsub.s32 6, %v4168
      %v4170 = vrot.slane %v4073, %v4169
      %v4171 = vlaneseq
      %v4172 = vshrl.u32 %v4171, 7
      %v4173 = vsub.s32 7, %v4172
      %v4174 = vrot.slane %v4073, %v4173
      %v4175 = vlaneseq
      %v4176 = vshrl.u32 %v4175, 7
      %v4177 = vsub.s32 0, %v4176
      %v4178 = vrot.slane %v4074, %v4177
      %v4179 = vlaneseq
      %v4180 = vshrl.u32 %v4179, 7
      %v4181 = vsub.s32 1, %v4180
      %v4182 = vrot.slane %v4074, %v4181
      %v4183 = vlaneseq
      %v4184 = vshrl.u32 %v4183, 7
      %v4185 = vsub.s32 2, %v4184
      %v4186 = vrot.slane %v4074, %v4185
      %v4187 = vlaneseq
      %v4188 = vshrl.u32 %v4187, 7
      %v4189 = vsub.s32 3, %v4188
      %v4190 = vrot.slane %v4074, %v4189
      %v4191 = vlaneseq
      %v4192 = vshrl.u32 %v4191, 7
      %v4193 = vsub.s32 4, %v4192
      %v4194 = vrot.slane %v4074, %v4193
      %v4195 = vlaneseq
      %v4196 = vshrl.u32 %v4195, 7
      %v4197 = vsub.s32 5, %v4196
      %v4198 = vrot.slane %v4074, %v4197
      %v4199 = vlaneseq
      %v4200 = vshrl.u32 %v4199, 7
      %v4201 = vsub.s32 6, %v4200
      %v4202 = vrot.slane %v4074, %v4201
      %v4203 = vlaneseq
      %v4204 = vshrl.u32 %v4203, 7
      %v4205 = vsub.s32 7, %v4204
      %v4206 = vrot.slane %v4074, %v4205
      %v4239 = vmul.f32 %v3356, %v4082
      %v4240 = vmul.f32 %v3358, %v4082
      %v4241 = vmul.f32 %v3360, %v4086
      %v4242 = vmul.f32 %v3362, %v4086
      %v4243 = vmul.f32 %v3364, %v4090
      %v4244 = vmul.f32 %v3366, %v4090
      %v4245 = vmul.f32 %v3368, %v4094
      %v4246 = vmul.f32 %v3370, %v4094
      %v4247 = vmul.f32 %v3372, %v4098
      %v4248 = vmul.f32 %v3374, %v4098
      %v4249 = vmul.f32 %v3376, %v4102
      %v4250 = vmul.f32 %v3378, %v4102
      %v4251 = vmul.f32 %v3380, %v4106
      %v4252 = vmul.f32 %v3382, %v4106
      %v4253 = vmul.f32 %v3384, %v4110
      %v4254 = vmul.f32 %v3386, %v4110
      %v4255 = vmul.f32 %v3388, %v4114
      %v4256 = vmul.f32 %v3390, %v4114
      %v4257 = vmul.f32 %v3392, %v4118
      %v4258 = vmul.f32 %v3394, %v4118
      %v4259 = vmul.f32 %v3396, %v4122
      %v4260 = vmul.f32 %v3398, %v4122
      %v4261 = vmul.f32 %v3400, %v4126
      %v4262 = vmul.f32 %v3402, %v4126
      %v4263 = vmul.f32 %v3404, %v4130
      %v4264 = vmul.f32 %v3406, %v4130
      %v4265 = vmul.f32 %v3408, %v4134
      %v4266 = vmul.f32 %v3410, %v4134
      %v4267 = vmul.f32 %v3412, %v4138
      %v4268 = vmul.f32 %v3414, %v4138
      %v4269 = vmul.f32 %v3416, %v4142
      %v4270 = vmul.f32 %v3418, %v4142
      %v4271 = vmul.f32 %v3420, %v4146
      %v4272 = vmul.f32 %v3422, %v4146
      %v4273 = vmul.f32 %v3424, %v4150
      %v4274 = vmul.f32 %v3426, %v4150
      %v4275 = vmul.f32 %v3428, %v4154
      %v4276 = vmul.f32 %v3430, %v4154
      %v4277 = vmul.f32 %v3432, %v4158
      %v4278 = vmul.f32 %v3434, %v4158
      %v4279 = vmul.f32 %v3436, %v4162
      %v4280 = vmul.f32 %v3438, %v4162
      %v4281 = vmul.f32 %v3440, %v4166
      %v4282 = vmul.f32 %v3442, %v4166
      %v4283 = vmul.f32 %v3444, %v4170
      %v4284 = vmul.f32 %v3446, %v4170
      %v4285 = vmul.f32 %v3448, %v4174
      %v4286 = vmul.f32 %v3450, %v4174
      %v4287 = vmul.f32 %v3452, %v4178
      %v4288 = vmul.f32 %v3454, %v4178
      %v4289 = vmul.f32 %v3456, %v4182
      %v4290 = vmul.f32 %v3458, %v4182
      %v4291 = vmul.f32 %v3460, %v4186
      %v4292 = vmul.f32 %v3462, %v4186
      %v4293 = vmul.f32 %v3464, %v4190
      %v4294 = vmul.f32 %v3466, %v4190
      %v4295 = vmul.f32 %v3468, %v4194
      %v4296 = vmul.f32 %v3470, %v4194
      %v4297 = vmul.f32 %v3472, %v4198
      %v4298 = vmul.f32 %v3474, %v4198
      %v4299 = vmul.f32 %v3476, %v4202
      %v4300 = vmul.f32 %v3478, %v4202
      %v4301 = vmul.f32 %v3480, %v4206
      %v4302 = vmul.f32 %v3482, %v4206
      %4367 = vset.pattern.permute.xlu0 0
      %4368 = vperm.xlu0 %4367, %v4239
      %v4369 = vpop.permute.xlu0 %4368
      %4370 = vset.pattern.permute.xlu0 0
      %4371 = vperm.xlu0 %4370, %v4240
      %v4372 = vpop.permute.xlu0 %4371
      %4373 = vset.pattern.permute.xlu0 0
      %4374 = vperm.xlu0 %4373, %v4241
      %v4375 = vpop.permute.xlu0 %4374
      %4376 = vset.pattern.permute.xlu0 0
      %4377 = vperm.xlu0 %4376, %v4242
      %v4378 = vpop.permute.xlu0 %4377
      %4379 = vset.pattern.permute.xlu0 0
      %4380 = vperm.xlu0 %4379, %v4243
      %v4381 = vpop.permute.xlu0 %4380
      %4382 = vset.pattern.permute.xlu0 0
      %4383 = vperm.xlu0 %4382, %v4244
      %v4384 = vpop.permute.xlu0 %4383
      %4385 = vset.pattern.permute.xlu0 0
      %4386 = vperm.xlu0 %4385, %v4245
      %v4387 = vpop.permute.xlu0 %4386
      %4388 = vset.pattern.permute.xlu0 0
      %4389 = vperm.xlu0 %4388, %v4246
      %v4390 = vpop.permute.xlu0 %4389
      %4391 = vset.pattern.permute.xlu0 0
      %4392 = vperm.xlu0 %4391, %v4247
      %v4393 = vpop.permute.xlu0 %4392
      %4394 = vset.pattern.permute.xlu0 0
      %4395 = vperm.xlu0 %4394, %v4248
      %v4396 = vpop.permute.xlu0 %4395
      %4397 = vset.pattern.permute.xlu0 0
      %4398 = vperm.xlu0 %4397, %v4249
      %v4399 = vpop.permute.xlu0 %4398
      %4400 = vset.pattern.permute.xlu0 0
      %4401 = vperm.xlu0 %4400, %v4250
      %v4402 = vpop.permute.xlu0 %4401
      %4403 = vset.pattern.permute.xlu0 0
      %4404 = vperm.xlu0 %4403, %v4251
      %v4405 = vpop.permute.xlu0 %4404
      %4406 = vset.pattern.permute.xlu0 0
      %4407 = vperm.xlu0 %4406, %v4252
      %v4408 = vpop.permute.xlu0 %4407
      %4409 = vset.pattern.permute.xlu0 0
      %4410 = vperm.xlu0 %4409, %v4253
      %v4411 = vpop.permute.xlu0 %4410
      %4412 = vset.pattern.permute.xlu0 0
      %4413 = vperm.xlu0 %4412, %v4254
      %v4414 = vpop.permute.xlu0 %4413
      %4415 = vset.pattern.permute.xlu0 0
      %4416 = vperm.xlu0 %4415, %v4255
      %v4417 = vpop.permute.xlu0 %4416
      %4418 = vset.pattern.permute.xlu0 0
      %4419 = vperm.xlu0 %4418, %v4256
      %v4420 = vpop.permute.xlu0 %4419
      %4421 = vset.pattern.permute.xlu0 0
      %4422 = vperm.xlu0 %4421, %v4257
      %v4423 = vpop.permute.xlu0 %4422
      %4424 = vset.pattern.permute.xlu0 0
      %4425 = vperm.xlu0 %4424, %v4258
      %v4426 = vpop.permute.xlu0 %4425
      %4427 = vset.pattern.permute.xlu0 0
      %4428 = vperm.xlu0 %4427, %v4259
      %v4429 = vpop.permute.xlu0 %4428
      %4430 = vset.pattern.permute.xlu0 0
      %4431 = vperm.xlu0 %4430, %v4260
      %v4432 = vpop.permute.xlu0 %4431
      %4433 = vset.pattern.permute.xlu0 0
      %4434 = vperm.xlu0 %4433, %v4261
      %v4435 = vpop.permute.xlu0 %4434
      %4436 = vset.pattern.permute.xlu0 0
      %4437 = vperm.xlu0 %4436, %v4262
      %v4438 = vpop.permute.xlu0 %4437
      %4439 = vset.pattern.permute.xlu0 0
      %4440 = vperm.xlu0 %4439, %v4263
      %v4441 = vpop.permute.xlu0 %4440
      %4442 = vset.pattern.permute.xlu0 0
      %4443 = vperm.xlu0 %4442, %v4264
      %v4444 = vpop.permute.xlu0 %4443
      %4445 = vset.pattern.permute.xlu0 0
      %4446 = vperm.xlu0 %4445, %v4265
      %v4447 = vpop.permute.xlu0 %4446
      %4448 = vset.pattern.permute.xlu0 0
      %4449 = vperm.xlu0 %4448, %v4266
      %v4450 = vpop.permute.xlu0 %4449
      %4451 = vset.pattern.permute.xlu0 0
      %4452 = vperm.xlu0 %4451, %v4267
      %v4453 = vpop.permute.xlu0 %4452
      %4454 = vset.pattern.permute.xlu0 0
      %4455 = vperm.xlu0 %4454, %v4268
      %v4456 = vpop.permute.xlu0 %4455
      %4457 = vset.pattern.permute.xlu0 0
      %4458 = vperm.xlu0 %4457, %v4269
      %v4459 = vpop.permute.xlu0 %4458
      %4460 = vset.pattern.permute.xlu0 0
      %4461 = vperm.xlu0 %4460, %v4270
      %v4462 = vpop.permute.xlu0 %4461
      %4463 = vset.pattern.permute.xlu0 0
      %4464 = vperm.xlu0 %4463, %v4271
      %v4465 = vpop.permute.xlu0 %4464
      %4466 = vset.pattern.permute.xlu0 0
      %4467 = vperm.xlu0 %4466, %v4272
      %v4468 = vpop.permute.xlu0 %4467
      %4469 = vset.pattern.permute.xlu0 0
      %4470 = vperm.xlu0 %4469, %v4273
      %v4471 = vpop.permute.xlu0 %4470
      %4472 = vset.pattern.permute.xlu0 0
      %4473 = vperm.xlu0 %4472, %v4274
      %v4474 = vpop.permute.xlu0 %4473
      %4475 = vset.pattern.permute.xlu0 0
      %4476 = vperm.xlu0 %4475, %v4275
      %v4477 = vpop.permute.xlu0 %4476
      %4478 = vset.pattern.permute.xlu0 0
      %4479 = vperm.xlu0 %4478, %v4276
      %v4480 = vpop.permute.xlu0 %4479
      %4481 = vset.pattern.permute.xlu0 0
      %4482 = vperm.xlu0 %4481, %v4277
      %v4483 = vpop.permute.xlu0 %4482
      %4484 = vset.pattern.permute.xlu0 0
      %4485 = vperm.xlu0 %4484, %v4278
      %v4486 = vpop.permute.xlu0 %4485
      %4487 = vset.pattern.permute.xlu0 0
      %4488 = vperm.xlu0 %4487, %v4279
      %v4489 = vpop.permute.xlu0 %4488
      %4490 = vset.pattern.permute.xlu0 0
      %4491 = vperm.xlu0 %4490, %v4280
      %v4492 = vpop.permute.xlu0 %4491
      %4493 = vset.pattern.permute.xlu0 0
      %4494 = vperm.xlu0 %4493, %v4281
      %v4495 = vpop.permute.xlu0 %4494
      %4496 = vset.pattern.permute.xlu0 0
      %4497 = vperm.xlu0 %4496, %v4282
      %v4498 = vpop.permute.xlu0 %4497
      %4499 = vset.pattern.permute.xlu0 0
      %4500 = vperm.xlu0 %4499, %v4283
      %v4501 = vpop.permute.xlu0 %4500
      %4502 = vset.pattern.permute.xlu0 0
      %4503 = vperm.xlu0 %4502, %v4284
      %v4504 = vpop.permute.xlu0 %4503
      %4505 = vset.pattern.permute.xlu0 0
      %4506 = vperm.xlu0 %4505, %v4285
      %v4507 = vpop.permute.xlu0 %4506
      %4508 = vset.pattern.permute.xlu0 0
      %4509 = vperm.xlu0 %4508, %v4286
      %v4510 = vpop.permute.xlu0 %4509
      %4511 = vset.pattern.permute.xlu0 0
      %4512 = vperm.xlu0 %4511, %v4287
      %v4513 = vpop.permute.xlu0 %4512
      %4514 = vset.pattern.permute.xlu0 0
      %4515 = vperm.xlu0 %4514, %v4288
      %v4516 = vpop.permute.xlu0 %4515
      %4517 = vset.pattern.permute.xlu0 0
      %4518 = vperm.xlu0 %4517, %v4289
      %v4519 = vpop.permute.xlu0 %4518
      %4520 = vset.pattern.permute.xlu0 0
      %4521 = vperm.xlu0 %4520, %v4290
      %v4522 = vpop.permute.xlu0 %4521
      %4523 = vset.pattern.permute.xlu0 0
      %4524 = vperm.xlu0 %4523, %v4291
      %v4525 = vpop.permute.xlu0 %4524
      %4526 = vset.pattern.permute.xlu0 0
      %4527 = vperm.xlu0 %4526, %v4292
      %v4528 = vpop.permute.xlu0 %4527
      %4529 = vset.pattern.permute.xlu0 0
      %4530 = vperm.xlu0 %4529, %v4293
      %v4531 = vpop.permute.xlu0 %4530
      %4532 = vset.pattern.permute.xlu0 0
      %4533 = vperm.xlu0 %4532, %v4294
      %v4534 = vpop.permute.xlu0 %4533
      %4535 = vset.pattern.permute.xlu0 0
      %4536 = vperm.xlu0 %4535, %v4295
      %v4537 = vpop.permute.xlu0 %4536
      %4538 = vset.pattern.permute.xlu0 0
      %4539 = vperm.xlu0 %4538, %v4296
      %v4540 = vpop.permute.xlu0 %4539
      %4541 = vset.pattern.permute.xlu0 0
      %4542 = vperm.xlu0 %4541, %v4297
      %v4543 = vpop.permute.xlu0 %4542
      %4544 = vset.pattern.permute.xlu0 0
      %4545 = vperm.xlu0 %4544, %v4298
      %v4546 = vpop.permute.xlu0 %4545
      %4547 = vset.pattern.permute.xlu0 0
      %4548 = vperm.xlu0 %4547, %v4299
      %v4549 = vpop.permute.xlu0 %4548
      %4550 = vset.pattern.permute.xlu0 0
      %4551 = vperm.xlu0 %4550, %v4300
      %v4552 = vpop.permute.xlu0 %4551
      %4553 = vset.pattern.permute.xlu0 0
      %4554 = vperm.xlu0 %4553, %v4301
      %v4555 = vpop.permute.xlu0 %4554
      %4556 = vset.pattern.permute.xlu0 0
      %4557 = vperm.xlu0 %4556, %v4302
      %v4558 = vpop.permute.xlu0 %4557
      %v4559 = vlaneseq
      %v4560 = vshrl.u32 %v4559, 7
      %v4561 = vsub.s32 %v2784, %v4560
      %v4562 = vrot.slane %v4369, %v4561
      %v4563 = vlaneseq
      %v4564 = vshrl.u32 %v4563, 7
      %v4565 = vsub.s32 %v2789, %v4564
      %v4566 = vrot.slane %v4372, %v4565
      %v4567 = vsel %vm2794, %v4566, %v4562
      %v4568 = vlaneseq
      %v4569 = vshrl.u32 %v4568, 7
      %v4570 = vsub.s32 %v2784, %v4569
      %v4571 = vrot.slane %v4375, %v4570
      %v4572 = vlaneseq
      %v4573 = vshrl.u32 %v4572, 7
      %v4574 = vsub.s32 %v2789, %v4573
      %v4575 = vrot.slane %v4378, %v4574
      %v4576 = vsel %vm2794, %v4575, %v4571
      %v4577 = vlaneseq
      %v4578 = vshrl.u32 %v4577, 7
      %v4579 = vsub.s32 %v2784, %v4578
      %v4580 = vrot.slane %v4381, %v4579
      %v4581 = vlaneseq
      %v4582 = vshrl.u32 %v4581, 7
      %v4583 = vsub.s32 %v2789, %v4582
      %v4584 = vrot.slane %v4384, %v4583
      %v4585 = vsel %vm2794, %v4584, %v4580
      %v4586 = vlaneseq
      %v4587 = vshrl.u32 %v4586, 7
      %v4588 = vsub.s32 %v2784, %v4587
      %v4589 = vrot.slane %v4387, %v4588
      %v4590 = vlaneseq
      %v4591 = vshrl.u32 %v4590, 7
      %v4592 = vsub.s32 %v2789, %v4591
      %v4593 = vrot.slane %v4390, %v4592
      %v4594 = vsel %vm2794, %v4593, %v4589
      %v4595 = vlaneseq
      %v4596 = vshrl.u32 %v4595, 7
      %v4597 = vsub.s32 %v2784, %v4596
      %v4598 = vrot.slane %v4393, %v4597
      %v4599 = vlaneseq
      %v4600 = vshrl.u32 %v4599, 7
      %v4601 = vsub.s32 %v2789, %v4600
      %v4602 = vrot.slane %v4396, %v4601
      %v4603 = vsel %vm2794, %v4602, %v4598
      %v4604 = vlaneseq
      %v4605 = vshrl.u32 %v4604, 7
      %v4606 = vsub.s32 %v2784, %v4605
      %v4607 = vrot.slane %v4399, %v4606
      %v4608 = vlaneseq
      %v4609 = vshrl.u32 %v4608, 7
      %v4610 = vsub.s32 %v2789, %v4609
      %v4611 = vrot.slane %v4402, %v4610
      %v4612 = vsel %vm2794, %v4611, %v4607
      %v4613 = vlaneseq
      %v4614 = vshrl.u32 %v4613, 7
      %v4615 = vsub.s32 %v2784, %v4614
      %v4616 = vrot.slane %v4405, %v4615
      %v4617 = vlaneseq
      %v4618 = vshrl.u32 %v4617, 7
      %v4619 = vsub.s32 %v2789, %v4618
      %v4620 = vrot.slane %v4408, %v4619
      %v4621 = vsel %vm2794, %v4620, %v4616
      %v4622 = vlaneseq
      %v4623 = vshrl.u32 %v4622, 7
      %v4624 = vsub.s32 %v2784, %v4623
      %v4625 = vrot.slane %v4411, %v4624
      %v4626 = vlaneseq
      %v4627 = vshrl.u32 %v4626, 7
      %v4628 = vsub.s32 %v2789, %v4627
      %v4629 = vrot.slane %v4414, %v4628
      %v4630 = vsel %vm2794, %v4629, %v4625
      %v4631 = vlaneseq
      %v4632 = vshrl.u32 %v4631, 7
      %v4633 = vsub.s32 %v2784, %v4632
      %v4634 = vrot.slane %v4417, %v4633
      %v4635 = vlaneseq
      %v4636 = vshrl.u32 %v4635, 7
      %v4637 = vsub.s32 %v2789, %v4636
      %v4638 = vrot.slane %v4420, %v4637
      %v4639 = vsel %vm2794, %v4638, %v4634
      %v4640 = vlaneseq
      %v4641 = vshrl.u32 %v4640, 7
      %v4642 = vsub.s32 %v2784, %v4641
      %v4643 = vrot.slane %v4423, %v4642
      %v4644 = vlaneseq
      %v4645 = vshrl.u32 %v4644, 7
      %v4646 = vsub.s32 %v2789, %v4645
      %v4647 = vrot.slane %v4426, %v4646
      %v4648 = vsel %vm2794, %v4647, %v4643
      %v4649 = vlaneseq
      %v4650 = vshrl.u32 %v4649, 7
      %v4651 = vsub.s32 %v2784, %v4650
      %v4652 = vrot.slane %v4429, %v4651
      %v4653 = vlaneseq
      %v4654 = vshrl.u32 %v4653, 7
      %v4655 = vsub.s32 %v2789, %v4654
      %v4656 = vrot.slane %v4432, %v4655
      %v4657 = vsel %vm2794, %v4656, %v4652
      %v4658 = vlaneseq
      %v4659 = vshrl.u32 %v4658, 7
      %v4660 = vsub.s32 %v2784, %v4659
      %v4661 = vrot.slane %v4435, %v4660
      %v4662 = vlaneseq
      %v4663 = vshrl.u32 %v4662, 7
      %v4664 = vsub.s32 %v2789, %v4663
      %v4665 = vrot.slane %v4438, %v4664
      %v4666 = vsel %vm2794, %v4665, %v4661
      %v4667 = vlaneseq
      %v4668 = vshrl.u32 %v4667, 7
      %v4669 = vsub.s32 %v2784, %v4668
      %v4670 = vrot.slane %v4441, %v4669
      %v4671 = vlaneseq
      %v4672 = vshrl.u32 %v4671, 7
      %v4673 = vsub.s32 %v2789, %v4672
      %v4674 = vrot.slane %v4444, %v4673
      %v4675 = vsel %vm2794, %v4674, %v4670
      %v4676 = vlaneseq
      %v4677 = vshrl.u32 %v4676, 7
      %v4678 = vsub.s32 %v2784, %v4677
      %v4679 = vrot.slane %v4447, %v4678
      %v4680 = vlaneseq
      %v4681 = vshrl.u32 %v4680, 7
      %v4682 = vsub.s32 %v2789, %v4681
      %v4683 = vrot.slane %v4450, %v4682
      %v4684 = vsel %vm2794, %v4683, %v4679
      %v4685 = vlaneseq
      %v4686 = vshrl.u32 %v4685, 7
      %v4687 = vsub.s32 %v2784, %v4686
      %v4688 = vrot.slane %v4453, %v4687
      %v4689 = vlaneseq
      %v4690 = vshrl.u32 %v4689, 7
      %v4691 = vsub.s32 %v2789, %v4690
      %v4692 = vrot.slane %v4456, %v4691
      %v4693 = vsel %vm2794, %v4692, %v4688
      %v4694 = vlaneseq
      %v4695 = vshrl.u32 %v4694, 7
      %v4696 = vsub.s32 %v2784, %v4695
      %v4697 = vrot.slane %v4459, %v4696
      %v4698 = vlaneseq
      %v4699 = vshrl.u32 %v4698, 7
      %v4700 = vsub.s32 %v2789, %v4699
      %v4701 = vrot.slane %v4462, %v4700
      %v4702 = vsel %vm2794, %v4701, %v4697
      %v4703 = vlaneseq
      %v4704 = vshrl.u32 %v4703, 7
      %v4705 = vsub.s32 %v2784, %v4704
      %v4706 = vrot.slane %v4465, %v4705
      %v4707 = vlaneseq
      %v4708 = vshrl.u32 %v4707, 7
      %v4709 = vsub.s32 %v2789, %v4708
      %v4710 = vrot.slane %v4468, %v4709
      %v4711 = vsel %vm2794, %v4710, %v4706
      %v4712 = vlaneseq
      %v4713 = vshrl.u32 %v4712, 7
      %v4714 = vsub.s32 %v2784, %v4713
      %v4715 = vrot.slane %v4471, %v4714
      %v4716 = vlaneseq
      %v4717 = vshrl.u32 %v4716, 7
      %v4718 = vsub.s32 %v2789, %v4717
      %v4719 = vrot.slane %v4474, %v4718
      %v4720 = vsel %vm2794, %v4719, %v4715
      %v4721 = vlaneseq
      %v4722 = vshrl.u32 %v4721, 7
      %v4723 = vsub.s32 %v2784, %v4722
      %v4724 = vrot.slane %v4477, %v4723
      %v4725 = vlaneseq
      %v4726 = vshrl.u32 %v4725, 7
      %v4727 = vsub.s32 %v2789, %v4726
      %v4728 = vrot.slane %v4480, %v4727
      %v4729 = vsel %vm2794, %v4728, %v4724
      %v4730 = vlaneseq
      %v4731 = vshrl.u32 %v4730, 7
      %v4732 = vsub.s32 %v2784, %v4731
      %v4733 = vrot.slane %v4483, %v4732
      %v4734 = vlaneseq
      %v4735 = vshrl.u32 %v4734, 7
      %v4736 = vsub.s32 %v2789, %v4735
      %v4737 = vrot.slane %v4486, %v4736
      %v4738 = vsel %vm2794, %v4737, %v4733
      %v4739 = vlaneseq
      %v4740 = vshrl.u32 %v4739, 7
      %v4741 = vsub.s32 %v2784, %v4740
      %v4742 = vrot.slane %v4489, %v4741
      %v4743 = vlaneseq
      %v4744 = vshrl.u32 %v4743, 7
      %v4745 = vsub.s32 %v2789, %v4744
      %v4746 = vrot.slane %v4492, %v4745
      %v4747 = vsel %vm2794, %v4746, %v4742
      %v4748 = vlaneseq
      %v4749 = vshrl.u32 %v4748, 7
      %v4750 = vsub.s32 %v2784, %v4749
      %v4751 = vrot.slane %v4495, %v4750
      %v4752 = vlaneseq
      %v4753 = vshrl.u32 %v4752, 7
      %v4754 = vsub.s32 %v2789, %v4753
      %v4755 = vrot.slane %v4498, %v4754
      %v4756 = vsel %vm2794, %v4755, %v4751
      %v4757 = vlaneseq
      %v4758 = vshrl.u32 %v4757, 7
      %v4759 = vsub.s32 %v2784, %v4758
      %v4760 = vrot.slane %v4501, %v4759
      %v4761 = vlaneseq
      %v4762 = vshrl.u32 %v4761, 7
      %v4763 = vsub.s32 %v2789, %v4762
      %v4764 = vrot.slane %v4504, %v4763
      %v4765 = vsel %vm2794, %v4764, %v4760
      %v4766 = vlaneseq
      %v4767 = vshrl.u32 %v4766, 7
      %v4768 = vsub.s32 %v2784, %v4767
      %v4769 = vrot.slane %v4507, %v4768
      %v4770 = vlaneseq
      %v4771 = vshrl.u32 %v4770, 7
      %v4772 = vsub.s32 %v2789, %v4771
      %v4773 = vrot.slane %v4510, %v4772
      %v4774 = vsel %vm2794, %v4773, %v4769
      %v4775 = vlaneseq
      %v4776 = vshrl.u32 %v4775, 7
      %v4777 = vsub.s32 %v2784, %v4776
      %v4778 = vrot.slane %v4513, %v4777
      %v4779 = vlaneseq
      %v4780 = vshrl.u32 %v4779, 7
      %v4781 = vsub.s32 %v2789, %v4780
      %v4782 = vrot.slane %v4516, %v4781
      %v4783 = vsel %vm2794, %v4782, %v4778
      %v4784 = vlaneseq
      %v4785 = vshrl.u32 %v4784, 7
      %v4786 = vsub.s32 %v2784, %v4785
      %v4787 = vrot.slane %v4519, %v4786
      %v4788 = vlaneseq
      %v4789 = vshrl.u32 %v4788, 7
      %v4790 = vsub.s32 %v2789, %v4789
      %v4791 = vrot.slane %v4522, %v4790
      %v4792 = vsel %vm2794, %v4791, %v4787
      %v4793 = vlaneseq
      %v4794 = vshrl.u32 %v4793, 7
      %v4795 = vsub.s32 %v2784, %v4794
      %v4796 = vrot.slane %v4525, %v4795
      %v4797 = vlaneseq
      %v4798 = vshrl.u32 %v4797, 7
      %v4799 = vsub.s32 %v2789, %v4798
      %v4800 = vrot.slane %v4528, %v4799
      %v4801 = vsel %vm2794, %v4800, %v4796
      %v4802 = vlaneseq
      %v4803 = vshrl.u32 %v4802, 7
      %v4804 = vsub.s32 %v2784, %v4803
      %v4805 = vrot.slane %v4531, %v4804
      %v4806 = vlaneseq
      %v4807 = vshrl.u32 %v4806, 7
      %v4808 = vsub.s32 %v2789, %v4807
      %v4809 = vrot.slane %v4534, %v4808
      %v4810 = vsel %vm2794, %v4809, %v4805
      %v4811 = vlaneseq
      %v4812 = vshrl.u32 %v4811, 7
      %v4813 = vsub.s32 %v2784, %v4812
      %v4814 = vrot.slane %v4537, %v4813
      %v4815 = vlaneseq
      %v4816 = vshrl.u32 %v4815, 7
      %v4817 = vsub.s32 %v2789, %v4816
      %v4818 = vrot.slane %v4540, %v4817
      %v4819 = vsel %vm2794, %v4818, %v4814
      %v4820 = vlaneseq
      %v4821 = vshrl.u32 %v4820, 7
      %v4822 = vsub.s32 %v2784, %v4821
      %v4823 = vrot.slane %v4543, %v4822
      %v4824 = vlaneseq
      %v4825 = vshrl.u32 %v4824, 7
      %v4826 = vsub.s32 %v2789, %v4825
      %v4827 = vrot.slane %v4546, %v4826
      %v4828 = vsel %vm2794, %v4827, %v4823
      %v4829 = vlaneseq
      %v4830 = vshrl.u32 %v4829, 7
      %v4831 = vsub.s32 %v2784, %v4830
      %v4832 = vrot.slane %v4549, %v4831
      %v4833 = vlaneseq
      %v4834 = vshrl.u32 %v4833, 7
      %v4835 = vsub.s32 %v2789, %v4834
      %v4836 = vrot.slane %v4552, %v4835
      %v4837 = vsel %vm2794, %v4836, %v4832
      %v4838 = vlaneseq
      %v4839 = vshrl.u32 %v4838, 7
      %v4840 = vsub.s32 %v2784, %v4839
      %v4841 = vrot.slane %v4555, %v4840
      %v4842 = vlaneseq
      %v4843 = vshrl.u32 %v4842, 7
      %v4844 = vsub.s32 %v2789, %v4843
      %v4845 = vrot.slane %v4558, %v4844
      %v4846 = vsel %vm2794, %v4845, %v4841
      %v4847 = vsel %vm3075, %v4576, %v4567
      %v4848 = vsel %vm3077, %v4585, %v4847
      %v4849 = vsel %vm3079, %v4594, %v4848
      %v4850 = vsel %vm3081, %v4603, %v4849
      %v4851 = vsel %vm3083, %v4612, %v4850
      %v4852 = vsel %vm3085, %v4621, %v4851
      %v4853 = vsel %vm3087, %v4630, %v4852
      %v4854 = vsel %vm3075, %v4648, %v4639
      %v4855 = vsel %vm3077, %v4657, %v4854
      %v4856 = vsel %vm3079, %v4666, %v4855
      %v4857 = vsel %vm3081, %v4675, %v4856
      %v4858 = vsel %vm3083, %v4684, %v4857
      %v4859 = vsel %vm3085, %v4693, %v4858
      %v4860 = vsel %vm3087, %v4702, %v4859
      %v4861 = vsel %vm3075, %v4720, %v4711
      %v4862 = vsel %vm3077, %v4729, %v4861
      %v4863 = vsel %vm3079, %v4738, %v4862
      %v4864 = vsel %vm3081, %v4747, %v4863
      %v4865 = vsel %vm3083, %v4756, %v4864
      %v4866 = vsel %vm3085, %v4765, %v4865
      %v4867 = vsel %vm3087, %v4774, %v4866
      %v4868 = vsel %vm3075, %v4792, %v4783
      %v4869 = vsel %vm3077, %v4801, %v4868
      %v4870 = vsel %vm3079, %v4810, %v4869
      %v4871 = vsel %vm3081, %v4819, %v4870
      %v4872 = vsel %vm3083, %v4828, %v4871
      %v4873 = vsel %vm3085, %v4837, %v4872
      %v4874 = vsel %vm3087, %v4846, %v4873
      %v4879 = vcombine.low %v4853, %v4867
      %v4880 = vcombine.high %v4853, %v4867
      %v4882 = vunpack.c.l.s4 1983009808
      %v4883 = vunpack.c.0.s8 %v4882
      %v4884 = vlaneseq
      %v4885 = vshrl.u32 %v4884, 7
      %v4886 = vsub.s32 %v4883, %v4885
      %v4887 = vrot.slane %v4879, %v4886
      %v4889 = vunpack.c.l.s4 1983009808
      %v4890 = vunpack.c.0.s8 %v4889
      %v4891 = vlaneseq
      %v4892 = vshrl.u32 %v4891, 7
      %v4893 = vsub.s32 %v4890, %v4892
      %v4894 = vrot.slane %v4880, %v4893
      %v4895 = vcombine.low %v4860, %v4874
      %v4896 = vcombine.high %v4860, %v4874
      %v4898 = vunpack.c.l.s4 1983009808
      %v4899 = vunpack.c.0.s8 %v4898
      %v4900 = vlaneseq
      %v4901 = vshrl.u32 %v4900, 7
      %v4902 = vsub.s32 %v4899, %v4901
      %v4903 = vrot.slane %v4895, %v4902
      %v4905 = vunpack.c.l.s4 1983009808
      %v4906 = vunpack.c.0.s8 %v4905
      %v4907 = vlaneseq
      %v4908 = vshrl.u32 %v4907, 7
      %v4909 = vsub.s32 %v4906, %v4908
      %v4910 = vrot.slane %v4896, %v4909
      %v4911 = vcombine.low %v4887, %v4903
      %v4912 = vcombine.high %v4887, %v4903
      %v4914 = vunpack.c.l.s4 1934713408
      %v4915 = vunpack.c.0.s8 %v4914
      %v4916 = vlaneseq
      %v4917 = vshrl.u32 %v4916, 7
      %v4918 = vsub.s32 %v4915, %v4917
      %v4919 = vrot.slane %v4911, %v4918
      %v4921 = vunpack.c.l.s4 1934713408
      %v4922 = vunpack.c.0.s8 %v4921
      %v4923 = vlaneseq
      %v4924 = vshrl.u32 %v4923, 7
      %v4925 = vsub.s32 %v4922, %v4924
      %v4926 = vrot.slane %v4912, %v4925
      %v4927 = vcombine.low %v4894, %v4910
      %v4928 = vcombine.high %v4894, %v4910
      %v4930 = vunpack.c.l.s4 1934713408
      %v4931 = vunpack.c.0.s8 %v4930
      %v4932 = vlaneseq
      %v4933 = vshrl.u32 %v4932, 7
      %v4934 = vsub.s32 %v4931, %v4933
      %v4935 = vrot.slane %v4927, %v4934
      %v4937 = vunpack.c.l.s4 1934713408
      %v4938 = vunpack.c.0.s8 %v4937
      %v4939 = vlaneseq
      %v4940 = vshrl.u32 %v4939, 7
      %v4941 = vsub.s32 %v4938, %v4940
      %v4942 = vrot.slane %v4928, %v4941
      %v4943 = vcombine.high %v4919, 0.0
      %v4944 = vcombine.high %v4926, 0.0
      %v4945 = vcombine.high %v4935, 0.0
      %v4946 = vcombine.high %v4942, 0.0
      %v4947 = vld [vmem:[%s513] sm:$0xff]
      %v4948 = vld [vmem:[%s513 + $0x8] sm:$0xff]
      %v4949 = vld [vmem:[%s513 + $0x10] sm:$0xff]
      %v4950 = vld [vmem:[%s513 + $0x18] sm:$0xff]
      %v4951 = vld [vmem:[%s513 + $0x20] sm:$0xff]
      %v4952 = vld [vmem:[%s513 + $0x28] sm:$0xff]
      %v4953 = vld [vmem:[%s513 + $0x30] sm:$0xff]
      %v4954 = vld [vmem:[%s513 + $0x38] sm:$0xff]
      %v4955 = vld [vmem:[%s513 + $0x40] sm:$0xff]
      %v4956 = vld [vmem:[%s513 + $0x48] sm:$0xff]
      %v4957 = vld [vmem:[%s513 + $0x50] sm:$0xff]
      %v4958 = vld [vmem:[%s513 + $0x58] sm:$0xff]
      %v4959 = vld [vmem:[%s513 + $0x60] sm:$0xff]
      %v4960 = vld [vmem:[%s513 + $0x68] sm:$0xff]
      %v4961 = vld [vmem:[%s513 + $0x70] sm:$0xff]
      %v4962 = vld [vmem:[%s513 + $0x78] sm:$0xff]
      %v4964 = vsel %vm3114, %v4919, 0
      %4966 = vmatprep.subr.mxu0 0.0
      %4967 = vmatpush1.msra.mxu0 0.0
      %4968 = vmatprep.subr.mxu0 0.0
      %4969 = vmatpush1.msra.mxu0 0.0
      %4970 = vmatprep.subr.mxu0 0.0
      %4971 = vmatpush1.msra.mxu0 0.0
      %4972 = vmatprep.subr.mxu0 0.0
      %4973 = vmatpush1.msra.mxu0 0.0
      %4974 = vmatprep.subr.mxu0 0.0
      %4975 = vmatpush1.msra.mxu0 0.0
      %4976 = vmatprep.subr.mxu0 0.0
      %4977 = vmatpush1.msra.mxu0 0.0
      %4978 = vmatprep.subr.mxu0 0.0
      %4979 = vmatpush1.msra.mxu0 0.0
      %4980 = vmatprep.subr.mxu0 0.0
      %4981 = vmatpush1.msra.mxu0 0.0
      %4982 = vmatprep.subr.mxu0 0.0
      %4983 = vmatpush1.msra.mxu0 0.0
      %4984 = vmatprep.subr.mxu0 0.0
      %4985 = vmatpush1.msra.mxu0 0.0
      %4986 = vmatprep.subr.mxu0 0.0
      %4987 = vmatpush1.msra.mxu0 0.0
      %4988 = vmatprep.subr.mxu0 0.0
      %4989 = vmatpush1.msra.mxu0 0.0
      %4990 = vmatprep.subr.mxu0 0.0
      %4991 = vmatpush1.msra.mxu0 0.0
      %4992 = vmatprep.subr.mxu0 0.0
      %4993 = vmatpush1.msra.mxu0 0.0
      %4994 = vmatprep.subr.mxu0 0.0
      %4995 = vmatpush1.msra.mxu0 %v4948
      %4996 = vmatprep.subr.mxu0 0.0
      %4997 = vmatpush1.msra.mxu0 %v4947
      %4998 = vmatprep.subr.mxu0 0.0
      %4999 = vmatpush2.msra.mxu0 0.0
      %5000 = vmatprep.subr.mxu0 0.0
      %5001 = vmatpush2.msra.mxu0 0.0
      %5002 = vmatprep.subr.mxu0 0.0
      %5003 = vmatpush2.msra.mxu0 0.0
      %5004 = vmatprep.subr.mxu0 0.0
      %5005 = vmatpush2.msra.mxu0 0.0
      %5006 = vmatprep.subr.mxu0 0.0
      %5007 = vmatpush2.msra.mxu0 0.0
      %5008 = vmatprep.subr.mxu0 0.0
      %5009 = vmatpush2.msra.mxu0 0.0
      %5010 = vmatprep.subr.mxu0 0.0
      %5011 = vmatpush2.msra.mxu0 0.0
      %5012 = vmatprep.subr.mxu0 0.0
      %5013 = vmatpush2.msra.mxu0 0.0
      %5014 = vmatprep.subr.mxu0 0.0
      %5015 = vmatpush2.msra.mxu0 0.0
      %5016 = vmatprep.subr.mxu0 0.0
      %5017 = vmatpush2.msra.mxu0 0.0
      %5018 = vmatprep.subr.mxu0 0.0
      %5019 = vmatpush2.msra.mxu0 0.0
      %5020 = vmatprep.subr.mxu0 0.0
      %5021 = vmatpush2.msra.mxu0 0.0
      %5022 = vmatprep.subr.mxu0 0.0
      %5023 = vmatpush2.msra.mxu0 0.0
      %5024 = vmatprep.subr.mxu0 0.0
      %5025 = vmatpush2.msra.mxu0 0.0
      %5026 = vmatprep.subr.mxu0 0.0
      %5027 = vmatpush2.msra.mxu0 0.0
      %5028 = vmatprep.subr.mxu0 0.0
      %5029 = vmatpush2.msra.mxu0 0.0
      %5030 = vmatprep.mubr.f32.mxu0 0.0
      %5031 = vmatmul.mubr.f32.gmra.mxu0 %v4964
      %v5032 = vpop.f32.mrf.mxu0
      %v5033 = vadd.f32 0.0, %v5032
      %v5034 = vpop.f32.mrf.mxu0
      %5035 = vdwg.mxu0
      %v5037 = vsel %vm3114, %v4943, 0
      %5039 = vmatprep.subr.mxu0 0.0
      %5040 = vmatpush1.msra.mxu0 0.0
      %5041 = vmatprep.subr.mxu0 0.0
      %5042 = vmatpush1.msra.mxu0 0.0
      %5043 = vmatprep.subr.mxu0 0.0
      %5044 = vmatpush1.msra.mxu0 0.0
      %5045 = vmatprep.subr.mxu0 0.0
      %5046 = vmatpush1.msra.mxu0 0.0
      %5047 = vmatprep.subr.mxu0 0.0
      %5048 = vmatpush1.msra.mxu0 0.0
      %5049 = vmatprep.subr.mxu0 0.0
      %5050 = vmatpush1.msra.mxu0 0.0
      %5051 = vmatprep.subr.mxu0 0.0
      %5052 = vmatpush1.msra.mxu0 0.0
      %5053 = vmatprep.subr.mxu0 0.0
      %5054 = vmatpush1.msra.mxu0 0.0
      %5055 = vmatprep.subr.mxu0 0.0
      %5056 = vmatpush1.msra.mxu0 0.0
      %5057 = vmatprep.subr.mxu0 0.0
      %5058 = vmatpush1.msra.mxu0 0.0
      %5059 = vmatprep.subr.mxu0 0.0
      %5060 = vmatpush1.msra.mxu0 0.0
      %5061 = vmatprep.subr.mxu0 0.0
      %5062 = vmatpush1.msra.mxu0 0.0
      %5063 = vmatprep.subr.mxu0 0.0
      %5064 = vmatpush1.msra.mxu0 0.0
      %5065 = vmatprep.subr.mxu0 0.0
      %5066 = vmatpush1.msra.mxu0 0.0
      %5067 = vmatprep.subr.mxu0 0.0
      %5068 = vmatpush1.msra.mxu0 %v4950
      %5069 = vmatprep.subr.mxu0 0.0
      %5070 = vmatpush1.msra.mxu0 %v4949
      %5071 = vmatprep.subr.mxu0 0.0
      %5072 = vmatpush2.msra.mxu0 0.0
      %5073 = vmatprep.subr.mxu0 0.0
      %5074 = vmatpush2.msra.mxu0 0.0
      %5075 = vmatprep.subr.mxu0 0.0
      %5076 = vmatpush2.msra.mxu0 0.0
      %5077 = vmatprep.subr.mxu0 0.0
      %5078 = vmatpush2.msra.mxu0 0.0
      %5079 = vmatprep.subr.mxu0 0.0
      %5080 = vmatpush2.msra.mxu0 0.0
      %5081 = vmatprep.subr.mxu0 0.0
      %5082 = vmatpush2.msra.mxu0 0.0
      %5083 = vmatprep.subr.mxu0 0.0
      %5084 = vmatpush2.msra.mxu0 0.0
      %5085 = vmatprep.subr.mxu0 0.0
      %5086 = vmatpush2.msra.mxu0 0.0
      %5087 = vmatprep.subr.mxu0 0.0
      %5088 = vmatpush2.msra.mxu0 0.0
      %5089 = vmatprep.subr.mxu0 0.0
      %5090 = vmatpush2.msra.mxu0 0.0
      %5091 = vmatprep.subr.mxu0 0.0
      %5092 = vmatpush2.msra.mxu0 0.0
      %5093 = vmatprep.subr.mxu0 0.0
      %5094 = vmatpush2.msra.mxu0 0.0
      %5095 = vmatprep.subr.mxu0 0.0
      %5096 = vmatpush2.msra.mxu0 0.0
      %5097 = vmatprep.subr.mxu0 0.0
      %5098 = vmatpush2.msra.mxu0 0.0
      %5099 = vmatprep.subr.mxu0 0.0
      %5100 = vmatpush2.msra.mxu0 0.0
      %5101 = vmatprep.subr.mxu0 0.0
      %5102 = vmatpush2.msra.mxu0 0.0
      %5103 = vmatprep.mubr.f32.mxu0 0.0
      %5104 = vmatmul.mubr.f32.gmra.mxu0 %v5037
      %v5105 = vpop.f32.mrf.mxu0
      %v5106 = vadd.f32 0.0, %v5105
      %v5107 = vpop.f32.mrf.mxu0
      %5108 = vdwg.mxu0
      %v5110 = vsel %vm3114, %v4926, 0
      %5112 = vmatprep.subr.mxu0 0.0
      %5113 = vmatpush1.msra.mxu0 0.0
      %5114 = vmatprep.subr.mxu0 0.0
      %5115 = vmatpush1.msra.mxu0 0.0
      %5116 = vmatprep.subr.mxu0 0.0
      %5117 = vmatpush1.msra.mxu0 0.0
      %5118 = vmatprep.subr.mxu0 0.0
      %5119 = vmatpush1.msra.mxu0 0.0
      %5120 = vmatprep.subr.mxu0 0.0
      %5121 = vmatpush1.msra.mxu0 0.0
      %5122 = vmatprep.subr.mxu0 0.0
      %5123 = vmatpush1.msra.mxu0 0.0
      %5124 = vmatprep.subr.mxu0 0.0
      %5125 = vmatpush1.msra.mxu0 0.0
      %5126 = vmatprep.subr.mxu0 0.0
      %5127 = vmatpush1.msra.mxu0 0.0
      %5128 = vmatprep.subr.mxu0 0.0
      %5129 = vmatpush1.msra.mxu0 0.0
      %5130 = vmatprep.subr.mxu0 0.0
      %5131 = vmatpush1.msra.mxu0 0.0
      %5132 = vmatprep.subr.mxu0 0.0
      %5133 = vmatpush1.msra.mxu0 0.0
      %5134 = vmatprep.subr.mxu0 0.0
      %5135 = vmatpush1.msra.mxu0 0.0
      %5136 = vmatprep.subr.mxu0 0.0
      %5137 = vmatpush1.msra.mxu0 0.0
      %5138 = vmatprep.subr.mxu0 0.0
      %5139 = vmatpush1.msra.mxu0 0.0
      %5140 = vmatprep.subr.mxu0 0.0
      %5141 = vmatpush1.msra.mxu0 %v4952
      %5142 = vmatprep.subr.mxu0 0.0
      %5143 = vmatpush1.msra.mxu0 %v4951
      %5144 = vmatprep.subr.mxu0 0.0
      %5145 = vmatpush2.msra.mxu0 0.0
      %5146 = vmatprep.subr.mxu0 0.0
      %5147 = vmatpush2.msra.mxu0 0.0
      %5148 = vmatprep.subr.mxu0 0.0
      %5149 = vmatpush2.msra.mxu0 0.0
      %5150 = vmatprep.subr.mxu0 0.0
      %5151 = vmatpush2.msra.mxu0 0.0
      %5152 = vmatprep.subr.mxu0 0.0
      %5153 = vmatpush2.msra.mxu0 0.0
      %5154 = vmatprep.subr.mxu0 0.0
      %5155 = vmatpush2.msra.mxu0 0.0
      %5156 = vmatprep.subr.mxu0 0.0
      %5157 = vmatpush2.msra.mxu0 0.0
      %5158 = vmatprep.subr.mxu0 0.0
      %5159 = vmatpush2.msra.mxu0 0.0
      %5160 = vmatprep.subr.mxu0 0.0
      %5161 = vmatpush2.msra.mxu0 0.0
      %5162 = vmatprep.subr.mxu0 0.0
      %5163 = vmatpush2.msra.mxu0 0.0
      %5164 = vmatprep.subr.mxu0 0.0
      %5165 = vmatpush2.msra.mxu0 0.0
      %5166 = vmatprep.subr.mxu0 0.0
      %5167 = vmatpush2.msra.mxu0 0.0
      %5168 = vmatprep.subr.mxu0 0.0
      %5169 = vmatpush2.msra.mxu0 0.0
      %5170 = vmatprep.subr.mxu0 0.0
      %5171 = vmatpush2.msra.mxu0 0.0
      %5172 = vmatprep.subr.mxu0 0.0
      %5173 = vmatpush2.msra.mxu0 0.0
      %5174 = vmatprep.subr.mxu0 0.0
      %5175 = vmatpush2.msra.mxu0 0.0
      %5176 = vmatprep.mubr.f32.mxu0 0.0
      %5177 = vmatmul.mubr.f32.gmra.mxu0 %v5110
      %v5178 = vpop.f32.mrf.mxu0
      %v5179 = vadd.f32 0.0, %v5178
      %v5180 = vpop.f32.mrf.mxu0
      %5181 = vdwg.mxu0
      %v5183 = vsel %vm3114, %v4944, 0
      %5185 = vmatprep.subr.mxu0 0.0
      %5186 = vmatpush1.msra.mxu0 0.0
      %5187 = vmatprep.subr.mxu0 0.0
      %5188 = vmatpush1.msra.mxu0 0.0
      %5189 = vmatprep.subr.mxu0 0.0
      %5190 = vmatpush1.msra.mxu0 0.0
      %5191 = vmatprep.subr.mxu0 0.0
      %5192 = vmatpush1.msra.mxu0 0.0
      %5193 = vmatprep.subr.mxu0 0.0
      %5194 = vmatpush1.msra.mxu0 0.0
      %5195 = vmatprep.subr.mxu0 0.0
      %5196 = vmatpush1.msra.mxu0 0.0
      %5197 = vmatprep.subr.mxu0 0.0
      %5198 = vmatpush1.msra.mxu0 0.0
      %5199 = vmatprep.subr.mxu0 0.0
      %5200 = vmatpush1.msra.mxu0 0.0
      %5201 = vmatprep.subr.mxu0 0.0
      %5202 = vmatpush1.msra.mxu0 0.0
      %5203 = vmatprep.subr.mxu0 0.0
      %5204 = vmatpush1.msra.mxu0 0.0
      %5205 = vmatprep.subr.mxu0 0.0
      %5206 = vmatpush1.msra.mxu0 0.0
      %5207 = vmatprep.subr.mxu0 0.0
      %5208 = vmatpush1.msra.mxu0 0.0
      %5209 = vmatprep.subr.mxu0 0.0
      %5210 = vmatpush1.msra.mxu0 0.0
      %5211 = vmatprep.subr.mxu0 0.0
      %5212 = vmatpush1.msra.mxu0 0.0
      %5213 = vmatprep.subr.mxu0 0.0
      %5214 = vmatpush1.msra.mxu0 %v4954
      %5215 = vmatprep.subr.mxu0 0.0
      %5216 = vmatpush1.msra.mxu0 %v4953
      %5217 = vmatprep.subr.mxu0 0.0
      %5218 = vmatpush2.msra.mxu0 0.0
      %5219 = vmatprep.subr.mxu0 0.0
      %5220 = vmatpush2.msra.mxu0 0.0
      %5221 = vmatprep.subr.mxu0 0.0
      %5222 = vmatpush2.msra.mxu0 0.0
      %5223 = vmatprep.subr.mxu0 0.0
      %5224 = vmatpush2.msra.mxu0 0.0
      %5225 = vmatprep.subr.mxu0 0.0
      %5226 = vmatpush2.msra.mxu0 0.0
      %5227 = vmatprep.subr.mxu0 0.0
      %5228 = vmatpush2.msra.mxu0 0.0
      %5229 = vmatprep.subr.mxu0 0.0
      %5230 = vmatpush2.msra.mxu0 0.0
      %5231 = vmatprep.subr.mxu0 0.0
      %5232 = vmatpush2.msra.mxu0 0.0
      %5233 = vmatprep.subr.mxu0 0.0
      %5234 = vmatpush2.msra.mxu0 0.0
      %5235 = vmatprep.subr.mxu0 0.0
      %5236 = vmatpush2.msra.mxu0 0.0
      %5237 = vmatprep.subr.mxu0 0.0
      %5238 = vmatpush2.msra.mxu0 0.0
      %5239 = vmatprep.subr.mxu0 0.0
      %5240 = vmatpush2.msra.mxu0 0.0
      %5241 = vmatprep.subr.mxu0 0.0
      %5242 = vmatpush2.msra.mxu0 0.0
      %5243 = vmatprep.subr.mxu0 0.0
      %5244 = vmatpush2.msra.mxu0 0.0
      %5245 = vmatprep.subr.mxu0 0.0
      %5246 = vmatpush2.msra.mxu0 0.0
      %5247 = vmatprep.subr.mxu0 0.0
      %5248 = vmatpush2.msra.mxu0 0.0
      %5249 = vmatprep.mubr.f32.mxu0 0.0
      %5250 = vmatmul.mubr.f32.gmra.mxu0 %v5183
      %v5251 = vpop.f32.mrf.mxu0
      %v5252 = vadd.f32 0.0, %v5251
      %v5253 = vpop.f32.mrf.mxu0
      %5254 = vdwg.mxu0
      %v5256 = vsel %vm3114, %v4935, 0
      %5258 = vmatprep.subr.mxu0 0.0
      %5259 = vmatpush1.msra.mxu0 0.0
      %5260 = vmatprep.subr.mxu0 0.0
      %5261 = vmatpush1.msra.mxu0 0.0
      %5262 = vmatprep.subr.mxu0 0.0
      %5263 = vmatpush1.msra.mxu0 0.0
      %5264 = vmatprep.subr.mxu0 0.0
      %5265 = vmatpush1.msra.mxu0 0.0
      %5266 = vmatprep.subr.mxu0 0.0
      %5267 = vmatpush1.msra.mxu0 0.0
      %5268 = vmatprep.subr.mxu0 0.0
      %5269 = vmatpush1.msra.mxu0 0.0
      %5270 = vmatprep.subr.mxu0 0.0
      %5271 = vmatpush1.msra.mxu0 0.0
      %5272 = vmatprep.subr.mxu0 0.0
      %5273 = vmatpush1.msra.mxu0 0.0
      %5274 = vmatprep.subr.mxu0 0.0
      %5275 = vmatpush1.msra.mxu0 0.0
      %5276 = vmatprep.subr.mxu0 0.0
      %5277 = vmatpush1.msra.mxu0 0.0
      %5278 = vmatprep.subr.mxu0 0.0
      %5279 = vmatpush1.msra.mxu0 0.0
      %5280 = vmatprep.subr.mxu0 0.0
      %5281 = vmatpush1.msra.mxu0 0.0
      %5282 = vmatprep.subr.mxu0 0.0
      %5283 = vmatpush1.msra.mxu0 0.0
      %5284 = vmatprep.subr.mxu0 0.0
      %5285 = vmatpush1.msra.mxu0 0.0
      %5286 = vmatprep.subr.mxu0 0.0
      %5287 = vmatpush1.msra.mxu0 %v4956
      %5288 = vmatprep.subr.mxu0 0.0
      %5289 = vmatpush1.msra.mxu0 %v4955
      %5290 = vmatprep.subr.mxu0 0.0
      %5291 = vmatpush2.msra.mxu0 0.0
      %5292 = vmatprep.subr.mxu0 0.0
      %5293 = vmatpush2.msra.mxu0 0.0
      %5294 = vmatprep.subr.mxu0 0.0
      %5295 = vmatpush2.msra.mxu0 0.0
      %5296 = vmatprep.subr.mxu0 0.0
      %5297 = vmatpush2.msra.mxu0 0.0
      %5298 = vmatprep.subr.mxu0 0.0
      %5299 = vmatpush2.msra.mxu0 0.0
      %5300 = vmatprep.subr.mxu0 0.0
      %5301 = vmatpush2.msra.mxu0 0.0
      %5302 = vmatprep.subr.mxu0 0.0
      %5303 = vmatpush2.msra.mxu0 0.0
      %5304 = vmatprep.subr.mxu0 0.0
      %5305 = vmatpush2.msra.mxu0 0.0
      %5306 = vmatprep.subr.mxu0 0.0
      %5307 = vmatpush2.msra.mxu0 0.0
      %5308 = vmatprep.subr.mxu0 0.0
      %5309 = vmatpush2.msra.mxu0 0.0
      %5310 = vmatprep.subr.mxu0 0.0
      %5311 = vmatpush2.msra.mxu0 0.0
      %5312 = vmatprep.subr.mxu0 0.0
      %5313 = vmatpush2.msra.mxu0 0.0
      %5314 = vmatprep.subr.mxu0 0.0
      %5315 = vmatpush2.msra.mxu0 0.0
      %5316 = vmatprep.subr.mxu0 0.0
      %5317 = vmatpush2.msra.mxu0 0.0
      %5318 = vmatprep.subr.mxu0 0.0
      %5319 = vmatpush2.msra.mxu0 0.0
      %5320 = vmatprep.subr.mxu0 0.0
      %5321 = vmatpush2.msra.mxu0 0.0
      %5322 = vmatprep.mubr.f32.mxu0 0.0
      %5323 = vmatmul.mubr.f32.gmra.mxu0 %v5256
      %v5324 = vpop.f32.mrf.mxu0
      %v5325 = vadd.f32 0.0, %v5324
      %v5326 = vpop.f32.mrf.mxu0
      %5327 = vdwg.mxu0
      %v5329 = vsel %vm3114, %v4945, 0
      %5331 = vmatprep.subr.mxu0 0.0
      %5332 = vmatpush1.msra.mxu0 0.0
      %5333 = vmatprep.subr.mxu0 0.0
      %5334 = vmatpush1.msra.mxu0 0.0
      %5335 = vmatprep.subr.mxu0 0.0
      %5336 = vmatpush1.msra.mxu0 0.0
      %5337 = vmatprep.subr.mxu0 0.0
      %5338 = vmatpush1.msra.mxu0 0.0
      %5339 = vmatprep.subr.mxu0 0.0
      %5340 = vmatpush1.msra.mxu0 0.0
      %5341 = vmatprep.subr.mxu0 0.0
      %5342 = vmatpush1.msra.mxu0 0.0
      %5343 = vmatprep.subr.mxu0 0.0
      %5344 = vmatpush1.msra.mxu0 0.0
      %5345 = vmatprep.subr.mxu0 0.0
      %5346 = vmatpush1.msra.mxu0 0.0
      %5347 = vmatprep.subr.mxu0 0.0
      %5348 = vmatpush1.msra.mxu0 0.0
      %5349 = vmatprep.subr.mxu0 0.0
      %5350 = vmatpush1.msra.mxu0 0.0
      %5351 = vmatprep.subr.mxu0 0.0
      %5352 = vmatpush1.msra.mxu0 0.0
      %5353 = vmatprep.subr.mxu0 0.0
      %5354 = vmatpush1.msra.mxu0 0.0
      %5355 = vmatprep.subr.mxu0 0.0
      %5356 = vmatpush1.msra.mxu0 0.0
      %5357 = vmatprep.subr.mxu0 0.0
      %5358 = vmatpush1.msra.mxu0 0.0
      %5359 = vmatprep.subr.mxu0 0.0
      %5360 = vmatpush1.msra.mxu0 %v4958
      %5361 = vmatprep.subr.mxu0 0.0
      %5362 = vmatpush1.msra.mxu0 %v4957
      %5363 = vmatprep.subr.mxu0 0.0
      %5364 = vmatpush2.msra.mxu0 0.0
      %5365 = vmatprep.subr.mxu0 0.0
      %5366 = vmatpush2.msra.mxu0 0.0
      %5367 = vmatprep.subr.mxu0 0.0
      %5368 = vmatpush2.msra.mxu0 0.0
      %5369 = vmatprep.subr.mxu0 0.0
      %5370 = vmatpush2.msra.mxu0 0.0
      %5371 = vmatprep.subr.mxu0 0.0
      %5372 = vmatpush2.msra.mxu0 0.0
      %5373 = vmatprep.subr.mxu0 0.0
      %5374 = vmatpush2.msra.mxu0 0.0
      %5375 = vmatprep.subr.mxu0 0.0
      %5376 = vmatpush2.msra.mxu0 0.0
      %5377 = vmatprep.subr.mxu0 0.0
      %5378 = vmatpush2.msra.mxu0 0.0
      %5379 = vmatprep.subr.mxu0 0.0
      %5380 = vmatpush2.msra.mxu0 0.0
      %5381 = vmatprep.subr.mxu0 0.0
      %5382 = vmatpush2.msra.mxu0 0.0
      %5383 = vmatprep.subr.mxu0 0.0
      %5384 = vmatpush2.msra.mxu0 0.0
      %5385 = vmatprep.subr.mxu0 0.0
      %5386 = vmatpush2.msra.mxu0 0.0
      %5387 = vmatprep.subr.mxu0 0.0
      %5388 = vmatpush2.msra.mxu0 0.0
      %5389 = vmatprep.subr.mxu0 0.0
      %5390 = vmatpush2.msra.mxu0 0.0
      %5391 = vmatprep.subr.mxu0 0.0
      %5392 = vmatpush2.msra.mxu0 0.0
      %5393 = vmatprep.subr.mxu0 0.0
      %5394 = vmatpush2.msra.mxu0 0.0
      %5395 = vmatprep.mubr.f32.mxu0 0.0
      %5396 = vmatmul.mubr.f32.gmra.mxu0 %v5329
      %v5397 = vpop.f32.mrf.mxu0
      %v5398 = vadd.f32 0.0, %v5397
      %v5399 = vpop.f32.mrf.mxu0
      %5400 = vdwg.mxu0
      %v5402 = vsel %vm3114, %v4942, 0
      %5404 = vmatprep.subr.mxu0 0.0
      %5405 = vmatpush1.msra.mxu0 0.0
      %5406 = vmatprep.subr.mxu0 0.0
      %5407 = vmatpush1.msra.mxu0 0.0
      %5408 = vmatprep.subr.mxu0 0.0
      %5409 = vmatpush1.msra.mxu0 0.0
      %5410 = vmatprep.subr.mxu0 0.0
      %5411 = vmatpush1.msra.mxu0 0.0
      %5412 = vmatprep.subr.mxu0 0.0
      %5413 = vmatpush1.msra.mxu0 0.0
      %5414 = vmatprep.subr.mxu0 0.0
      %5415 = vmatpush1.msra.mxu0 0.0
      %5416 = vmatprep.subr.mxu0 0.0
      %5417 = vmatpush1.msra.mxu0 0.0
      %5418 = vmatprep.subr.mxu0 0.0
      %5419 = vmatpush1.msra.mxu0 0.0
      %5420 = vmatprep.subr.mxu0 0.0
      %5421 = vmatpush1.msra.mxu0 0.0
      %5422 = vmatprep.subr.mxu0 0.0
      %5423 = vmatpush1.msra.mxu0 0.0
      %5424 = vmatprep.subr.mxu0 0.0
      %5425 = vmatpush1.msra.mxu0 0.0
      %5426 = vmatprep.subr.mxu0 0.0
      %5427 = vmatpush1.msra.mxu0 0.0
      %5428 = vmatprep.subr.mxu0 0.0
      %5429 = vmatpush1.msra.mxu0 0.0
      %5430 = vmatprep.subr.mxu0 0.0
      %5431 = vmatpush1.msra.mxu0 0.0
      %5432 = vmatprep.subr.mxu0 0.0
      %5433 = vmatpush1.msra.mxu0 %v4960
      %5434 = vmatprep.subr.mxu0 0.0
      %5435 = vmatpush1.msra.mxu0 %v4959
      %5436 = vmatprep.subr.mxu0 0.0
      %5437 = vmatpush2.msra.mxu0 0.0
      %5438 = vmatprep.subr.mxu0 0.0
      %5439 = vmatpush2.msra.mxu0 0.0
      %5440 = vmatprep.subr.mxu0 0.0
      %5441 = vmatpush2.msra.mxu0 0.0
      %5442 = vmatprep.subr.mxu0 0.0
      %5443 = vmatpush2.msra.mxu0 0.0
      %5444 = vmatprep.subr.mxu0 0.0
      %5445 = vmatpush2.msra.mxu0 0.0
      %5446 = vmatprep.subr.mxu0 0.0
      %5447 = vmatpush2.msra.mxu0 0.0
      %5448 = vmatprep.subr.mxu0 0.0
      %5449 = vmatpush2.msra.mxu0 0.0
      %5450 = vmatprep.subr.mxu0 0.0
      %5451 = vmatpush2.msra.mxu0 0.0
      %5452 = vmatprep.subr.mxu0 0.0
      %5453 = vmatpush2.msra.mxu0 0.0
      %5454 = vmatprep.subr.mxu0 0.0
      %5455 = vmatpush2.msra.mxu0 0.0
      %5456 = vmatprep.subr.mxu0 0.0
      %5457 = vmatpush2.msra.mxu0 0.0
      %5458 = vmatprep.subr.mxu0 0.0
      %5459 = vmatpush2.msra.mxu0 0.0
      %5460 = vmatprep.subr.mxu0 0.0
      %5461 = vmatpush2.msra.mxu0 0.0
      %5462 = vmatprep.subr.mxu0 0.0
      %5463 = vmatpush2.msra.mxu0 0.0
      %5464 = vmatprep.subr.mxu0 0.0
      %5465 = vmatpush2.msra.mxu0 0.0
      %5466 = vmatprep.subr.mxu0 0.0
      %5467 = vmatpush2.msra.mxu0 0.0
      %5468 = vmatprep.mubr.f32.mxu0 0.0
      %5469 = vmatmul.mubr.f32.gmra.mxu0 %v5402
      %v5470 = vpop.f32.mrf.mxu0
      %v5471 = vadd.f32 0.0, %v5470
      %v5472 = vpop.f32.mrf.mxu0
      %5473 = vdwg.mxu0
      %v5475 = vsel %vm3114, %v4946, 0
      %5477 = vmatprep.subr.mxu0 0.0
      %5478 = vmatpush1.msra.mxu0 0.0
      %5479 = vmatprep.subr.mxu0 0.0
      %5480 = vmatpush1.msra.mxu0 0.0
      %5481 = vmatprep.subr.mxu0 0.0
      %5482 = vmatpush1.msra.mxu0 0.0
      %5483 = vmatprep.subr.mxu0 0.0
      %5484 = vmatpush1.msra.mxu0 0.0
      %5485 = vmatprep.subr.mxu0 0.0
      %5486 = vmatpush1.msra.mxu0 0.0
      %5487 = vmatprep.subr.mxu0 0.0
      %5488 = vmatpush1.msra.mxu0 0.0
      %5489 = vmatprep.subr.mxu0 0.0
      %5490 = vmatpush1.msra.mxu0 0.0
      %5491 = vmatprep.subr.mxu0 0.0
      %5492 = vmatpush1.msra.mxu0 0.0
      %5493 = vmatprep.subr.mxu0 0.0
      %5494 = vmatpush1.msra.mxu0 0.0
      %5495 = vmatprep.subr.mxu0 0.0
      %5496 = vmatpush1.msra.mxu0 0.0
      %5497 = vmatprep.subr.mxu0 0.0
      %5498 = vmatpush1.msra.mxu0 0.0
      %5499 = vmatprep.subr.mxu0 0.0
      %5500 = vmatpush1.msra.mxu0 0.0
      %5501 = vmatprep.subr.mxu0 0.0
      %5502 = vmatpush1.msra.mxu0 0.0
      %5503 = vmatprep.subr.mxu0 0.0
      %5504 = vmatpush1.msra.mxu0 0.0
      %5505 = vmatprep.subr.mxu0 0.0
      %5506 = vmatpush1.msra.mxu0 %v4962
      %5507 = vmatprep.subr.mxu0 0.0
      %5508 = vmatpush1.msra.mxu0 %v4961
      %5509 = vmatprep.subr.mxu0 0.0
      %5510 = vmatpush2.msra.mxu0 0.0
      %5511 = vmatprep.subr.mxu0 0.0
      %5512 = vmatpush2.msra.mxu0 0.0
      %5513 = vmatprep.subr.mxu0 0.0
      %5514 = vmatpush2.msra.mxu0 0.0
      %5515 = vmatprep.subr.mxu0 0.0
      %5516 = vmatpush2.msra.mxu0 0.0
      %5517 = vmatprep.subr.mxu0 0.0
      %5518 = vmatpush2.msra.mxu0 0.0
      %5519 = vmatprep.subr.mxu0 0.0
      %5520 = vmatpush2.msra.mxu0 0.0
      %5521 = vmatprep.subr.mxu0 0.0
      %5522 = vmatpush2.msra.mxu0 0.0
      %5523 = vmatprep.subr.mxu0 0.0
      %5524 = vmatpush2.msra.mxu0 0.0
      %5525 = vmatprep.subr.mxu0 0.0
      %5526 = vmatpush2.msra.mxu0 0.0
      %5527 = vmatprep.subr.mxu0 0.0
      %5528 = vmatpush2.msra.mxu0 0.0
      %5529 = vmatprep.subr.mxu0 0.0
      %5530 = vmatpush2.msra.mxu0 0.0
      %5531 = vmatprep.subr.mxu0 0.0
      %5532 = vmatpush2.msra.mxu0 0.0
      %5533 = vmatprep.subr.mxu0 0.0
      %5534 = vmatpush2.msra.mxu0 0.0
      %5535 = vmatprep.subr.mxu0 0.0
      %5536 = vmatpush2.msra.mxu0 0.0
      %5537 = vmatprep.subr.mxu0 0.0
      %5538 = vmatpush2.msra.mxu0 0.0
      %5539 = vmatprep.subr.mxu0 0.0
      %5540 = vmatpush2.msra.mxu0 0.0
      %5541 = vmatprep.mubr.f32.mxu0 0.0
      %5542 = vmatmul.mubr.f32.gmra.mxu0 %v5475
      %v5543 = vpop.f32.mrf.mxu0
      %v5544 = vadd.f32 0.0, %v5543
      %v5545 = vpop.f32.mrf.mxu0
      %5546 = vdwg.mxu0
      %v5547 = vcombine.low %v5033, %v5179
      %v5549 = vunpack.c.l.s4 1983009808
      %v5550 = vunpack.c.0.s8 %v5549
      %v5551 = vlaneseq
      %v5552 = vshrl.u32 %v5551, 7
      %v5553 = vsub.s32 %v5550, %v5552
      %v5554 = vrot.slane %v5547, %v5553
      %v5555 = vcombine.low %v5106, %v5252
      %v5557 = vunpack.c.l.s4 1983009808
      %v5558 = vunpack.c.0.s8 %v5557
      %v5559 = vlaneseq
      %v5560 = vshrl.u32 %v5559, 7
      %v5561 = vsub.s32 %v5558, %v5560
      %v5562 = vrot.slane %v5555, %v5561
      %v5563 = vcombine.low %v5325, %v5471
      %v5565 = vunpack.c.l.s4 1983009808
      %v5566 = vunpack.c.0.s8 %v5565
      %v5567 = vlaneseq
      %v5568 = vshrl.u32 %v5567, 7
      %v5569 = vsub.s32 %v5566, %v5568
      %v5570 = vrot.slane %v5563, %v5569
      %v5571 = vcombine.low %v5398, %v5544
      %v5573 = vunpack.c.l.s4 1983009808
      %v5574 = vunpack.c.0.s8 %v5573
      %v5575 = vlaneseq
      %v5576 = vshrl.u32 %v5575, 7
      %v5577 = vsub.s32 %v5574, %v5576
      %v5578 = vrot.slane %v5571, %v5577
      %v5579 = vcombine.low %v5554, %v5562
      %v5580 = vcombine.high %v5554, %v5562
      %v5582 = vunpack.c.l.s4 1934713408
      %v5583 = vunpack.c.0.s8 %v5582
      %v5584 = vlaneseq
      %v5585 = vshrl.u32 %v5584, 7
      %v5586 = vsub.s32 %v5583, %v5585
      %v5587 = vrot.slane %v5579, %v5586
      %v5589 = vunpack.c.l.s4 1934713408
      %v5590 = vunpack.c.0.s8 %v5589
      %v5591 = vlaneseq
      %v5592 = vshrl.u32 %v5591, 7
      %v5593 = vsub.s32 %v5590, %v5592
      %v5594 = vrot.slane %v5580, %v5593
      %v5595 = vcombine.low %v5570, %v5578
      %v5596 = vcombine.high %v5570, %v5578
      %v5598 = vunpack.c.l.s4 1934713408
      %v5599 = vunpack.c.0.s8 %v5598
      %v5600 = vlaneseq
      %v5601 = vshrl.u32 %v5600, 7
      %v5602 = vsub.s32 %v5599, %v5601
      %v5603 = vrot.slane %v5595, %v5602
      %v5605 = vunpack.c.l.s4 1934713408
      %v5606 = vunpack.c.0.s8 %v5605
      %v5607 = vlaneseq
      %v5608 = vshrl.u32 %v5607, 7
      %v5609 = vsub.s32 %v5606, %v5608
      %v5610 = vrot.slane %v5596, %v5609
      %v5611 = vcombine.low %v5587, %v5603
      %v5612 = vcombine.high %v5587, %v5603
      %v5613 = vcombine.low %v5594, %v5610
      %v5614 = vcombine.high %v5594, %v5610
      %5615 = vst.msk [vmem:[%s537] sm:$0xff] %vm582, %v5611
      %5616 = vst.msk [vmem:[%s537 + $0x8] sm:$0xff] %vm582, %v5612
      %5617 = vst.msk [vmem:[%s537 + $0x10] sm:$0xff] %vm582, %v5613
      %5618 = vst.msk [vmem:[%s537 + $0x18] sm:$0xff] %vm582, %v5614
      %5623 = vrot.lane.b32.xlu0 %v1485, 32
      %v5624 = vpop.permute.xlu0 %5623
      %5625 = vrot.lane.b32.xlu0 %v1486, 32
      %v5626 = vpop.permute.xlu0 %5625
      %5627 = vrot.lane.b32.xlu0 %v1487, 32
      %v5628 = vpop.permute.xlu0 %5627
      %5629 = vrot.lane.b32.xlu0 %v1488, 32
      %v5630 = vpop.permute.xlu0 %5629
      %vm5635 = vcmask 523520
      %5636 = vst.msk [vmem:[%s537] sm:$0xff] %vm5635, %v5624
      %5637 = vst.msk [vmem:[%s537 + $0x8] sm:$0xff] %vm5635, %v5626
      %5638 = vst.msk [vmem:[%s537 + $0x10] sm:$0xff] %vm5635, %v5628
      %5639 = vst.msk [vmem:[%s537 + $0x18] sm:$0xff] %vm5635, %v5630
      %v5640 = vadd.s32 %v2784, 4294967232
      %v5641 = vlaneseq
      %v5642 = vshrl.u32 %v5641, 7
      %v5643 = vsub.s32 %v5640, %v5642
      %v5644 = vrot.slane %v4369, %v5643
      %v5645 = vadd.s32 %v2784, 4294967224
      %v5646 = vlaneseq
      %v5647 = vshrl.u32 %v5646, 7
      %v5648 = vsub.s32 %v5645, %v5647
      %v5649 = vrot.slane %v4372, %v5648
      %vm5650 = vcmask 654912
      %v5651 = vsel %vm5650, %v5649, %v5644
      %v5652 = vlaneseq
      %v5653 = vshrl.u32 %v5652, 7
      %v5654 = vsub.s32 %v5640, %v5653
      %v5655 = vrot.slane %v4375, %v5654
      %v5656 = vlaneseq
      %v5657 = vshrl.u32 %v5656, 7
      %v5658 = vsub.s32 %v5645, %v5657
      %v5659 = vrot.slane %v4378, %v5658
      %v5660 = vsel %vm5650, %v5659, %v5655
      %v5661 = vlaneseq
      %v5662 = vshrl.u32 %v5661, 7
      %v5663 = vsub.s32 %v5640, %v5662
      %v5664 = vrot.slane %v4381, %v5663
      %v5665 = vlaneseq
      %v5666 = vshrl.u32 %v5665, 7
      %v5667 = vsub.s32 %v5645, %v5666
      %v5668 = vrot.slane %v4384, %v5667
      %v5669 = vsel %vm5650, %v5668, %v5664
      %v5670 = vlaneseq
      %v5671 = vshrl.u32 %v5670, 7
      %v5672 = vsub.s32 %v5640, %v5671
      %v5673 = vrot.slane %v4387, %v5672
      %v5674 = vlaneseq
      %v5675 = vshrl.u32 %v5674, 7
      %v5676 = vsub.s32 %v5645, %v5675
      %v5677 = vrot.slane %v4390, %v5676
      %v5678 = vsel %vm5650, %v5677, %v5673
      %v5679 = vlaneseq
      %v5680 = vshrl.u32 %v5679, 7
      %v5681 = vsub.s32 %v5640, %v5680
      %v5682 = vrot.slane %v4393, %v5681
      %v5683 = vlaneseq
      %v5684 = vshrl.u32 %v5683, 7
      %v5685 = vsub.s32 %v5645, %v5684
      %v5686 = vrot.slane %v4396, %v5685
      %v5687 = vsel %vm5650, %v5686, %v5682
      %v5688 = vlaneseq
      %v5689 = vshrl.u32 %v5688, 7
      %v5690 = vsub.s32 %v5640, %v5689
      %v5691 = vrot.slane %v4399, %v5690
      %v5692 = vlaneseq
      %v5693 = vshrl.u32 %v5692, 7
      %v5694 = vsub.s32 %v5645, %v5693
      %v5695 = vrot.slane %v4402, %v5694
      %v5696 = vsel %vm5650, %v5695, %v5691
      %v5697 = vlaneseq
      %v5698 = vshrl.u32 %v5697, 7
      %v5699 = vsub.s32 %v5640, %v5698
      %v5700 = vrot.slane %v4405, %v5699
      %v5701 = vlaneseq
      %v5702 = vshrl.u32 %v5701, 7
      %v5703 = vsub.s32 %v5645, %v5702
      %v5704 = vrot.slane %v4408, %v5703
      %v5705 = vsel %vm5650, %v5704, %v5700
      %v5706 = vlaneseq
      %v5707 = vshrl.u32 %v5706, 7
      %v5708 = vsub.s32 %v5640, %v5707
      %v5709 = vrot.slane %v4411, %v5708
      %v5710 = vlaneseq
      %v5711 = vshrl.u32 %v5710, 7
      %v5712 = vsub.s32 %v5645, %v5711
      %v5713 = vrot.slane %v4414, %v5712
      %v5714 = vsel %vm5650, %v5713, %v5709
      %v5715 = vlaneseq
      %v5716 = vshrl.u32 %v5715, 7
      %v5717 = vsub.s32 %v5640, %v5716
      %v5718 = vrot.slane %v4417, %v5717
      %v5719 = vlaneseq
      %v5720 = vshrl.u32 %v5719, 7
      %v5721 = vsub.s32 %v5645, %v5720
      %v5722 = vrot.slane %v4420, %v5721
      %v5723 = vsel %vm5650, %v5722, %v5718
      %v5724 = vlaneseq
      %v5725 = vshrl.u32 %v5724, 7
      %v5726 = vsub.s32 %v5640, %v5725
      %v5727 = vrot.slane %v4423, %v5726
      %v5728 = vlaneseq
      %v5729 = vshrl.u32 %v5728, 7
      %v5730 = vsub.s32 %v5645, %v5729
      %v5731 = vrot.slane %v4426, %v5730
      %v5732 = vsel %vm5650, %v5731, %v5727
      %v5733 = vlaneseq
      %v5734 = vshrl.u32 %v5733, 7
      %v5735 = vsub.s32 %v5640, %v5734
      %v5736 = vrot.slane %v4429, %v5735
      %v5737 = vlaneseq
      %v5738 = vshrl.u32 %v5737, 7
      %v5739 = vsub.s32 %v5645, %v5738
      %v5740 = vrot.slane %v4432, %v5739
      %v5741 = vsel %vm5650, %v5740, %v5736
      %v5742 = vlaneseq
      %v5743 = vshrl.u32 %v5742, 7
      %v5744 = vsub.s32 %v5640, %v5743
      %v5745 = vrot.slane %v4435, %v5744
      %v5746 = vlaneseq
      %v5747 = vshrl.u32 %v5746, 7
      %v5748 = vsub.s32 %v5645, %v5747
      %v5749 = vrot.slane %v4438, %v5748
      %v5750 = vsel %vm5650, %v5749, %v5745
      %v5751 = vlaneseq
      %v5752 = vshrl.u32 %v5751, 7
      %v5753 = vsub.s32 %v5640, %v5752
      %v5754 = vrot.slane %v4441, %v5753
      %v5755 = vlaneseq
      %v5756 = vshrl.u32 %v5755, 7
      %v5757 = vsub.s32 %v5645, %v5756
      %v5758 = vrot.slane %v4444, %v5757
      %v5759 = vsel %vm5650, %v5758, %v5754
      %v5760 = vlaneseq
      %v5761 = vshrl.u32 %v5760, 7
      %v5762 = vsub.s32 %v5640, %v5761
      %v5763 = vrot.slane %v4447, %v5762
      %v5764 = vlaneseq
      %v5765 = vshrl.u32 %v5764, 7
      %v5766 = vsub.s32 %v5645, %v5765
      %v5767 = vrot.slane %v4450, %v5766
      %v5768 = vsel %vm5650, %v5767, %v5763
      %v5769 = vlaneseq
      %v5770 = vshrl.u32 %v5769, 7
      %v5771 = vsub.s32 %v5640, %v5770
      %v5772 = vrot.slane %v4453, %v5771
      %v5773 = vlaneseq
      %v5774 = vshrl.u32 %v5773, 7
      %v5775 = vsub.s32 %v5645, %v5774
      %v5776 = vrot.slane %v4456, %v5775
      %v5777 = vsel %vm5650, %v5776, %v5772
      %v5778 = vlaneseq
      %v5779 = vshrl.u32 %v5778, 7
      %v5780 = vsub.s32 %v5640, %v5779
      %v5781 = vrot.slane %v4459, %v5780
      %v5782 = vlaneseq
      %v5783 = vshrl.u32 %v5782, 7
      %v5784 = vsub.s32 %v5645, %v5783
      %v5785 = vrot.slane %v4462, %v5784
      %v5786 = vsel %vm5650, %v5785, %v5781
      %v5787 = vlaneseq
      %v5788 = vshrl.u32 %v5787, 7
      %v5789 = vsub.s32 %v5640, %v5788
      %v5790 = vrot.slane %v4465, %v5789
      %v5791 = vlaneseq
      %v5792 = vshrl.u32 %v5791, 7
      %v5793 = vsub.s32 %v5645, %v5792
      %v5794 = vrot.slane %v4468, %v5793
      %v5795 = vsel %vm5650, %v5794, %v5790
      %v5796 = vlaneseq
      %v5797 = vshrl.u32 %v5796, 7
      %v5798 = vsub.s32 %v5640, %v5797
      %v5799 = vrot.slane %v4471, %v5798
      %v5800 = vlaneseq
      %v5801 = vshrl.u32 %v5800, 7
      %v5802 = vsub.s32 %v5645, %v5801
      %v5803 = vrot.slane %v4474, %v5802
      %v5804 = vsel %vm5650, %v5803, %v5799
      %v5805 = vlaneseq
      %v5806 = vshrl.u32 %v5805, 7
      %v5807 = vsub.s32 %v5640, %v5806
      %v5808 = vrot.slane %v4477, %v5807
      %v5809 = vlaneseq
      %v5810 = vshrl.u32 %v5809, 7
      %v5811 = vsub.s32 %v5645, %v5810
      %v5812 = vrot.slane %v4480, %v5811
      %v5813 = vsel %vm5650, %v5812, %v5808
      %v5814 = vlaneseq
      %v5815 = vshrl.u32 %v5814, 7
      %v5816 = vsub.s32 %v5640, %v5815
      %v5817 = vrot.slane %v4483, %v5816
      %v5818 = vlaneseq
      %v5819 = vshrl.u32 %v5818, 7
      %v5820 = vsub.s32 %v5645, %v5819
      %v5821 = vrot.slane %v4486, %v5820
      %v5822 = vsel %vm5650, %v5821, %v5817
      %v5823 = vlaneseq
      %v5824 = vshrl.u32 %v5823, 7
      %v5825 = vsub.s32 %v5640, %v5824
      %v5826 = vrot.slane %v4489, %v5825
      %v5827 = vlaneseq
      %v5828 = vshrl.u32 %v5827, 7
      %v5829 = vsub.s32 %v5645, %v5828
      %v5830 = vrot.slane %v4492, %v5829
      %v5831 = vsel %vm5650, %v5830, %v5826
      %v5832 = vlaneseq
      %v5833 = vshrl.u32 %v5832, 7
      %v5834 = vsub.s32 %v5640, %v5833
      %v5835 = vrot.slane %v4495, %v5834
      %v5836 = vlaneseq
      %v5837 = vshrl.u32 %v5836, 7
      %v5838 = vsub.s32 %v5645, %v5837
      %v5839 = vrot.slane %v4498, %v5838
      %v5840 = vsel %vm5650, %v5839, %v5835
      %v5841 = vlaneseq
      %v5842 = vshrl.u32 %v5841, 7
      %v5843 = vsub.s32 %v5640, %v5842
      %v5844 = vrot.slane %v4501, %v5843
      %v5845 = vlaneseq
      %v5846 = vshrl.u32 %v5845, 7
      %v5847 = vsub.s32 %v5645, %v5846
      %v5848 = vrot.slane %v4504, %v5847
      %v5849 = vsel %vm5650, %v5848, %v5844
      %v5850 = vlaneseq
      %v5851 = vshrl.u32 %v5850, 7
      %v5852 = vsub.s32 %v5640, %v5851
      %v5853 = vrot.slane %v4507, %v5852
      %v5854 = vlaneseq
      %v5855 = vshrl.u32 %v5854, 7
      %v5856 = vsub.s32 %v5645, %v5855
      %v5857 = vrot.slane %v4510, %v5856
      %v5858 = vsel %vm5650, %v5857, %v5853
      %v5859 = vlaneseq
      %v5860 = vshrl.u32 %v5859, 7
      %v5861 = vsub.s32 %v5640, %v5860
      %v5862 = vrot.slane %v4513, %v5861
      %v5863 = vlaneseq
      %v5864 = vshrl.u32 %v5863, 7
      %v5865 = vsub.s32 %v5645, %v5864
      %v5866 = vrot.slane %v4516, %v5865
      %v5867 = vsel %vm5650, %v5866, %v5862
      %v5868 = vlaneseq
      %v5869 = vshrl.u32 %v5868, 7
      %v5870 = vsub.s32 %v5640, %v5869
      %v5871 = vrot.slane %v4519, %v5870
      %v5872 = vlaneseq
      %v5873 = vshrl.u32 %v5872, 7
      %v5874 = vsub.s32 %v5645, %v5873
      %v5875 = vrot.slane %v4522, %v5874
      %v5876 = vsel %vm5650, %v5875, %v5871
      %v5877 = vlaneseq
      %v5878 = vshrl.u32 %v5877, 7
      %v5879 = vsub.s32 %v5640, %v5878
      %v5880 = vrot.slane %v4525, %v5879
      %v5881 = vlaneseq
      %v5882 = vshrl.u32 %v5881, 7
      %v5883 = vsub.s32 %v5645, %v5882
      %v5884 = vrot.slane %v4528, %v5883
      %v5885 = vsel %vm5650, %v5884, %v5880
      %v5886 = vlaneseq
      %v5887 = vshrl.u32 %v5886, 7
      %v5888 = vsub.s32 %v5640, %v5887
      %v5889 = vrot.slane %v4531, %v5888
      %v5890 = vlaneseq
      %v5891 = vshrl.u32 %v5890, 7
      %v5892 = vsub.s32 %v5645, %v5891
      %v5893 = vrot.slane %v4534, %v5892
      %v5894 = vsel %vm5650, %v5893, %v5889
      %v5895 = vlaneseq
      %v5896 = vshrl.u32 %v5895, 7
      %v5897 = vsub.s32 %v5640, %v5896
      %v5898 = vrot.slane %v4537, %v5897
      %v5899 = vlaneseq
      %v5900 = vshrl.u32 %v5899, 7
      %v5901 = vsub.s32 %v5645, %v5900
      %v5902 = vrot.slane %v4540, %v5901
      %v5903 = vsel %vm5650, %v5902, %v5898
      %v5904 = vlaneseq
      %v5905 = vshrl.u32 %v5904, 7
      %v5906 = vsub.s32 %v5640, %v5905
      %v5907 = vrot.slane %v4543, %v5906
      %v5908 = vlaneseq
      %v5909 = vshrl.u32 %v5908, 7
      %v5910 = vsub.s32 %v5645, %v5909
      %v5911 = vrot.slane %v4546, %v5910
      %v5912 = vsel %vm5650, %v5911, %v5907
      %v5913 = vlaneseq
      %v5914 = vshrl.u32 %v5913, 7
      %v5915 = vsub.s32 %v5640, %v5914
      %v5916 = vrot.slane %v4549, %v5915
      %v5917 = vlaneseq
      %v5918 = vshrl.u32 %v5917, 7
      %v5919 = vsub.s32 %v5645, %v5918
      %v5920 = vrot.slane %v4552, %v5919
      %v5921 = vsel %vm5650, %v5920, %v5916
      %v5922 = vlaneseq
      %v5923 = vshrl.u32 %v5922, 7
      %v5924 = vsub.s32 %v5640, %v5923
      %v5925 = vrot.slane %v4555, %v5924
      %v5926 = vlaneseq
      %v5927 = vshrl.u32 %v5926, 7
      %v5928 = vsub.s32 %v5645, %v5927
      %v5929 = vrot.slane %v4558, %v5928
      %v5930 = vsel %vm5650, %v5929, %v5925
      %v5931 = vsel %vm3075, %v5660, %v5651
      %v5932 = vsel %vm3077, %v5669, %v5931
      %v5933 = vsel %vm3079, %v5678, %v5932
      %v5934 = vsel %vm3081, %v5687, %v5933
      %v5935 = vsel %vm3083, %v5696, %v5934
      %v5936 = vsel %vm3085, %v5705, %v5935
      %v5937 = vsel %vm3087, %v5714, %v5936
      %v5938 = vsel %vm3075, %v5732, %v5723
      %v5939 = vsel %vm3077, %v5741, %v5938
      %v5940 = vsel %vm3079, %v5750, %v5939
      %v5941 = vsel %vm3081, %v5759, %v5940
      %v5942 = vsel %vm3083, %v5768, %v5941
      %v5943 = vsel %vm3085, %v5777, %v5942
      %v5944 = vsel %vm3087, %v5786, %v5943
      %v5945 = vsel %vm3075, %v5804, %v5795
      %v5946 = vsel %vm3077, %v5813, %v5945
      %v5947 = vsel %vm3079, %v5822, %v5946
      %v5948 = vsel %vm3081, %v5831, %v5947
      %v5949 = vsel %vm3083, %v5840, %v5948
      %v5950 = vsel %vm3085, %v5849, %v5949
      %v5951 = vsel %vm3087, %v5858, %v5950
      %v5952 = vsel %vm3075, %v5876, %v5867
      %v5953 = vsel %vm3077, %v5885, %v5952
      %v5954 = vsel %vm3079, %v5894, %v5953
      %v5955 = vsel %vm3081, %v5903, %v5954
      %v5956 = vsel %vm3083, %v5912, %v5955
      %v5957 = vsel %vm3085, %v5921, %v5956
      %v5958 = vsel %vm3087, %v5930, %v5957
      %vm5963 = vcmask 654848
      %5964 = vst.msk [vmem:[%s537] sm:$0xff] %vm5963, %v5937
      %5965 = vst.msk [vmem:[%s537 + $0x8] sm:$0xff] %vm5963, %v5944
      %5966 = vst.msk [vmem:[%s537 + $0x10] sm:$0xff] %vm5963, %v5951
      %5967 = vst.msk [vmem:[%s537 + $0x18] sm:$0xff] %vm5963, %v5958
      %vm5968 = vcmask 1048192
      %5969 = vst.msk [vmem:[%s537] sm:$0xff] %vm5968, 0.0
      %5970 = vst.msk [vmem:[%s537 + $0x8] sm:$0xff] %vm5968, 0.0
      %5971 = vst.msk [vmem:[%s537 + $0x10] sm:$0xff] %vm5968, 0.0
      %5972 = vst.msk [vmem:[%s537 + $0x18] sm:$0xff] %vm5968, 0.0
      %p5973 = scmp.eq.s32.totalorder %s29, 1
      // Predicated region
      $region69: #{attention_rnn_forward.1} parent=63 // pred_check
        %p5974 = pneg %p5973
      $region70: #{attention_rnn_forward.1} parent=63 // pred_check_branch
        %5976 = sbr.rel (%p5974) target = $region72
      $region71: #{attention_rnn_forward.1} parent=63 // pred_region
        %5977 = vst [vmem:[%s542] sm:$0xff] %v1481
      $region72: #{attention_rnn_forward.1} parent=63 // pred_fallthru
        _
      %s5978 = smul.u32 4, %s29
      %p5979 = scmp.lt.s32.totalorder %s5978, 7
      %s5980 = scalar_select %p5979, %s5978, 7
      %p5981 = scmp.lt.s32.totalorder %s28, 0
      %s5982 = scalar_select %p5981, %s28, 0
      %s5983 = sadd.s32 %s5982, %s5980
      %s5984 = smul.addr %s5983, 8
      %s5985 = scalar_lea.vmem %s11, %s5984
      %p5986 = scmp.lt.s32.totalorder %s28, 0
      %s5987 = scalar_select %p5986, %s28, 0
      %s5988 = smul.addr %s5987, 8
      %s5989 = scalar_lea.vmem %s12, %s5988
      // Predicated region
      $region73: #{attention_rnn_forward.1} parent=63 // pred_check
        %p5990 = pneg %p314
      $region74: #{attention_rnn_forward.1} parent=63 // pred_check_branch
        %5992 = sbr.rel (%p5990) target = $region76
      $region75: #{attention_rnn_forward.1} parent=63 // pred_region
        %s5993 = smul.u32 4, %s29
      $region76: #{attention_rnn_forward.1} parent=63 // pred_fallthru
        _
      // Predicated region
      $region77: #{attention_rnn_forward.1} parent=63 // pred_check
        %p5994 = pneg %p340
      $region78: #{attention_rnn_forward.1} parent=63 // pred_check_branch
        %5996 = sbr.rel (%p5994) target = $region80
      $region79: #{attention_rnn_forward.1} parent=63 // pred_region
        _
      $region80: #{attention_rnn_forward.1} parent=63 // pred_fallthru
        _
      // Predicated region
      $region81: #{attention_rnn_forward.1} parent=63 // pred_check
        %p5997 = pneg %p340
      $region82: #{attention_rnn_forward.1} parent=63 // pred_check_branch
        %5999 = sbr.rel (%p5997) target = $region84
      $region83: #{attention_rnn_forward.1} parent=63 // pred_region
        %p6000 = scmp.lt.s32.totalorder %s28, 0
        %s6001 = scalar_select %p6000, %s28, 0
        %s6002 = smul.addr %s6001, 8
        %s6003 = scalar_lea.vmem %s12, %s6002
      $region84: #{attention_rnn_forward.1} parent=63 // pred_fallthru
        _
    $region64: #{attention_rnn_forward.1} parent=5 // pred_fallthru
      _
    %p6004 = scmp.le.s32.totalorder 2, %s19
    // Predicated region
    $region85: #{attention_rnn_forward.1} parent=5 // pred_check
      %p6005 = pneg %p6004
    $region86: #{attention_rnn_forward.1} parent=5 // pred_check_branch
      %6007 = sbr.rel (%p6005) target = $region88
    $region87: #{attention_rnn_forward.1} parent=5 // pred_region
      %s6008 = ssub.s32 %s19, 2
      // Predicated region
      $region89: #{attention_rnn_forward.1} parent=87 // pred_check
        %p6009 = pneg %p320
      $region90: #{attention_rnn_forward.1} parent=87 // pred_check_branch
        %6011 = sbr.rel (%p6009) target = $region92
      $region91: #{attention_rnn_forward.1} parent=87 // pred_region
        %s6012 = smul.u32 4, %s31
        %p6013 = scmp.lt.s32.totalorder %s6012, 7
        %s6014 = scalar_select %p6013, %s6012, 7
        %p6015 = scmp.lt.s32.totalorder %s30, 0
        %s6016 = scalar_select %p6015, %s30, 0
        %s6017 = sadd.s32 %s6016, %s6014
        %s6018 = smul.addr %s6017, 8
        %s6019 = scalar_lea.vmem %s11, %s6018
      $region92: #{attention_rnn_forward.1} parent=87 // pred_fallthru
        _
    $region88: #{attention_rnn_forward.1} parent=5 // pred_fallthru
      _
  $region6: #{attention_rnn_forward.1} parent=0 // loop_footer
    %s23 = sadd.s32 1, %s19
  $region7: #{attention_rnn_forward.1} parent=0 // loop_footer_branch
    %18 = sbr.rel target = $region3
  $region8: #{attention_rnn_forward.1} parent=0 // loop_exit
    _

</llo_original>
